<compile_context>
chip_gen: v6e
topology: v6e:2x2x1
jax: 0.10.0
libtpu: 0.0.40
codegen_flags: <defaults>
</compile_context>

<pallas_src>
import numpy as np
import jax
import jax.numpy as jnp
from jax.experimental import pallas as pl
from jax.experimental.pallas import tpu as pltpu

SEG_NUM, JOINT_NUM, MODULE_NUM = 10, 8, 5   # is_map=False branch
HIDDEN1 = 256
D_ENC = HIDDEN1 // 2                        # 128
C_OUT = 4 * D_ENC                           # 512


# ------------------------------- fused forward kernel -------------------------------

def _ass_jrg_kernel(x_ref, ww_ref, bw_ref, wd_ref, bd_ref, p_ref, wa_ref, ba_ref,
                    cell_ref, fused2_ref, d_ref):
    S, F = x_ref.shape
    D = ww_ref.shape[1]

    x = x_ref[...]                                                    # (S, F) f32

    # feat_diff = |x[i+1] - x[i]| for i < S-1, last row duplicated -> diff = 0.
    # Assembled in VMEM scratch (avoids materializing feat_shift in HBM).
    d_ref[pl.ds(0, S - 1), :] = jnp.abs(x[1:, :] - x[:-1, :])
    d_ref[pl.ds(S - 1, 1), :] = jnp.zeros((1, F), jnp.float32)
    d = d_ref[...]                                                    # (S, F)

    # Encoders: Linear -> Dropout(eval: identity) -> ReLU.
    # Weights are already bf16 (cast once in the wrapper); f32 MXU accumulation.
    ew = jnp.maximum(jnp.dot(x.astype(jnp.bfloat16), ww_ref[...],
                             preferred_element_type=jnp.float32) + bw_ref[...], 0.0)
    ed = jnp.maximum(jnp.dot(d.astype(jnp.bfloat16), wd_ref[...],
                             preferred_element_type=jnp.float32) + bd_ref[...], 0.0)

    # Graph propagation over the joint axis, lifted to one lane-dense matmul with
    #   P = I_T (x) g^T (x) I_M.  Both streams share the single MXU weight push:
    #   primes[:, :D] = whole', primes[:, D:2D] = diff'.
    enc_cat = jnp.concatenate([ew.astype(jnp.bfloat16), ed.astype(jnp.bfloat16)],
                              axis=-1)                                # (S, 2D) bf16
    primes = jnp.dot(p_ref[...], enc_cat,
                     preferred_element_type=jnp.float32)              # (S, 2D) f32

    # CELL0 = concat([whole', diff', whole, diff], -1): all chunks are 128-lane aligned
    # so every store is unmasked / lane-dense.
    cell_ref[:, 0:2 * D] = primes
    cell_ref[:, 2 * D:3 * D] = ew
    cell_ref[:, 3 * D:4 * D] = ed

    # fused = mean over (T, J, M) == mean over the S rows, then assessment1:
    # ReLU -> Linear -> Dropout(eval: identity).
    inv_s = 1.0 / float(S)
    fused = jnp.concatenate(
        [jnp.sum(primes, axis=0, keepdims=True),
         jnp.sum(ew, axis=0, keepdims=True),
         jnp.sum(ed, axis=0, keepdims=True)], axis=-1) * inv_s        # (1, 4D)
    fr = jnp.maximum(fused, 0.0).astype(jnp.bfloat16)
    fused2_ref[...] = jnp.dot(fr, wa_ref[...],
                              preferred_element_type=jnp.float32) + ba_ref[...]


# ----------------------------------- forward pass -----------------------------------

def ass_jrg_forward(feat_whole, params):
    B, S, F = feat_whole.shape
    T, J, M = SEG_NUM, JOINT_NUM, MODULE_NUM
    assert S == T * J * M
    D = params["enc_whole_w"].shape[1]
    C = 4 * D

    # graphs = |general_temporal_mats * joint_graphs|, hop 0 only (hop_num == 1)
    g = jnp.abs(params["general_temporal_mats"][0] *
                params["joint_graphs"][0].astype(jnp.float32))        # (J, J)
    # Right-multiplication by g over the joint axis, lifted to the flattened S axis:
    #   P[(t,k,m), (t,j,m)] = g[j, k]   ->   P = I_T (x) g^T (x) I_M   (tiny, built in XLA)
    prop = jnp.kron(jnp.eye(T, dtype=jnp.float32),
                    jnp.kron(g.T, jnp.eye(M, dtype=jnp.float32)))      # (S, S)

    # Cast all matmul weights to bf16 ONCE here (MXU operands); biases stay f32.
    prop_bf = prop.astype(jnp.bfloat16)
    ww_bf = params["enc_whole_w"].astype(jnp.bfloat16)
    wd_bf = params["enc_diff_w"].astype(jnp.bfloat16)
    wa_bf = params["assess1_w"].astype(jnp.bfloat16)

    resident = lambda b: (0, 0)
    cell_flat, fused2 = pl.pallas_call(
        _ass_jrg_kernel,
        out_shape=(jax.ShapeDtypeStruct((B, S, C), jnp.float32),      # CELL0 (flat S)
                   jax.ShapeDtypeStruct((B, 1, C), jnp.float32)),     # fused2
        grid=(B,),
        in_specs=[
            pl.BlockSpec((None, S, F), lambda b: (b, 0, 0)),          # feat_whole (per sample)
            pl.BlockSpec((F, D), resident),                           # enc_whole  W (bf16)
            pl.BlockSpec((1, D), resident),                           # enc_whole  b
            pl.BlockSpec((F, D), resident),                           # enc_diff   W (bf16)
            pl.BlockSpec((1, D), resident),                           # enc_diff   b
            pl.BlockSpec((S, S), resident),                           # graph propagation P (bf16)
            pl.BlockSpec((C, C), resident),                           # assessment1 W (bf16)
            pl.BlockSpec((1, C), resident),                           # assessment1 b
        ],
        out_specs=(
            pl.BlockSpec((None, S, C), lambda b: (b, 0, 0)),
            pl.BlockSpec((None, 1, C), lambda b: (b, 0, 0)),
        ),
        scratch_shapes=[pltpu.VMEM((S, F), jnp.float32)],             # shifted-diff staging
        compiler_params=pltpu.CompilerParams(
            dimension_semantics=("parallel",),
            vmem_limit_bytes=32 * 1024 * 1024),
    )(feat_whole,
      ww_bf, params["enc_whole_b"].reshape(1, D),
      wd_bf, params["enc_diff_b"].reshape(1, D),
      prop_bf,
      wa_bf, params["assess1_b"].reshape(1, C))

    cell0 = cell_flat.reshape(B, T, J, M, C)                          # metadata-only reshape
    fused2 = fused2.reshape(B, C)
    # (fused_feat2, CELL0, None, None, importance=None)   [afc=False, save_graph=False]
    return fused2, cell0, None, None, None


# ----------------------------- deterministic parameter init -----------------------------

def init_params(key, whole_size):
    ks = jax.random.split(key, 6)
    d = D_ENC
    ii = jnp.arange(JOINT_NUM)
    band = (jnp.abs(ii[:, None] - ii[None, :]) <= 1).astype(jnp.int32)   # 8-joint chain graph
    return {
        "enc_whole_w": jax.random.normal(ks[0], (whole_size, d), jnp.float32) / np.sqrt(whole_size),
        "enc_whole_b": jax.random.normal(ks[1], (d,), jnp.float32) * 0.02,
        "enc_diff_w": jax.random.normal(ks[2], (whole_size, d), jnp.float32) / np.sqrt(whole_size),
        "enc_diff_b": jax.random.normal(ks[3], (d,), jnp.float32) * 0.02,
        "general_temporal_mats": jax.random.normal(ks[4], (1, JOINT_NUM, JOINT_NUM), jnp.float32),
        "joint_graphs": band[None],                                       # (hop_num=1, J, J)
        "assess1_w": jax.random.normal(ks[5], (4 * d, 4 * d), jnp.float32) / np.sqrt(4 * d),
        "assess1_b": jnp.zeros((4 * d,), jnp.float32),
    }


# -------------------------------- pure-JAX reference --------------------------------

def reference_forward(feat_whole, params):
    B, S, F = feat_whole.shape
    T, J, M = SEG_NUM, JOINT_NUM, MODULE_NUM
    D = params["enc_whole_w"].shape[1]
    g = jnp.abs(params["general_temporal_mats"][0] *
                params["joint_graphs"][0].astype(jnp.float32))
    fd = jnp.abs(jnp.concatenate([feat_whole[:, 1:, :], feat_whole[:, -1:, :]], axis=1)
                 - feat_whole)
    ew = jax.nn.relu(feat_whole @ params["enc_whole_w"] + params["enc_whole_b"]
                     ).reshape(B, T, J, M, D)
    ed = jax.nn.relu(fd @ params["enc_diff_w"] + params["enc_diff_b"]
                     ).reshape(B, T, J, M, D)
    ewp = jnp.einsum("btjmd,jk->btkmd", ew, g)
    edp = jnp.einsum("btjmd,jk->btkmd", ed, g)
    cell = jnp.concatenate([ewp, edp, ew, ed], axis=-1)
    fused = cell.mean(axis=(1, 2, 3))
    out = jax.nn.relu(fused) @ params["assess1_w"] + params["assess1_b"]
    return out, cell


# --------------------------------------- main ---------------------------------------

if __name__ == "__main__":
    B = 2
    whole_size = 256                      # kept small; module default is 1024
    S = SEG_NUM * JOINT_NUM * MODULE_NUM  # 400

    key = jax.random.PRNGKey(0)
    kx, kp = jax.random.split(key)
    feat_whole = jax.random.normal(kx, (B, S, whole_size), jnp.float32)
    params = init_params(kp, whole_size)

    fwd = jax.jit(ass_jrg_forward)
    fused2, cell0, _, _, importance = fwd(feat_whole, params)
    jax.block_until_ready((fused2, cell0))

    assert fused2.shape == (B, 4 * D_ENC)
    assert cell0.shape == (B, SEG_NUM, JOINT_NUM, MODULE_NUM, 4 * D_ENC)
    assert importance is None

    ref_out, ref_cell = reference_forward(feat_whole, params)
    # Kernel feeds the MXU bf16 operands (per v6e/v7x perf guidance) with f32 accumulation;
    # tolerances cover bf16 input rounding vs. the f32 XLA reference.
    np.testing.assert_allclose(np.asarray(cell0), np.asarray(ref_cell), rtol=2e-2, atol=3e-2)
    np.testing.assert_allclose(np.asarray(fused2), np.asarray(ref_out), rtol=2e-2, atol=2e-2)

    print("KERNEL_OK")
</pallas_src>

<mosaic_0001>
module attributes {stable_mosaic.version = 11 : i64} {
  func.func @_ass_jrg_kernel(%arg0: i32, %arg1: memref<1x400x256xf32, #tpu.memory_space<vmem>>, %arg2: memref<256x128xbf16, #tpu.memory_space<vmem>>, %arg3: memref<1x128xf32, #tpu.memory_space<vmem>>, %arg4: memref<256x128xbf16, #tpu.memory_space<vmem>>, %arg5: memref<1x128xf32, #tpu.memory_space<vmem>>, %arg6: memref<400x400xbf16, #tpu.memory_space<vmem>>, %arg7: memref<512x512xbf16, #tpu.memory_space<vmem>>, %arg8: memref<1x512xf32, #tpu.memory_space<vmem>>, %arg9: memref<1x400x512xf32, #tpu.memory_space<vmem>>, %arg10: memref<1x1x512xf32, #tpu.memory_space<vmem>>, %arg11: memref<400x256xf32, #tpu.memory_space<vmem>>) attributes {dimension_semantics = [#tpu.dimension_semantics<parallel>], iteration_bounds = array<i64: 2>, scalar_prefetch = 0 : i64, scratch_operands = 1 : i64, tpu.core_type = #tpu.core_type<tc>, window_params = [{transform_indices = @transform_0, window_bounds = array<i64: 1, 400, 256>}, {pipeline_mode = #tpu.pipeline_mode<synchronous>, transform_indices = @transform_1, window_bounds = array<i64: 256, 128>}, {pipeline_mode = #tpu.pipeline_mode<synchronous>, transform_indices = @transform_2, window_bounds = array<i64: 1, 128>}, {pipeline_mode = #tpu.pipeline_mode<synchronous>, transform_indices = @transform_3, window_bounds = array<i64: 256, 128>}, {pipeline_mode = #tpu.pipeline_mode<synchronous>, transform_indices = @transform_4, window_bounds = array<i64: 1, 128>}, {pipeline_mode = #tpu.pipeline_mode<synchronous>, transform_indices = @transform_5, window_bounds = array<i64: 400, 400>}, {pipeline_mode = #tpu.pipeline_mode<synchronous>, transform_indices = @transform_6, window_bounds = array<i64: 512, 512>}, {pipeline_mode = #tpu.pipeline_mode<synchronous>, transform_indices = @transform_7, window_bounds = array<i64: 1, 512>}, {transform_indices = @transform_8, window_bounds = array<i64: 1, 400, 512>}, {transform_indices = @transform_9, window_bounds = array<i64: 1, 1, 512>}]} {
    %c0 = arith.constant 0 : index
    %c0_0 = arith.constant 0 : index
    %c0_1 = arith.constant 0 : index
    %0 = vector.load %arg1[%c0, %c0_0, %c0_1] : memref<1x400x256xf32, #tpu.memory_space<vmem>>, vector<1x400x256xf32>
    %1 = vector.shape_cast %0 : vector<1x400x256xf32> to vector<400x256xf32>
    %2 = vector.extract_strided_slice %1 {offsets = [1, 0], sizes = [399, 256], strides = [1, 1]} : vector<400x256xf32> to vector<399x256xf32>
    %3 = vector.extract_strided_slice %1 {offsets = [0, 0], sizes = [399, 256], strides = [1, 1]} : vector<400x256xf32> to vector<399x256xf32>
    %4 = arith.subf %2, %3 : vector<399x256xf32>
    %5 = math.absf %4 : vector<399x256xf32>
    %c0_2 = arith.constant 0 : index
    %c0_3 = arith.constant 0 : index
    %6 = vector.load %arg11[%c0_2, %c0_3] : memref<400x256xf32, #tpu.memory_space<vmem>>, vector<399x256xf32>
    tpu.vector_store %arg11[%c0_2, %c0_3], %5 {strides = array<i32>} : memref<400x256xf32, #tpu.memory_space<vmem>>, vector<399x256xf32>,
    %cst = arith.constant 0.000000e+00 : f32
    %7 = vector.broadcast %cst : f32 to vector<1x256xf32>
    %c399 = arith.constant 399 : index
    %c0_4 = arith.constant 0 : index
    %8 = vector.load %arg11[%c399, %c0_4] : memref<400x256xf32, #tpu.memory_space<vmem>>, vector<1x256xf32>
    tpu.vector_store %arg11[%c399, %c0_4], %7 {strides = array<i32>} : memref<400x256xf32, #tpu.memory_space<vmem>>, vector<1x256xf32>,
    %c0_5 = arith.constant 0 : index
    %c0_6 = arith.constant 0 : index
    %9 = vector.load %arg11[%c0_5, %c0_6] : memref<400x256xf32, #tpu.memory_space<vmem>>, vector<400x256xf32>
    %10 = arith.truncf %1 : vector<400x256xf32> to vector<400x256xbf16>
    %c0_7 = arith.constant 0 : index
    %c0_8 = arith.constant 0 : index
    %11 = vector.load %arg2[%c0_7, %c0_8] : memref<256x128xbf16, #tpu.memory_space<vmem>>, vector<256x128xbf16>
    %cst_9 = arith.constant dense<0.000000e+00> : vector<400x128xf32>
    %12 = tpu.matmul %10, %11, %cst_9 {dimension_numbers = #tpu.dot_dimension_numbers<[1], [0], [0], [1], [0, 0, 1, 1], [], []>} : vector<400x256xbf16>, vector<256x128xbf16>, vector<400x128xf32> -> vector<400x128xf32>
    %c0_10 = arith.constant 0 : index
    %c0_11 = arith.constant 0 : index
    %13 = vector.load %arg3[%c0_10, %c0_11] : memref<1x128xf32, #tpu.memory_space<vmem>>, vector<1x128xf32>
    %14 = vector.broadcast %13 : vector<1x128xf32> to vector<400x128xf32>
    %15 = arith.addf %12, %14 : vector<400x128xf32>
    %cst_12 = arith.constant 0.000000e+00 : f32
    %16 = vector.broadcast %cst_12 : f32 to vector<400x128xf32>
    %17 = arith.maximumf %15, %16 : vector<400x128xf32>
    %18 = arith.truncf %9 : vector<400x256xf32> to vector<400x256xbf16>
    %c0_13 = arith.constant 0 : index
    %c0_14 = arith.constant 0 : index
    %19 = vector.load %arg4[%c0_13, %c0_14] : memref<256x128xbf16, #tpu.memory_space<vmem>>, vector<256x128xbf16>
    %cst_15 = arith.constant dense<0.000000e+00> : vector<400x128xf32>
    %20 = tpu.matmul %18, %19, %cst_15 {dimension_numbers = #tpu.dot_dimension_numbers<[1], [0], [0], [1], [0, 0, 1, 1], [], []>} : vector<400x256xbf16>, vector<256x128xbf16>, vector<400x128xf32> -> vector<400x128xf32>
    %c0_16 = arith.constant 0 : index
    %c0_17 = arith.constant 0 : index
    %21 = vector.load %arg5[%c0_16, %c0_17] : memref<1x128xf32, #tpu.memory_space<vmem>>, vector<1x128xf32>
    %22 = vector.broadcast %21 : vector<1x128xf32> to vector<400x128xf32>
    %23 = arith.addf %20, %22 : vector<400x128xf32>
    %cst_18 = arith.constant 0.000000e+00 : f32
    %24 = vector.broadcast %cst_18 : f32 to vector<400x128xf32>
    %25 = arith.maximumf %23, %24 : vector<400x128xf32>
    %26 = arith.truncf %17 : vector<400x128xf32> to vector<400x128xbf16>
    %27 = arith.truncf %25 : vector<400x128xf32> to vector<400x128xbf16>
    %28 = tpu.concatenate %26, %27 in 1 : vector<400x128xbf16>, vector<400x128xbf16> -> vector<400x256xbf16>
    %c0_19 = arith.constant 0 : index
    %c0_20 = arith.constant 0 : index
    %29 = vector.load %arg6[%c0_19, %c0_20] : memref<400x400xbf16, #tpu.memory_space<vmem>>, vector<400x400xbf16>
    %cst_21 = arith.constant dense<0.000000e+00> : vector<400x256xf32>
    %30 = tpu.matmul %29, %28, %cst_21 {dimension_numbers = #tpu.dot_dimension_numbers<[1], [0], [0], [1], [0, 0, 1, 1], [], []>} : vector<400x400xbf16>, vector<400x256xbf16>, vector<400x256xf32> -> vector<400x256xf32>
    %c0_22 = arith.constant 0 : index
    %c0_23 = arith.constant 0 : index
    %c0_24 = arith.constant 0 : index
    %31 = vector.load %arg9[%c0_22, %c0_23, %c0_24] : memref<1x400x512xf32, #tpu.memory_space<vmem>>, vector<1x400x256xf32>
    %32 = vector.shape_cast %31 : vector<1x400x256xf32> to vector<400x256xf32>
    %33 = vector.shape_cast %30 : vector<400x256xf32> to vector<1x400x256xf32>
    tpu.vector_store %arg9[%c0_22, %c0_23, %c0_24], %33 {strides = array<i32>} : memref<1x400x512xf32, #tpu.memory_space<vmem>>, vector<1x400x256xf32>,
    %c0_25 = arith.constant 0 : index
    %c0_26 = arith.constant 0 : index
    %c256 = arith.constant 256 : index
    %34 = vector.load %arg9[%c0_25, %c0_26, %c256] : memref<1x400x512xf32, #tpu.memory_space<vmem>>, vector<1x400x128xf32>
    %35 = vector.shape_cast %34 : vector<1x400x128xf32> to vector<400x128xf32>
    %36 = vector.shape_cast %17 : vector<400x128xf32> to vector<1x400x128xf32>
    tpu.vector_store %arg9[%c0_25, %c0_26, %c256], %36 {strides = array<i32>} : memref<1x400x512xf32, #tpu.memory_space<vmem>>, vector<1x400x128xf32>,
    %c0_27 = arith.constant 0 : index
    %c0_28 = arith.constant 0 : index
    %c384 = arith.constant 384 : index
    %37 = vector.load %arg9[%c0_27, %c0_28, %c384] : memref<1x400x512xf32, #tpu.memory_space<vmem>>, vector<1x400x128xf32>
    %38 = vector.shape_cast %37 : vector<1x400x128xf32> to vector<400x128xf32>
    %39 = vector.shape_cast %25 : vector<400x128xf32> to vector<1x400x128xf32>
    tpu.vector_store %arg9[%c0_27, %c0_28, %c384], %39 {strides = array<i32>} : memref<1x400x512xf32, #tpu.memory_space<vmem>>, vector<1x400x128xf32>,
    %cst_29 = arith.constant dense<0.000000e+00> : vector<256xf32>
    %40 = vector.multi_reduction <add>, %30, %cst_29 [0] : vector<400x256xf32> to vector<256xf32>
    %41 = vector.shape_cast %40 : vector<256xf32> to vector<1x256xf32>
    %cst_30 = arith.constant dense<0.000000e+00> : vector<128xf32>
    %42 = vector.multi_reduction <add>, %17, %cst_30 [0] : vector<400x128xf32> to vector<128xf32>
    %43 = vector.shape_cast %42 : vector<128xf32> to vector<1x128xf32>
    %cst_31 = arith.constant dense<0.000000e+00> : vector<128xf32>
    %44 = vector.multi_reduction <add>, %25, %cst_31 [0] : vector<400x128xf32> to vector<128xf32>
    %45 = vector.shape_cast %44 : vector<128xf32> to vector<1x128xf32>
    %46 = tpu.concatenate %41, %43, %45 in 1 : vector<1x256xf32>, vector<1x128xf32>, vector<1x128xf32> -> vector<1x512xf32>
    %cst_32 = arith.constant 2.500000e-03 : f32
    %47 = vector.broadcast %cst_32 : f32 to vector<1x512xf32>
    %48 = arith.mulf %46, %47 : vector<1x512xf32>
    %cst_33 = arith.constant 0.000000e+00 : f32
    %49 = vector.broadcast %cst_33 : f32 to vector<1x512xf32>
    %50 = arith.maximumf %48, %49 : vector<1x512xf32>
    %51 = arith.truncf %50 : vector<1x512xf32> to vector<1x512xbf16>
    %c0_34 = arith.constant 0 : index
    %c0_35 = arith.constant 0 : index
    %52 = vector.load %arg7[%c0_34, %c0_35] : memref<512x512xbf16, #tpu.memory_space<vmem>>, vector<512x512xbf16>
    %cst_36 = arith.constant dense<0.000000e+00> : vector<1x512xf32>
    %53 = tpu.matmul %51, %52, %cst_36 {dimension_numbers = #tpu.dot_dimension_numbers<[1], [0], [0], [1], [0, 0, 1, 1], [], []>} : vector<1x512xbf16>, vector<512x512xbf16>, vector<1x512xf32> -> vector<1x512xf32>
    %c0_37 = arith.constant 0 : index
    %c0_38 = arith.constant 0 : index
    %54 = vector.load %arg8[%c0_37, %c0_38] : memref<1x512xf32, #tpu.memory_space<vmem>>, vector<1x512xf32>
    %55 = arith.addf %53, %54 : vector<1x512xf32>
    %c0_39 = arith.constant 0 : index
    %c0_40 = arith.constant 0 : index
    %c0_41 = arith.constant 0 : index
    %56 = vector.load %arg10[%c0_39, %c0_40, %c0_41] : memref<1x1x512xf32, #tpu.memory_space<vmem>>, vector<1x1x512xf32>
    %57 = vector.shape_cast %56 : vector<1x1x512xf32> to vector<1x512xf32>
    %58 = vector.shape_cast %55 : vector<1x512xf32> to vector<1x1x512xf32>
    tpu.vector_store %arg10[%c0_39, %c0_40, %c0_41], %58 {strides = array<i32>} : memref<1x1x512xf32, #tpu.memory_space<vmem>>, vector<1x1x512xf32>,
    return
  }
  func.func @transform_0(%arg0: i32) -> (i32, i32, i32) {
    %c0_i32 = arith.constant 0 : i32
    %c0_i32_0 = arith.constant 0 : i32
    %c0_i32_1 = arith.constant 0 : i32
    return %arg0, %c0_i32, %c0_i32_0 : i32, i32, i32
  }
  func.func @transform_1(%arg0: i32) -> (i32, i32) {
    %c0_i32 = arith.constant 0 : i32
    %c0_i32_0 = arith.constant 0 : i32
    %c0_i32_1 = arith.constant 0 : i32
    return %c0_i32, %c0_i32_0 : i32, i32
  }
  func.func @transform_2(%arg0: i32) -> (i32, i32) {
    %c0_i32 = arith.constant 0 : i32
    %c0_i32_0 = arith.constant 0 : i32
    %c0_i32_1 = arith.constant 0 : i32
    return %c0_i32, %c0_i32_0 : i32, i32
  }
  func.func @transform_3(%arg0: i32) -> (i32, i32) {
    %c0_i32 = arith.constant 0 : i32
    %c0_i32_0 = arith.constant 0 : i32
    %c0_i32_1 = arith.constant 0 : i32
    return %c0_i32, %c0_i32_0 : i32, i32
  }
  func.func @transform_4(%arg0: i32) -> (i32, i32) {
    %c0_i32 = arith.constant 0 : i32
    %c0_i32_0 = arith.constant 0 : i32
    %c0_i32_1 = arith.constant 0 : i32
    return %c0_i32, %c0_i32_0 : i32, i32
  }
  func.func @transform_5(%arg0: i32) -> (i32, i32) {
    %c0_i32 = arith.constant 0 : i32
    %c0_i32_0 = arith.constant 0 : i32
    %c0_i32_1 = arith.constant 0 : i32
    return %c0_i32, %c0_i32_0 : i32, i32
  }
  func.func @transform_6(%arg0: i32) -> (i32, i32) {
    %c0_i32 = arith.constant 0 : i32
    %c0_i32_0 = arith.constant 0 : i32
    %c0_i32_1 = arith.constant 0 : i32
    return %c0_i32, %c0_i32_0 : i32, i32
  }
  func.func @transform_7(%arg0: i32) -> (i32, i32) {
    %c0_i32 = arith.constant 0 : i32
    %c0_i32_0 = arith.constant 0 : i32
    %c0_i32_1 = arith.constant 0 : i32
    return %c0_i32, %c0_i32_0 : i32, i32
  }
  func.func @transform_8(%arg0: i32) -> (i32, i32, i32) {
    %c0_i32 = arith.constant 0 : i32
    %c0_i32_0 = arith.constant 0 : i32
    %c0_i32_1 = arith.constant 0 : i32
    return %arg0, %c0_i32, %c0_i32_0 : i32, i32, i32
  }
  func.func @transform_9(%arg0: i32) -> (i32, i32, i32) {
    %c0_i32 = arith.constant 0 : i32
    %c0_i32_0 = arith.constant 0 : i32
    %c0_i32_1 = arith.constant 0 : i32
    return %arg0, %c0_i32, %c0_i32_0 : i32, i32, i32
  }
}

</mosaic_0001>

<llo_original>
// kernel: ass_jrg_forward.1
$region0: #{ass_jrg_forward.1}
  #allocation0 [shape = 'u32[]', space=smem, size = 0x4, offset = 0x4, fixed_abs, tag = 'smem constant byte address 0x4 - core index']
  #allocation1 [shape = 'u32[144,128]{1,0:T(1,128)}', space=vmem, size = 0x12000, scoped, tag = 'internal scratch']
  #allocation2 [shape = 'f32[400,256]{1,0:T(8,128)}', space=vmem, size = 0x64000, scoped, tag = 'scratch operand']
  %s0 = inlined_call_operand.vmem [shape: f32[2,400,256], index: 0, kind: input, shape index: {}]
  %s1 = inlined_call_operand.vmem [shape: bf16[256,128], index: 1, kind: input, shape index: {}]
  %s2 = inlined_call_operand.vmem [shape: f32[1,128], index: 2, kind: input, shape index: {}]
  %s3 = inlined_call_operand.vmem [shape: bf16[256,128], index: 3, kind: input, shape index: {}]
  %s4 = inlined_call_operand.vmem [shape: f32[1,128], index: 4, kind: input, shape index: {}]
  %s5 = inlined_call_operand.vmem [shape: bf16[400,400], index: 5, kind: input, shape index: {}]
  %s6 = inlined_call_operand.vmem [shape: bf16[512,512], index: 6, kind: input, shape index: {}]
  %s7 = inlined_call_operand.vmem [shape: f32[1,512], index: 7, kind: input, shape index: {}]
  %s8 = inlined_call_operand.vmem [shape: f32[2,400,512], index: 8, kind: output, shape index: {0}]
  %s9 = inlined_call_operand.vmem [shape: f32[2,1,512], index: 9, kind: output, shape index: {1}]
  %10 = xla_tuple %s8, %s9
  %s11 = sld [smem:[#allocation0]]
  $region73: #{ass_jrg_forward.1} parent=0
    _
  %s13 = ssub.s32 1, %s11
  %s14 = scalar_select 0, %s13, %s11
  loop: start=0, step=1, limit=4
  $region2: #{ass_jrg_forward.1} parent=0 // loop_pre_header
    _
  $region3: #{ass_jrg_forward.1} parent=0 // loop_header
    %s16 = sphi 0, %s20
    %p17 = scmp.ge.s32.totalorder %s16, 4
    %s26 = sphi 0, %s28
    %s29 = sphi 0, %s26
    %s30 = sphi 0, %s29
    %s46 = sphi 0, %s30
    %s50 = sphi 0, %s50
    %s52 = sphi 0, %s50
    %s53 = sphi 0, %s52
    %s67 = sphi 0, %s53
    %s71 = sphi 0, %s71
    %s73 = sphi 0, %s71
    %s74 = sphi 0, %s73
    %s88 = sphi 0, %s74
    %s92 = sphi 0, %s92
    %s94 = sphi 0, %s92
    %s95 = sphi 0, %s94
    %s109 = sphi 0, %s95
    %s113 = sphi 0, %s113
    %s115 = sphi 0, %s113
    %s116 = sphi 0, %s115
    %s130 = sphi 0, %s116
    %s134 = sphi 0, %s134
    %s136 = sphi 0, %s134
    %s137 = sphi 0, %s136
    %s151 = sphi 0, %s137
    %s155 = sphi 0, %s155
    %s157 = sphi 0, %s155
    %s158 = sphi 0, %s157
    %s172 = sphi 0, %s158
    %s176 = sphi 0, %s176
    %s178 = sphi 0, %s176
    %s179 = sphi 0, %s178
    %s193 = sphi 0, %s179
    %s199 = sphi 0, %s201
    %s202 = sphi 0, %s199
    %s203 = sphi 0, %s202
    %s219 = sphi 0, %s203
    %s225 = sphi 0, %s227
    %s228 = sphi 0, %s225
    %s229 = sphi 0, %s228
    %s245 = sphi 0, %s229
  $region4: #{ass_jrg_forward.1} parent=0 // loop_header_branch
    %19 = sbr.rel (%p17) target = $region8
  $region5: #{ass_jrg_forward.1} parent=0 // loop_body
    %s21 = ssub.s32 %s16, 1
    %s22 = ssub.s32 %s16, 2
    %s23 = sadd.s32 %s16, 1
    %s24 = ssub.s32 %s16, %s23
    %p25 = scmp.eq.s32.totalorder %s24, 0
    %s27 = sadd.s32 %s26, 1
    %s28 = scalar_select %p25, %s26, %s27
    %p31 = pneg %p25
    %p32 = scmp.eq.s32.totalorder %s16, 1
    %p33 = por %p31, %p32
    %p34 = scmp.ne.s32.totalorder %s26, %s29
    %p35 = scmp.eq.s32.totalorder %s16, 0
    %p36 = por %p34, %p35
    %p37 = scmp.ne.s32.totalorder %s26, %s29
    %p38 = scmp.eq.s32.totalorder %s21, 1
    %p39 = por %p37, %p38
    %p40 = scmp.ne.s32.totalorder %s29, %s30
    %p41 = scmp.eq.s32.totalorder %s21, 0
    %p42 = por %p40, %p41
    %p43 = scmp.ne.s32.totalorder %s29, %s30
    %p44 = scmp.eq.s32.totalorder %s22, 1
    %p45 = por %p43, %p44
    %p47 = scmp.ne.s32.totalorder %s30, %s46
    %p48 = scmp.eq.s32.totalorder %s22, 0
    %p49 = por %p47, %p48
    %s51 = sadd.s32 %s50, 1
    %p54 = scmp.eq.s32.totalorder %s16, 1
    %p55 = scmp.ne.s32.totalorder %s50, %s52
    %p56 = scmp.eq.s32.totalorder %s16, 0
    %p57 = por %p55, %p56
    %p58 = scmp.ne.s32.totalorder %s50, %s52
    %p59 = scmp.eq.s32.totalorder %s21, 1
    %p60 = por %p58, %p59
    %p61 = scmp.ne.s32.totalorder %s52, %s53
    %p62 = scmp.eq.s32.totalorder %s21, 0
    %p63 = por %p61, %p62
    %p64 = scmp.ne.s32.totalorder %s52, %s53
    %p65 = scmp.eq.s32.totalorder %s22, 1
    %p66 = por %p64, %p65
    %p68 = scmp.ne.s32.totalorder %s53, %s67
    %p69 = scmp.eq.s32.totalorder %s22, 0
    %p70 = por %p68, %p69
    %s72 = sadd.s32 %s71, 1
    %p75 = scmp.eq.s32.totalorder %s16, 1
    %p76 = scmp.ne.s32.totalorder %s71, %s73
    %p77 = scmp.eq.s32.totalorder %s16, 0
    %p78 = por %p76, %p77
    %p79 = scmp.ne.s32.totalorder %s71, %s73
    %p80 = scmp.eq.s32.totalorder %s21, 1
    %p81 = por %p79, %p80
    %p82 = scmp.ne.s32.totalorder %s73, %s74
    %p83 = scmp.eq.s32.totalorder %s21, 0
    %p84 = por %p82, %p83
    %p85 = scmp.ne.s32.totalorder %s73, %s74
    %p86 = scmp.eq.s32.totalorder %s22, 1
    %p87 = por %p85, %p86
    %p89 = scmp.ne.s32.totalorder %s74, %s88
    %p90 = scmp.eq.s32.totalorder %s22, 0
    %p91 = por %p89, %p90
    %s93 = sadd.s32 %s92, 1
    %p96 = scmp.eq.s32.totalorder %s16, 1
    %p97 = scmp.ne.s32.totalorder %s92, %s94
    %p98 = scmp.eq.s32.totalorder %s16, 0
    %p99 = por %p97, %p98
    %p100 = scmp.ne.s32.totalorder %s92, %s94
    %p101 = scmp.eq.s32.totalorder %s21, 1
    %p102 = por %p100, %p101
    %p103 = scmp.ne.s32.totalorder %s94, %s95
    %p104 = scmp.eq.s32.totalorder %s21, 0
    %p105 = por %p103, %p104
    %p106 = scmp.ne.s32.totalorder %s94, %s95
    %p107 = scmp.eq.s32.totalorder %s22, 1
    %p108 = por %p106, %p107
    %p110 = scmp.ne.s32.totalorder %s95, %s109
    %p111 = scmp.eq.s32.totalorder %s22, 0
    %p112 = por %p110, %p111
    %s114 = sadd.s32 %s113, 1
    %p117 = scmp.eq.s32.totalorder %s16, 1
    %p118 = scmp.ne.s32.totalorder %s113, %s115
    %p119 = scmp.eq.s32.totalorder %s16, 0
    %p120 = por %p118, %p119
    %p121 = scmp.ne.s32.totalorder %s113, %s115
    %p122 = scmp.eq.s32.totalorder %s21, 1
    %p123 = por %p121, %p122
    %p124 = scmp.ne.s32.totalorder %s115, %s116
    %p125 = scmp.eq.s32.totalorder %s21, 0
    %p126 = por %p124, %p125
    %p127 = scmp.ne.s32.totalorder %s115, %s116
    %p128 = scmp.eq.s32.totalorder %s22, 1
    %p129 = por %p127, %p128
    %p131 = scmp.ne.s32.totalorder %s116, %s130
    %p132 = scmp.eq.s32.totalorder %s22, 0
    %p133 = por %p131, %p132
    %s135 = sadd.s32 %s134, 1
    %p138 = scmp.eq.s32.totalorder %s16, 1
    %p139 = scmp.ne.s32.totalorder %s134, %s136
    %p140 = scmp.eq.s32.totalorder %s16, 0
    %p141 = por %p139, %p140
    %p142 = scmp.ne.s32.totalorder %s134, %s136
    %p143 = scmp.eq.s32.totalorder %s21, 1
    %p144 = por %p142, %p143
    %p145 = scmp.ne.s32.totalorder %s136, %s137
    %p146 = scmp.eq.s32.totalorder %s21, 0
    %p147 = por %p145, %p146
    %p148 = scmp.ne.s32.totalorder %s136, %s137
    %p149 = scmp.eq.s32.totalorder %s22, 1
    %p150 = por %p148, %p149
    %p152 = scmp.ne.s32.totalorder %s137, %s151
    %p153 = scmp.eq.s32.totalorder %s22, 0
    %p154 = por %p152, %p153
    %s156 = sadd.s32 %s155, 1
    %p159 = scmp.eq.s32.totalorder %s16, 1
    %p160 = scmp.ne.s32.totalorder %s155, %s157
    %p161 = scmp.eq.s32.totalorder %s16, 0
    %p162 = por %p160, %p161
    %p163 = scmp.ne.s32.totalorder %s155, %s157
    %p164 = scmp.eq.s32.totalorder %s21, 1
    %p165 = por %p163, %p164
    %p166 = scmp.ne.s32.totalorder %s157, %s158
    %p167 = scmp.eq.s32.totalorder %s21, 0
    %p168 = por %p166, %p167
    %p169 = scmp.ne.s32.totalorder %s157, %s158
    %p170 = scmp.eq.s32.totalorder %s22, 1
    %p171 = por %p169, %p170
    %p173 = scmp.ne.s32.totalorder %s158, %s172
    %p174 = scmp.eq.s32.totalorder %s22, 0
    %p175 = por %p173, %p174
    %s177 = sadd.s32 %s176, 1
    %p180 = scmp.eq.s32.totalorder %s16, 1
    %p181 = scmp.ne.s32.totalorder %s176, %s178
    %p182 = scmp.eq.s32.totalorder %s16, 0
    %p183 = por %p181, %p182
    %p184 = scmp.ne.s32.totalorder %s176, %s178
    %p185 = scmp.eq.s32.totalorder %s21, 1
    %p186 = por %p184, %p185
    %p187 = scmp.ne.s32.totalorder %s178, %s179
    %p188 = scmp.eq.s32.totalorder %s21, 0
    %p189 = por %p187, %p188
    %p190 = scmp.ne.s32.totalorder %s178, %s179
    %p191 = scmp.eq.s32.totalorder %s22, 1
    %p192 = por %p190, %p191
    %p194 = scmp.ne.s32.totalorder %s179, %s193
    %p195 = scmp.eq.s32.totalorder %s22, 0
    %p196 = por %p194, %p195
    %s197 = ssub.s32 %s16, %s23
    %p198 = scmp.eq.s32.totalorder %s197, 0
    %s200 = sadd.s32 %s199, 1
    %s201 = scalar_select %p198, %s199, %s200
    %p204 = pneg %p198
    %p205 = scmp.eq.s32.totalorder %s16, 1
    %p206 = por %p204, %p205
    %p207 = scmp.ne.s32.totalorder %s199, %s202
    %p208 = scmp.eq.s32.totalorder %s16, 0
    %p209 = por %p207, %p208
    %p210 = scmp.ne.s32.totalorder %s199, %s202
    %p211 = scmp.eq.s32.totalorder %s21, 1
    %p212 = por %p210, %p211
    %p213 = scmp.ne.s32.totalorder %s202, %s203
    %p214 = scmp.eq.s32.totalorder %s21, 0
    %p215 = por %p213, %p214
    %p216 = scmp.ne.s32.totalorder %s202, %s203
    %p217 = scmp.eq.s32.totalorder %s22, 1
    %p218 = por %p216, %p217
    %p220 = scmp.ne.s32.totalorder %s203, %s219
    %p221 = scmp.eq.s32.totalorder %s22, 0
    %p222 = por %p220, %p221
    %s223 = ssub.s32 %s16, %s23
    %p224 = scmp.eq.s32.totalorder %s223, 0
    %s226 = sadd.s32 %s225, 1
    %s227 = scalar_select %p224, %s225, %s226
    %p230 = pneg %p224
    %p231 = scmp.eq.s32.totalorder %s16, 1
    %p232 = por %p230, %p231
    %p233 = scmp.ne.s32.totalorder %s225, %s228
    %p234 = scmp.eq.s32.totalorder %s16, 0
    %p235 = por %p233, %p234
    %p236 = scmp.ne.s32.totalorder %s225, %s228
    %p237 = scmp.eq.s32.totalorder %s21, 1
    %p238 = por %p236, %p237
    %p239 = scmp.ne.s32.totalorder %s228, %s229
    %p240 = scmp.eq.s32.totalorder %s21, 0
    %p241 = por %p239, %p240
    %p242 = scmp.ne.s32.totalorder %s228, %s229
    %p243 = scmp.eq.s32.totalorder %s22, 1
    %p244 = por %p242, %p243
    %p246 = scmp.ne.s32.totalorder %s229, %s245
    %p247 = scmp.eq.s32.totalorder %s22, 0
    %p248 = por %p246, %p247
    %p249 = scmp.le.s32.totalorder 1, %s16
    %p250 = scmp.lt.s32.totalorder %s16, 3
    %p251 = pnand %p249, %p250
    %p252 = pneg %p251
    // Predicated region
    $region9: #{ass_jrg_forward.1} parent=5 // pred_check
      _
    $region10: #{ass_jrg_forward.1} parent=5 // pred_check_branch
      %254 = sbr.rel (%p251) target = $region12
    $region11: #{ass_jrg_forward.1} parent=5 // pred_region
      %s255 = ssub.s32 %s16, 1
      // Predicated region
      $region13: #{ass_jrg_forward.1} parent=11 // pred_check
        %p256 = pneg %p63
      $region14: #{ass_jrg_forward.1} parent=11 // pred_check_branch
        %258 = sbr.rel (%p256) target = $region16
      $region15: #{ass_jrg_forward.1} parent=11 // pred_region
        _
      $region16: #{ass_jrg_forward.1} parent=11 // pred_fallthru
        _
      // Predicated region
      $region17: #{ass_jrg_forward.1} parent=11 // pred_check
        %p259 = pneg %p84
      $region18: #{ass_jrg_forward.1} parent=11 // pred_check_branch
        %261 = sbr.rel (%p259) target = $region20
      $region19: #{ass_jrg_forward.1} parent=11 // pred_region
        _
      $region20: #{ass_jrg_forward.1} parent=11 // pred_fallthru
        _
      // Predicated region
      $region21: #{ass_jrg_forward.1} parent=11 // pred_check
        %p262 = pneg %p105
      $region22: #{ass_jrg_forward.1} parent=11 // pred_check_branch
        %264 = sbr.rel (%p262) target = $region24
      $region23: #{ass_jrg_forward.1} parent=11 // pred_region
        _
      $region24: #{ass_jrg_forward.1} parent=11 // pred_fallthru
        _
      // Predicated region
      $region25: #{ass_jrg_forward.1} parent=11 // pred_check
        %p265 = pneg %p126
      $region26: #{ass_jrg_forward.1} parent=11 // pred_check_branch
        %267 = sbr.rel (%p265) target = $region28
      $region27: #{ass_jrg_forward.1} parent=11 // pred_region
        _
      $region28: #{ass_jrg_forward.1} parent=11 // pred_fallthru
        _
      // Predicated region
      $region29: #{ass_jrg_forward.1} parent=11 // pred_check
        %p268 = pneg %p147
      $region30: #{ass_jrg_forward.1} parent=11 // pred_check_branch
        %270 = sbr.rel (%p268) target = $region32
      $region31: #{ass_jrg_forward.1} parent=11 // pred_region
        _
      $region32: #{ass_jrg_forward.1} parent=11 // pred_fallthru
        _
      // Predicated region
      $region33: #{ass_jrg_forward.1} parent=11 // pred_check
        %p271 = pneg %p168
      $region34: #{ass_jrg_forward.1} parent=11 // pred_check_branch
        %273 = sbr.rel (%p271) target = $region36
      $region35: #{ass_jrg_forward.1} parent=11 // pred_region
        _
      $region36: #{ass_jrg_forward.1} parent=11 // pred_fallthru
        _
      // Predicated region
      $region37: #{ass_jrg_forward.1} parent=11 // pred_check
        %p274 = pneg %p189
      $region38: #{ass_jrg_forward.1} parent=11 // pred_check_branch
        %276 = sbr.rel (%p274) target = $region40
      $region39: #{ass_jrg_forward.1} parent=11 // pred_region
        _
      $region40: #{ass_jrg_forward.1} parent=11 // pred_fallthru
        _
    $region12: #{ass_jrg_forward.1} parent=5 // pred_fallthru
      _
    %p277 = scmp.lt.s32.totalorder %s16, 2
    // Predicated region
    $region41: #{ass_jrg_forward.1} parent=5 // pred_check
      %p278 = pneg %p277
    $region42: #{ass_jrg_forward.1} parent=5 // pred_check_branch
      %280 = sbr.rel (%p278) target = $region44
    $region43: #{ass_jrg_forward.1} parent=5 // pred_region
      // Predicated region
      $region45: #{ass_jrg_forward.1} parent=43 // pred_check
        %p281 = pneg %p36
      $region46: #{ass_jrg_forward.1} parent=43 // pred_check_branch
        %283 = sbr.rel (%p281) target = $region48
      $region47: #{ass_jrg_forward.1} parent=43 // pred_region
        %p284 = scmp.lt.s32.totalorder %s16, 1
        %s285 = scalar_select %p284, %s16, 1
        %s286 = smul.addr %s285, 100
        %s287 = smul.addr %s286, 8
        %s288 = scalar_lea.vmem %s0, %s287
      $region48: #{ass_jrg_forward.1} parent=43 // pred_fallthru
        _
    $region44: #{ass_jrg_forward.1} parent=5 // pred_fallthru
      _
    %p289 = scmp.le.s32.totalorder 1, %s16
    %p290 = scmp.lt.s32.totalorder %s16, 3
    %p291 = pnand %p289, %p290
    %p292 = pneg %p291
    // Predicated region
    $region49: #{ass_jrg_forward.1} parent=5 // pred_check
      _
    $region50: #{ass_jrg_forward.1} parent=5 // pred_check_branch
      %294 = sbr.rel (%p291) target = $region52
    $region51: #{ass_jrg_forward.1} parent=5 // pred_region
      %s295 = ssub.s32 %s16, 1
      %p296 = scmp.lt.s32.totalorder %s21, 1
      %s297 = scalar_select %p296, %s21, 1
      %s298 = smul.addr %s297, 100
      %s299 = smul.addr %s298, 8
      %s300 = scalar_lea.vmem %s0, %s299
      %p301 = pneg %p42
      %p302 = pneg %p39
      %p303 = pneg %p63
      %p304 = pneg %p60
      %p305 = pneg %p84
      %p306 = pneg %p81
      %p307 = pneg %p105
      %p308 = pneg %p102
      %p309 = pneg %p126
      %p310 = pneg %p123
      %p311 = pneg %p147
      %p312 = pneg %p144
      %p313 = pneg %p168
      %p314 = pneg %p165
      %p315 = pneg %p189
      %p316 = pneg %p186
      %p317 = pneg %p215
      %p318 = pneg %p212
      %p319 = scmp.lt.s32.totalorder %s21, 1
      %s320 = scalar_select %p319, %s21, 1
      %s321 = smul.addr %s320, 200
      %s322 = smul.addr %s321, 8
      %s323 = scalar_lea.vmem %s8, %s322
      %p324 = pneg %p241
      %p325 = pneg %p238
      %p326 = scmp.lt.s32.totalorder %s21, 1
      %s327 = scalar_select %p326, %s21, 1
      %s328 = smul.addr %s327, 4
      %s329 = scalar_lea.vmem %s9, %s328
      %p330 = scmp.lt.s32.totalorder %s21, 1
      %s331 = scalar_select %p330, %s21, 1
      %s332 = smul.addr %s331, 100
      %s333 = smul.addr %s332, 8
      %s334 = scalar_lea.vmem %s0, %s333
      %p335 = scmp.lt.s32.totalorder %s21, 1
      %s336 = scalar_select %p335, %s21, 1
      %s337 = smul.addr %s336, 200
      %s338 = smul.addr %s337, 8
      %s339 = scalar_lea.vmem %s8, %s338
      %p340 = scmp.lt.s32.totalorder %s21, 1
      %s341 = scalar_select %p340, %s21, 1
      %s342 = smul.addr %s341, 4
      %s343 = scalar_lea.vmem %s9, %s342
      %v345 = vld [vmem:[%s334] sm:$0xff]
      %v346 = vld [vmem:[%s334 + $0x8] sm:$0xff]
      %v347 = vld [vmem:[%s334 + $0x10] sm:$0xff]
      %v348 = vld [vmem:[%s334 + $0x18] sm:$0xff]
      %v349 = vld [vmem:[%s334 + $0x20] sm:$0xff]
      %v350 = vld [vmem:[%s334 + $0x28] sm:$0xff]
      %v351 = vld [vmem:[%s334 + $0x30] sm:$0xff]
      %v352 = vld [vmem:[%s334 + $0x38] sm:$0xff]
      %v353 = vld [vmem:[%s334 + $0x40] sm:$0xff]
      %v354 = vld [vmem:[%s334 + $0x48] sm:$0xff]
      %v355 = vld [vmem:[%s334 + $0x50] sm:$0xff]
      %v356 = vld [vmem:[%s334 + $0x58] sm:$0xff]
      %v357 = vld [vmem:[%s334 + $0x60] sm:$0xff]
      %v358 = vld [vmem:[%s334 + $0x68] sm:$0xff]
      %v359 = vld [vmem:[%s334 + $0x70] sm:$0xff]
      %v360 = vld [vmem:[%s334 + $0x78] sm:$0xff]
      %v361 = vld [vmem:[%s334 + $0x80] sm:$0xff]
      %v362 = vld [vmem:[%s334 + $0x88] sm:$0xff]
      %v363 = vld [vmem:[%s334 + $0x90] sm:$0xff]
      %v364 = vld [vmem:[%s334 + $0x98] sm:$0xff]
      %v365 = vld [vmem:[%s334 + $0xa0] sm:$0xff]
      %v366 = vld [vmem:[%s334 + $0xa8] sm:$0xff]
      %v367 = vld [vmem:[%s334 + $0xb0] sm:$0xff]
      %v368 = vld [vmem:[%s334 + $0xb8] sm:$0xff]
      %v369 = vld [vmem:[%s334 + $0xc0] sm:$0xff]
      %v370 = vld [vmem:[%s334 + $0xc8] sm:$0xff]
      %v371 = vld [vmem:[%s334 + $0xd0] sm:$0xff]
      %v372 = vld [vmem:[%s334 + $0xd8] sm:$0xff]
      %v373 = vld [vmem:[%s334 + $0xe0] sm:$0xff]
      %v374 = vld [vmem:[%s334 + $0xe8] sm:$0xff]
      %v375 = vld [vmem:[%s334 + $0xf0] sm:$0xff]
      %v376 = vld [vmem:[%s334 + $0xf8] sm:$0xff]
      %v377 = vld [vmem:[%s334 + $0x100] sm:$0xff]
      %v378 = vld [vmem:[%s334 + $0x108] sm:$0xff]
      %v379 = vld [vmem:[%s334 + $0x110] sm:$0xff]
      %v380 = vld [vmem:[%s334 + $0x118] sm:$0xff]
      %v381 = vld [vmem:[%s334 + $0x120] sm:$0xff]
      %v382 = vld [vmem:[%s334 + $0x128] sm:$0xff]
      %v383 = vld [vmem:[%s334 + $0x130] sm:$0xff]
      %v384 = vld [vmem:[%s334 + $0x138] sm:$0xff]
      %v385 = vld [vmem:[%s334 + $0x140] sm:$0xff]
      %v386 = vld [vmem:[%s334 + $0x148] sm:$0xff]
      %v387 = vld [vmem:[%s334 + $0x150] sm:$0xff]
      %v388 = vld [vmem:[%s334 + $0x158] sm:$0xff]
      %v389 = vld [vmem:[%s334 + $0x160] sm:$0xff]
      %v390 = vld [vmem:[%s334 + $0x168] sm:$0xff]
      %v391 = vld [vmem:[%s334 + $0x170] sm:$0xff]
      %v392 = vld [vmem:[%s334 + $0x178] sm:$0xff]
      %v393 = vld [vmem:[%s334 + $0x180] sm:$0xff]
      %v394 = vld [vmem:[%s334 + $0x188] sm:$0xff]
      %v395 = vld [vmem:[%s334 + $0x190] sm:$0xff]
      %v396 = vld [vmem:[%s334 + $0x198] sm:$0xff]
      %v397 = vld [vmem:[%s334 + $0x1a0] sm:$0xff]
      %v398 = vld [vmem:[%s334 + $0x1a8] sm:$0xff]
      %v399 = vld [vmem:[%s334 + $0x1b0] sm:$0xff]
      %v400 = vld [vmem:[%s334 + $0x1b8] sm:$0xff]
      %v401 = vld [vmem:[%s334 + $0x1c0] sm:$0xff]
      %v402 = vld [vmem:[%s334 + $0x1c8] sm:$0xff]
      %v403 = vld [vmem:[%s334 + $0x1d0] sm:$0xff]
      %v404 = vld [vmem:[%s334 + $0x1d8] sm:$0xff]
      %v405 = vld [vmem:[%s334 + $0x1e0] sm:$0xff]
      %v406 = vld [vmem:[%s334 + $0x1e8] sm:$0xff]
      %v407 = vld [vmem:[%s334 + $0x1f0] sm:$0xff]
      %v408 = vld [vmem:[%s334 + $0x1f8] sm:$0xff]
      %v409 = vld [vmem:[%s334 + $0x200] sm:$0xff]
      %v410 = vld [vmem:[%s334 + $0x208] sm:$0xff]
      %v411 = vld [vmem:[%s334 + $0x210] sm:$0xff]
      %v412 = vld [vmem:[%s334 + $0x218] sm:$0xff]
      %v413 = vld [vmem:[%s334 + $0x220] sm:$0xff]
      %v414 = vld [vmem:[%s334 + $0x228] sm:$0xff]
      %v415 = vld [vmem:[%s334 + $0x230] sm:$0xff]
      %v416 = vld [vmem:[%s334 + $0x238] sm:$0xff]
      %v417 = vld [vmem:[%s334 + $0x240] sm:$0xff]
      %v418 = vld [vmem:[%s334 + $0x248] sm:$0xff]
      %v419 = vld [vmem:[%s334 + $0x250] sm:$0xff]
      %v420 = vld [vmem:[%s334 + $0x258] sm:$0xff]
      %v421 = vld [vmem:[%s334 + $0x260] sm:$0xff]
      %v422 = vld [vmem:[%s334 + $0x268] sm:$0xff]
      %v423 = vld [vmem:[%s334 + $0x270] sm:$0xff]
      %v424 = vld [vmem:[%s334 + $0x278] sm:$0xff]
      %v425 = vld [vmem:[%s334 + $0x280] sm:$0xff]
      %v426 = vld [vmem:[%s334 + $0x288] sm:$0xff]
      %v427 = vld [vmem:[%s334 + $0x290] sm:$0xff]
      %v428 = vld [vmem:[%s334 + $0x298] sm:$0xff]
      %v429 = vld [vmem:[%s334 + $0x2a0] sm:$0xff]
      %v430 = vld [vmem:[%s334 + $0x2a8] sm:$0xff]
      %v431 = vld [vmem:[%s334 + $0x2b0] sm:$0xff]
      %v432 = vld [vmem:[%s334 + $0x2b8] sm:$0xff]
      %v433 = vld [vmem:[%s334 + $0x2c0] sm:$0xff]
      %v434 = vld [vmem:[%s334 + $0x2c8] sm:$0xff]
      %v435 = vld [vmem:[%s334 + $0x2d0] sm:$0xff]
      %v436 = vld [vmem:[%s334 + $0x2d8] sm:$0xff]
      %v437 = vld [vmem:[%s334 + $0x2e0] sm:$0xff]
      %v438 = vld [vmem:[%s334 + $0x2e8] sm:$0xff]
      %v439 = vld [vmem:[%s334 + $0x2f0] sm:$0xff]
      %v440 = vld [vmem:[%s334 + $0x2f8] sm:$0xff]
      %v441 = vld [vmem:[%s334 + $0x300] sm:$0xff]
      %v442 = vld [vmem:[%s334 + $0x308] sm:$0xff]
      %v443 = vld [vmem:[%s334 + $0x310] sm:$0xff]
      %v444 = vld [vmem:[%s334 + $0x318] sm:$0xff]
      %vm545 = vcmask 1040384
      %v546 = vrot.slane %v345, 7
      %v547 = vrot.slane %v346, 7
      %v548 = vrot.slane %v347, 7
      %v549 = vsel %vm545, %v546, %v548
      %v550 = vrot.slane %v348, 7
      %v551 = vsel %vm545, %v547, %v550
      %v552 = vrot.slane %v349, 7
      %v553 = vsel %vm545, %v548, %v552
      %v554 = vrot.slane %v350, 7
      %v555 = vsel %vm545, %v550, %v554
      %v556 = vrot.slane %v351, 7
      %v557 = vsel %vm545, %v552, %v556
      %v558 = vrot.slane %v352, 7
      %v559 = vsel %vm545, %v554, %v558
      %v560 = vrot.slane %v353, 7
      %v561 = vsel %vm545, %v556, %v560
      %v562 = vrot.slane %v354, 7
      %v563 = vsel %vm545, %v558, %v562
      %v564 = vrot.slane %v355, 7
      %v565 = vsel %vm545, %v560, %v564
      %v566 = vrot.slane %v356, 7
      %v567 = vsel %vm545, %v562, %v566
      %v568 = vrot.slane %v357, 7
      %v569 = vsel %vm545, %v564, %v568
      %v570 = vrot.slane %v358, 7
      %v571 = vsel %vm545, %v566, %v570
      %v572 = vrot.slane %v359, 7
      %v573 = vsel %vm545, %v568, %v572
      %v574 = vrot.slane %v360, 7
      %v575 = vsel %vm545, %v570, %v574
      %v576 = vrot.slane %v361, 7
      %v577 = vsel %vm545, %v572, %v576
      %v578 = vrot.slane %v362, 7
      %v579 = vsel %vm545, %v574, %v578
      %v580 = vrot.slane %v363, 7
      %v581 = vsel %vm545, %v576, %v580
      %v582 = vrot.slane %v364, 7
      %v583 = vsel %vm545, %v578, %v582
      %v584 = vrot.slane %v365, 7
      %v585 = vsel %vm545, %v580, %v584
      %v586 = vrot.slane %v366, 7
      %v587 = vsel %vm545, %v582, %v586
      %v588 = vrot.slane %v367, 7
      %v589 = vsel %vm545, %v584, %v588
      %v590 = vrot.slane %v368, 7
      %v591 = vsel %vm545, %v586, %v590
      %v592 = vrot.slane %v369, 7
      %v593 = vsel %vm545, %v588, %v592
      %v594 = vrot.slane %v370, 7
      %v595 = vsel %vm545, %v590, %v594
      %v596 = vrot.slane %v371, 7
      %v597 = vsel %vm545, %v592, %v596
      %v598 = vrot.slane %v372, 7
      %v599 = vsel %vm545, %v594, %v598
      %v600 = vrot.slane %v373, 7
      %v601 = vsel %vm545, %v596, %v600
      %v602 = vrot.slane %v374, 7
      %v603 = vsel %vm545, %v598, %v602
      %v604 = vrot.slane %v375, 7
      %v605 = vsel %vm545, %v600, %v604
      %v606 = vrot.slane %v376, 7
      %v607 = vsel %vm545, %v602, %v606
      %v608 = vrot.slane %v377, 7
      %v609 = vsel %vm545, %v604, %v608
      %v610 = vrot.slane %v378, 7
      %v611 = vsel %vm545, %v606, %v610
      %v612 = vrot.slane %v379, 7
      %v613 = vsel %vm545, %v608, %v612
      %v614 = vrot.slane %v380, 7
      %v615 = vsel %vm545, %v610, %v614
      %v616 = vrot.slane %v381, 7
      %v617 = vsel %vm545, %v612, %v616
      %v618 = vrot.slane %v382, 7
      %v619 = vsel %vm545, %v614, %v618
      %v620 = vrot.slane %v383, 7
      %v621 = vsel %vm545, %v616, %v620
      %v622 = vrot.slane %v384, 7
      %v623 = vsel %vm545, %v618, %v622
      %v624 = vrot.slane %v385, 7
      %v625 = vsel %vm545, %v620, %v624
      %v626 = vrot.slane %v386, 7
      %v627 = vsel %vm545, %v622, %v626
      %v628 = vrot.slane %v387, 7
      %v629 = vsel %vm545, %v624, %v628
      %v630 = vrot.slane %v388, 7
      %v631 = vsel %vm545, %v626, %v630
      %v632 = vrot.slane %v389, 7
      %v633 = vsel %vm545, %v628, %v632
      %v634 = vrot.slane %v390, 7
      %v635 = vsel %vm545, %v630, %v634
      %v636 = vrot.slane %v391, 7
      %v637 = vsel %vm545, %v632, %v636
      %v638 = vrot.slane %v392, 7
      %v639 = vsel %vm545, %v634, %v638
      %v640 = vrot.slane %v393, 7
      %v641 = vsel %vm545, %v636, %v640
      %v642 = vrot.slane %v394, 7
      %v643 = vsel %vm545, %v638, %v642
      %v644 = vrot.slane %v395, 7
      %v645 = vsel %vm545, %v640, %v644
      %v646 = vrot.slane %v396, 7
      %v647 = vsel %vm545, %v642, %v646
      %v648 = vrot.slane %v397, 7
      %v649 = vsel %vm545, %v644, %v648
      %v650 = vrot.slane %v398, 7
      %v651 = vsel %vm545, %v646, %v650
      %v652 = vrot.slane %v399, 7
      %v653 = vsel %vm545, %v648, %v652
      %v654 = vrot.slane %v400, 7
      %v655 = vsel %vm545, %v650, %v654
      %v656 = vrot.slane %v401, 7
      %v657 = vsel %vm545, %v652, %v656
      %v658 = vrot.slane %v402, 7
      %v659 = vsel %vm545, %v654, %v658
      %v660 = vrot.slane %v403, 7
      %v661 = vsel %vm545, %v656, %v660
      %v662 = vrot.slane %v404, 7
      %v663 = vsel %vm545, %v658, %v662
      %v664 = vrot.slane %v405, 7
      %v665 = vsel %vm545, %v660, %v664
      %v666 = vrot.slane %v406, 7
      %v667 = vsel %vm545, %v662, %v666
      %v668 = vrot.slane %v407, 7
      %v669 = vsel %vm545, %v664, %v668
      %v670 = vrot.slane %v408, 7
      %v671 = vsel %vm545, %v666, %v670
      %v672 = vrot.slane %v409, 7
      %v673 = vsel %vm545, %v668, %v672
      %v674 = vrot.slane %v410, 7
      %v675 = vsel %vm545, %v670, %v674
      %v676 = vrot.slane %v411, 7
      %v677 = vsel %vm545, %v672, %v676
      %v678 = vrot.slane %v412, 7
      %v679 = vsel %vm545, %v674, %v678
      %v680 = vrot.slane %v413, 7
      %v681 = vsel %vm545, %v676, %v680
      %v682 = vrot.slane %v414, 7
      %v683 = vsel %vm545, %v678, %v682
      %v684 = vrot.slane %v415, 7
      %v685 = vsel %vm545, %v680, %v684
      %v686 = vrot.slane %v416, 7
      %v687 = vsel %vm545, %v682, %v686
      %v688 = vrot.slane %v417, 7
      %v689 = vsel %vm545, %v684, %v688
      %v690 = vrot.slane %v418, 7
      %v691 = vsel %vm545, %v686, %v690
      %v692 = vrot.slane %v419, 7
      %v693 = vsel %vm545, %v688, %v692
      %v694 = vrot.slane %v420, 7
      %v695 = vsel %vm545, %v690, %v694
      %v696 = vrot.slane %v421, 7
      %v697 = vsel %vm545, %v692, %v696
      %v698 = vrot.slane %v422, 7
      %v699 = vsel %vm545, %v694, %v698
      %v700 = vrot.slane %v423, 7
      %v701 = vsel %vm545, %v696, %v700
      %v702 = vrot.slane %v424, 7
      %v703 = vsel %vm545, %v698, %v702
      %v704 = vrot.slane %v425, 7
      %v705 = vsel %vm545, %v700, %v704
      %v706 = vrot.slane %v426, 7
      %v707 = vsel %vm545, %v702, %v706
      %v708 = vrot.slane %v427, 7
      %v709 = vsel %vm545, %v704, %v708
      %v710 = vrot.slane %v428, 7
      %v711 = vsel %vm545, %v706, %v710
      %v712 = vrot.slane %v429, 7
      %v713 = vsel %vm545, %v708, %v712
      %v714 = vrot.slane %v430, 7
      %v715 = vsel %vm545, %v710, %v714
      %v716 = vrot.slane %v431, 7
      %v717 = vsel %vm545, %v712, %v716
      %v718 = vrot.slane %v432, 7
      %v719 = vsel %vm545, %v714, %v718
      %v720 = vrot.slane %v433, 7
      %v721 = vsel %vm545, %v716, %v720
      %v722 = vrot.slane %v434, 7
      %v723 = vsel %vm545, %v718, %v722
      %v724 = vrot.slane %v435, 7
      %v725 = vsel %vm545, %v720, %v724
      %v726 = vrot.slane %v436, 7
      %v727 = vsel %vm545, %v722, %v726
      %v728 = vrot.slane %v437, 7
      %v729 = vsel %vm545, %v724, %v728
      %v730 = vrot.slane %v438, 7
      %v731 = vsel %vm545, %v726, %v730
      %v732 = vrot.slane %v439, 7
      %v733 = vsel %vm545, %v728, %v732
      %v734 = vrot.slane %v440, 7
      %v735 = vsel %vm545, %v730, %v734
      %v736 = vrot.slane %v441, 7
      %v737 = vsel %vm545, %v732, %v736
      %v738 = vrot.slane %v442, 7
      %v739 = vsel %vm545, %v734, %v738
      %v740 = vrot.slane %v443, 7
      %v741 = vsel %vm545, %v736, %v740
      %v742 = vrot.slane %v444, 7
      %v743 = vsel %vm545, %v738, %v742
      %v844 = vsub.f32 %v345, %v546
      %v845 = vsub.f32 %v346, %v547
      %v846 = vsub.f32 %v347, %v549
      %v847 = vsub.f32 %v348, %v551
      %v848 = vsub.f32 %v349, %v553
      %v849 = vsub.f32 %v350, %v555
      %v850 = vsub.f32 %v351, %v557
      %v851 = vsub.f32 %v352, %v559
      %v852 = vsub.f32 %v353, %v561
      %v853 = vsub.f32 %v354, %v563
      %v854 = vsub.f32 %v355, %v565
      %v855 = vsub.f32 %v356, %v567
      %v856 = vsub.f32 %v357, %v569
      %v857 = vsub.f32 %v358, %v571
      %v858 = vsub.f32 %v359, %v573
      %v859 = vsub.f32 %v360, %v575
      %v860 = vsub.f32 %v361, %v577
      %v861 = vsub.f32 %v362, %v579
      %v862 = vsub.f32 %v363, %v581
      %v863 = vsub.f32 %v364, %v583
      %v864 = vsub.f32 %v365, %v585
      %v865 = vsub.f32 %v366, %v587
      %v866 = vsub.f32 %v367, %v589
      %v867 = vsub.f32 %v368, %v591
      %v868 = vsub.f32 %v369, %v593
      %v869 = vsub.f32 %v370, %v595
      %v870 = vsub.f32 %v371, %v597
      %v871 = vsub.f32 %v372, %v599
      %v872 = vsub.f32 %v373, %v601
      %v873 = vsub.f32 %v374, %v603
      %v874 = vsub.f32 %v375, %v605
      %v875 = vsub.f32 %v376, %v607
      %v876 = vsub.f32 %v377, %v609
      %v877 = vsub.f32 %v378, %v611
      %v878 = vsub.f32 %v379, %v613
      %v879 = vsub.f32 %v380, %v615
      %v880 = vsub.f32 %v381, %v617
      %v881 = vsub.f32 %v382, %v619
      %v882 = vsub.f32 %v383, %v621
      %v883 = vsub.f32 %v384, %v623
      %v884 = vsub.f32 %v385, %v625
      %v885 = vsub.f32 %v386, %v627
      %v886 = vsub.f32 %v387, %v629
      %v887 = vsub.f32 %v388, %v631
      %v888 = vsub.f32 %v389, %v633
      %v889 = vsub.f32 %v390, %v635
      %v890 = vsub.f32 %v391, %v637
      %v891 = vsub.f32 %v392, %v639
      %v892 = vsub.f32 %v393, %v641
      %v893 = vsub.f32 %v394, %v643
      %v894 = vsub.f32 %v395, %v645
      %v895 = vsub.f32 %v396, %v647
      %v896 = vsub.f32 %v397, %v649
      %v897 = vsub.f32 %v398, %v651
      %v898 = vsub.f32 %v399, %v653
      %v899 = vsub.f32 %v400, %v655
      %v900 = vsub.f32 %v401, %v657
      %v901 = vsub.f32 %v402, %v659
      %v902 = vsub.f32 %v403, %v661
      %v903 = vsub.f32 %v404, %v663
      %v904 = vsub.f32 %v405, %v665
      %v905 = vsub.f32 %v406, %v667
      %v906 = vsub.f32 %v407, %v669
      %v907 = vsub.f32 %v408, %v671
      %v908 = vsub.f32 %v409, %v673
      %v909 = vsub.f32 %v410, %v675
      %v910 = vsub.f32 %v411, %v677
      %v911 = vsub.f32 %v412, %v679
      %v912 = vsub.f32 %v413, %v681
      %v913 = vsub.f32 %v414, %v683
      %v914 = vsub.f32 %v415, %v685
      %v915 = vsub.f32 %v416, %v687
      %v916 = vsub.f32 %v417, %v689
      %v917 = vsub.f32 %v418, %v691
      %v918 = vsub.f32 %v419, %v693
      %v919 = vsub.f32 %v420, %v695
      %v920 = vsub.f32 %v421, %v697
      %v921 = vsub.f32 %v422, %v699
      %v922 = vsub.f32 %v423, %v701
      %v923 = vsub.f32 %v424, %v703
      %v924 = vsub.f32 %v425, %v705
      %v925 = vsub.f32 %v426, %v707
      %v926 = vsub.f32 %v427, %v709
      %v927 = vsub.f32 %v428, %v711
      %v928 = vsub.f32 %v429, %v713
      %v929 = vsub.f32 %v430, %v715
      %v930 = vsub.f32 %v431, %v717
      %v931 = vsub.f32 %v432, %v719
      %v932 = vsub.f32 %v433, %v721
      %v933 = vsub.f32 %v434, %v723
      %v934 = vsub.f32 %v435, %v725
      %v935 = vsub.f32 %v436, %v727
      %v936 = vsub.f32 %v437, %v729
      %v937 = vsub.f32 %v438, %v731
      %v938 = vsub.f32 %v439, %v733
      %v939 = vsub.f32 %v440, %v735
      %v940 = vsub.f32 %v441, %v737
      %v941 = vsub.f32 %v442, %v739
      %v942 = vsub.f32 %v443, %v741
      %v943 = vsub.f32 %v444, %v743
      %v944 = vand.u32 2147483647, %v844
      %v945 = vand.u32 2147483647, %v845
      %v946 = vand.u32 2147483647, %v846
      %v947 = vand.u32 2147483647, %v847
      %v948 = vand.u32 2147483647, %v848
      %v949 = vand.u32 2147483647, %v849
      %v950 = vand.u32 2147483647, %v850
      %v951 = vand.u32 2147483647, %v851
      %v952 = vand.u32 2147483647, %v852
      %v953 = vand.u32 2147483647, %v853
      %v954 = vand.u32 2147483647, %v854
      %v955 = vand.u32 2147483647, %v855
      %v956 = vand.u32 2147483647, %v856
      %v957 = vand.u32 2147483647, %v857
      %v958 = vand.u32 2147483647, %v858
      %v959 = vand.u32 2147483647, %v859
      %v960 = vand.u32 2147483647, %v860
      %v961 = vand.u32 2147483647, %v861
      %v962 = vand.u32 2147483647, %v862
      %v963 = vand.u32 2147483647, %v863
      %v964 = vand.u32 2147483647, %v864
      %v965 = vand.u32 2147483647, %v865
      %v966 = vand.u32 2147483647, %v866
      %v967 = vand.u32 2147483647, %v867
      %v968 = vand.u32 2147483647, %v868
      %v969 = vand.u32 2147483647, %v869
      %v970 = vand.u32 2147483647, %v870
      %v971 = vand.u32 2147483647, %v871
      %v972 = vand.u32 2147483647, %v872
      %v973 = vand.u32 2147483647, %v873
      %v974 = vand.u32 2147483647, %v874
      %v975 = vand.u32 2147483647, %v875
      %v976 = vand.u32 2147483647, %v876
      %v977 = vand.u32 2147483647, %v877
      %v978 = vand.u32 2147483647, %v878
      %v979 = vand.u32 2147483647, %v879
      %v980 = vand.u32 2147483647, %v880
      %v981 = vand.u32 2147483647, %v881
      %v982 = vand.u32 2147483647, %v882
      %v983 = vand.u32 2147483647, %v883
      %v984 = vand.u32 2147483647, %v884
      %v985 = vand.u32 2147483647, %v885
      %v986 = vand.u32 2147483647, %v886
      %v987 = vand.u32 2147483647, %v887
      %v988 = vand.u32 2147483647, %v888
      %v989 = vand.u32 2147483647, %v889
      %v990 = vand.u32 2147483647, %v890
      %v991 = vand.u32 2147483647, %v891
      %v992 = vand.u32 2147483647, %v892
      %v993 = vand.u32 2147483647, %v893
      %v994 = vand.u32 2147483647, %v894
      %v995 = vand.u32 2147483647, %v895
      %v996 = vand.u32 2147483647, %v896
      %v997 = vand.u32 2147483647, %v897
      %v998 = vand.u32 2147483647, %v898
      %v999 = vand.u32 2147483647, %v899
      %v1000 = vand.u32 2147483647, %v900
      %v1001 = vand.u32 2147483647, %v901
      %v1002 = vand.u32 2147483647, %v902
      %v1003 = vand.u32 2147483647, %v903
      %v1004 = vand.u32 2147483647, %v904
      %v1005 = vand.u32 2147483647, %v905
      %v1006 = vand.u32 2147483647, %v906
      %v1007 = vand.u32 2147483647, %v907
      %v1008 = vand.u32 2147483647, %v908
      %v1009 = vand.u32 2147483647, %v909
      %v1010 = vand.u32 2147483647, %v910
      %v1011 = vand.u32 2147483647, %v911
      %v1012 = vand.u32 2147483647, %v912
      %v1013 = vand.u32 2147483647, %v913
      %v1014 = vand.u32 2147483647, %v914
      %v1015 = vand.u32 2147483647, %v915
      %v1016 = vand.u32 2147483647, %v916
      %v1017 = vand.u32 2147483647, %v917
      %v1018 = vand.u32 2147483647, %v918
      %v1019 = vand.u32 2147483647, %v919
      %v1020 = vand.u32 2147483647, %v920
      %v1021 = vand.u32 2147483647, %v921
      %v1022 = vand.u32 2147483647, %v922
      %v1023 = vand.u32 2147483647, %v923
      %v1024 = vand.u32 2147483647, %v924
      %v1025 = vand.u32 2147483647, %v925
      %v1026 = vand.u32 2147483647, %v926
      %v1027 = vand.u32 2147483647, %v927
      %v1028 = vand.u32 2147483647, %v928
      %v1029 = vand.u32 2147483647, %v929
      %v1030 = vand.u32 2147483647, %v930
      %v1031 = vand.u32 2147483647, %v931
      %v1032 = vand.u32 2147483647, %v932
      %v1033 = vand.u32 2147483647, %v933
      %v1034 = vand.u32 2147483647, %v934
      %v1035 = vand.u32 2147483647, %v935
      %v1036 = vand.u32 2147483647, %v936
      %v1037 = vand.u32 2147483647, %v937
      %v1038 = vand.u32 2147483647, %v938
      %v1039 = vand.u32 2147483647, %v939
      %v1040 = vand.u32 2147483647, %v940
      %v1041 = vand.u32 2147483647, %v941
      %v1042 = vand.u32 2147483647, %v942
      %v1043 = vand.u32 2147483647, %v943
      %vm1144 = vcmask 1046528
      %v1145 = vrot.slane %v944, 1
      %v1146 = vrot.slane %v946, 1
      %v1147 = vsel %vm1144, %v1145, %v1146
      %v1148 = vrot.slane %v945, 1
      %v1149 = vrot.slane %v947, 1
      %v1150 = vsel %vm1144, %v1148, %v1149
      %v1151 = vrot.slane %v948, 1
      %v1152 = vsel %vm1144, %v1146, %v1151
      %v1153 = vrot.slane %v949, 1
      %v1154 = vsel %vm1144, %v1149, %v1153
      %v1155 = vrot.slane %v950, 1
      %v1156 = vsel %vm1144, %v1151, %v1155
      %v1157 = vrot.slane %v951, 1
      %v1158 = vsel %vm1144, %v1153, %v1157
      %v1159 = vrot.slane %v952, 1
      %v1160 = vsel %vm1144, %v1155, %v1159
      %v1161 = vrot.slane %v953, 1
      %v1162 = vsel %vm1144, %v1157, %v1161
      %v1163 = vrot.slane %v954, 1
      %v1164 = vsel %vm1144, %v1159, %v1163
      %v1165 = vrot.slane %v955, 1
      %v1166 = vsel %vm1144, %v1161, %v1165
      %v1167 = vrot.slane %v956, 1
      %v1168 = vsel %vm1144, %v1163, %v1167
      %v1169 = vrot.slane %v957, 1
      %v1170 = vsel %vm1144, %v1165, %v1169
      %v1171 = vrot.slane %v958, 1
      %v1172 = vsel %vm1144, %v1167, %v1171
      %v1173 = vrot.slane %v959, 1
      %v1174 = vsel %vm1144, %v1169, %v1173
      %v1175 = vrot.slane %v960, 1
      %v1176 = vsel %vm1144, %v1171, %v1175
      %v1177 = vrot.slane %v961, 1
      %v1178 = vsel %vm1144, %v1173, %v1177
      %v1179 = vrot.slane %v962, 1
      %v1180 = vsel %vm1144, %v1175, %v1179
      %v1181 = vrot.slane %v963, 1
      %v1182 = vsel %vm1144, %v1177, %v1181
      %v1183 = vrot.slane %v964, 1
      %v1184 = vsel %vm1144, %v1179, %v1183
      %v1185 = vrot.slane %v965, 1
      %v1186 = vsel %vm1144, %v1181, %v1185
      %v1187 = vrot.slane %v966, 1
      %v1188 = vsel %vm1144, %v1183, %v1187
      %v1189 = vrot.slane %v967, 1
      %v1190 = vsel %vm1144, %v1185, %v1189
      %v1191 = vrot.slane %v968, 1
      %v1192 = vsel %vm1144, %v1187, %v1191
      %v1193 = vrot.slane %v969, 1
      %v1194 = vsel %vm1144, %v1189, %v1193
      %v1195 = vrot.slane %v970, 1
      %v1196 = vsel %vm1144, %v1191, %v1195
      %v1197 = vrot.slane %v971, 1
      %v1198 = vsel %vm1144, %v1193, %v1197
      %v1199 = vrot.slane %v972, 1
      %v1200 = vsel %vm1144, %v1195, %v1199
      %v1201 = vrot.slane %v973, 1
      %v1202 = vsel %vm1144, %v1197, %v1201
      %v1203 = vrot.slane %v974, 1
      %v1204 = vsel %vm1144, %v1199, %v1203
      %v1205 = vrot.slane %v975, 1
      %v1206 = vsel %vm1144, %v1201, %v1205
      %v1207 = vrot.slane %v976, 1
      %v1208 = vsel %vm1144, %v1203, %v1207
      %v1209 = vrot.slane %v977, 1
      %v1210 = vsel %vm1144, %v1205, %v1209
      %v1211 = vrot.slane %v978, 1
      %v1212 = vsel %vm1144, %v1207, %v1211
      %v1213 = vrot.slane %v979, 1
      %v1214 = vsel %vm1144, %v1209, %v1213
      %v1215 = vrot.slane %v980, 1
      %v1216 = vsel %vm1144, %v1211, %v1215
      %v1217 = vrot.slane %v981, 1
      %v1218 = vsel %vm1144, %v1213, %v1217
      %v1219 = vrot.slane %v982, 1
      %v1220 = vsel %vm1144, %v1215, %v1219
      %v1221 = vrot.slane %v983, 1
      %v1222 = vsel %vm1144, %v1217, %v1221
      %v1223 = vrot.slane %v984, 1
      %v1224 = vsel %vm1144, %v1219, %v1223
      %v1225 = vrot.slane %v985, 1
      %v1226 = vsel %vm1144, %v1221, %v1225
      %v1227 = vrot.slane %v986, 1
      %v1228 = vsel %vm1144, %v1223, %v1227
      %v1229 = vrot.slane %v987, 1
      %v1230 = vsel %vm1144, %v1225, %v1229
      %v1231 = vrot.slane %v988, 1
      %v1232 = vsel %vm1144, %v1227, %v1231
      %v1233 = vrot.slane %v989, 1
      %v1234 = vsel %vm1144, %v1229, %v1233
      %v1235 = vrot.slane %v990, 1
      %v1236 = vsel %vm1144, %v1231, %v1235
      %v1237 = vrot.slane %v991, 1
      %v1238 = vsel %vm1144, %v1233, %v1237
      %v1239 = vrot.slane %v992, 1
      %v1240 = vsel %vm1144, %v1235, %v1239
      %v1241 = vrot.slane %v993, 1
      %v1242 = vsel %vm1144, %v1237, %v1241
      %v1243 = vrot.slane %v994, 1
      %v1244 = vsel %vm1144, %v1239, %v1243
      %v1245 = vrot.slane %v995, 1
      %v1246 = vsel %vm1144, %v1241, %v1245
      %v1247 = vrot.slane %v996, 1
      %v1248 = vsel %vm1144, %v1243, %v1247
      %v1249 = vrot.slane %v997, 1
      %v1250 = vsel %vm1144, %v1245, %v1249
      %v1251 = vrot.slane %v998, 1
      %v1252 = vsel %vm1144, %v1247, %v1251
      %v1253 = vrot.slane %v999, 1
      %v1254 = vsel %vm1144, %v1249, %v1253
      %v1255 = vrot.slane %v1000, 1
      %v1256 = vsel %vm1144, %v1251, %v1255
      %v1257 = vrot.slane %v1001, 1
      %v1258 = vsel %vm1144, %v1253, %v1257
      %v1259 = vrot.slane %v1002, 1
      %v1260 = vsel %vm1144, %v1255, %v1259
      %v1261 = vrot.slane %v1003, 1
      %v1262 = vsel %vm1144, %v1257, %v1261
      %v1263 = vrot.slane %v1004, 1
      %v1264 = vsel %vm1144, %v1259, %v1263
      %v1265 = vrot.slane %v1005, 1
      %v1266 = vsel %vm1144, %v1261, %v1265
      %v1267 = vrot.slane %v1006, 1
      %v1268 = vsel %vm1144, %v1263, %v1267
      %v1269 = vrot.slane %v1007, 1
      %v1270 = vsel %vm1144, %v1265, %v1269
      %v1271 = vrot.slane %v1008, 1
      %v1272 = vsel %vm1144, %v1267, %v1271
      %v1273 = vrot.slane %v1009, 1
      %v1274 = vsel %vm1144, %v1269, %v1273
      %v1275 = vrot.slane %v1010, 1
      %v1276 = vsel %vm1144, %v1271, %v1275
      %v1277 = vrot.slane %v1011, 1
      %v1278 = vsel %vm1144, %v1273, %v1277
      %v1279 = vrot.slane %v1012, 1
      %v1280 = vsel %vm1144, %v1275, %v1279
      %v1281 = vrot.slane %v1013, 1
      %v1282 = vsel %vm1144, %v1277, %v1281
      %v1283 = vrot.slane %v1014, 1
      %v1284 = vsel %vm1144, %v1279, %v1283
      %v1285 = vrot.slane %v1015, 1
      %v1286 = vsel %vm1144, %v1281, %v1285
      %v1287 = vrot.slane %v1016, 1
      %v1288 = vsel %vm1144, %v1283, %v1287
      %v1289 = vrot.slane %v1017, 1
      %v1290 = vsel %vm1144, %v1285, %v1289
      %v1291 = vrot.slane %v1018, 1
      %v1292 = vsel %vm1144, %v1287, %v1291
      %v1293 = vrot.slane %v1019, 1
      %v1294 = vsel %vm1144, %v1289, %v1293
      %v1295 = vrot.slane %v1020, 1
      %v1296 = vsel %vm1144, %v1291, %v1295
      %v1297 = vrot.slane %v1021, 1
      %v1298 = vsel %vm1144, %v1293, %v1297
      %v1299 = vrot.slane %v1022, 1
      %v1300 = vsel %vm1144, %v1295, %v1299
      %v1301 = vrot.slane %v1023, 1
      %v1302 = vsel %vm1144, %v1297, %v1301
      %v1303 = vrot.slane %v1024, 1
      %v1304 = vsel %vm1144, %v1299, %v1303
      %v1305 = vrot.slane %v1025, 1
      %v1306 = vsel %vm1144, %v1301, %v1305
      %v1307 = vrot.slane %v1026, 1
      %v1308 = vsel %vm1144, %v1303, %v1307
      %v1309 = vrot.slane %v1027, 1
      %v1310 = vsel %vm1144, %v1305, %v1309
      %v1311 = vrot.slane %v1028, 1
      %v1312 = vsel %vm1144, %v1307, %v1311
      %v1313 = vrot.slane %v1029, 1
      %v1314 = vsel %vm1144, %v1309, %v1313
      %v1315 = vrot.slane %v1030, 1
      %v1316 = vsel %vm1144, %v1311, %v1315
      %v1317 = vrot.slane %v1031, 1
      %v1318 = vsel %vm1144, %v1313, %v1317
      %v1319 = vrot.slane %v1032, 1
      %v1320 = vsel %vm1144, %v1315, %v1319
      %v1321 = vrot.slane %v1033, 1
      %v1322 = vsel %vm1144, %v1317, %v1321
      %v1323 = vrot.slane %v1034, 1
      %v1324 = vsel %vm1144, %v1319, %v1323
      %v1325 = vrot.slane %v1035, 1
      %v1326 = vsel %vm1144, %v1321, %v1325
      %v1327 = vrot.slane %v1036, 1
      %v1328 = vsel %vm1144, %v1323, %v1327
      %v1329 = vrot.slane %v1037, 1
      %v1330 = vsel %vm1144, %v1325, %v1329
      %v1331 = vrot.slane %v1038, 1
      %v1332 = vsel %vm1144, %v1327, %v1331
      %v1333 = vrot.slane %v1039, 1
      %v1334 = vsel %vm1144, %v1329, %v1333
      %v1335 = vrot.slane %v1040, 1
      %v1336 = vsel %vm1144, %v1331, %v1335
      %v1337 = vrot.slane %v1041, 1
      %v1338 = vsel %vm1144, %v1333, %v1337
      %v1339 = vrot.slane %v1042, 1
      %v1340 = vsel %vm1144, %v1335, %v1339
      %v1341 = vrot.slane %v1043, 1
      %v1342 = vsel %vm1144, %v1337, %v1341
      %1443 = vst [vmem:[#allocation2] sm:$0xff] %v1147
      %1444 = vst [vmem:[#allocation2 + $0x8] sm:$0xff] %v1150
      %1445 = vst [vmem:[#allocation2 + $0x10] sm:$0xff] %v1152
      %1446 = vst [vmem:[#allocation2 + $0x18] sm:$0xff] %v1154
      %1447 = vst [vmem:[#allocation2 + $0x20] sm:$0xff] %v1156
      %1448 = vst [vmem:[#allocation2 + $0x28] sm:$0xff] %v1158
      %1449 = vst [vmem:[#allocation2 + $0x30] sm:$0xff] %v1160
      %1450 = vst [vmem:[#allocation2 + $0x38] sm:$0xff] %v1162
      %1451 = vst [vmem:[#allocation2 + $0x40] sm:$0xff] %v1164
      %1452 = vst [vmem:[#allocation2 + $0x48] sm:$0xff] %v1166
      %1453 = vst [vmem:[#allocation2 + $0x50] sm:$0xff] %v1168
      %1454 = vst [vmem:[#allocation2 + $0x58] sm:$0xff] %v1170
      %1455 = vst [vmem:[#allocation2 + $0x60] sm:$0xff] %v1172
      %1456 = vst [vmem:[#allocation2 + $0x68] sm:$0xff] %v1174
      %1457 = vst [vmem:[#allocation2 + $0x70] sm:$0xff] %v1176
      %1458 = vst [vmem:[#allocation2 + $0x78] sm:$0xff] %v1178
      %1459 = vst [vmem:[#allocation2 + $0x80] sm:$0xff] %v1180
      %1460 = vst [vmem:[#allocation2 + $0x88] sm:$0xff] %v1182
      %1461 = vst [vmem:[#allocation2 + $0x90] sm:$0xff] %v1184
      %1462 = vst [vmem:[#allocation2 + $0x98] sm:$0xff] %v1186
      %1463 = vst [vmem:[#allocation2 + $0xa0] sm:$0xff] %v1188
      %1464 = vst [vmem:[#allocation2 + $0xa8] sm:$0xff] %v1190
      %1465 = vst [vmem:[#allocation2 + $0xb0] sm:$0xff] %v1192
      %1466 = vst [vmem:[#allocation2 + $0xb8] sm:$0xff] %v1194
      %1467 = vst [vmem:[#allocation2 + $0xc0] sm:$0xff] %v1196
      %1468 = vst [vmem:[#allocation2 + $0xc8] sm:$0xff] %v1198
      %1469 = vst [vmem:[#allocation2 + $0xd0] sm:$0xff] %v1200
      %1470 = vst [vmem:[#allocation2 + $0xd8] sm:$0xff] %v1202
      %1471 = vst [vmem:[#allocation2 + $0xe0] sm:$0xff] %v1204
      %1472 = vst [vmem:[#allocation2 + $0xe8] sm:$0xff] %v1206
      %1473 = vst [vmem:[#allocation2 + $0xf0] sm:$0xff] %v1208
      %1474 = vst [vmem:[#allocation2 + $0xf8] sm:$0xff] %v1210
      %1475 = vst [vmem:[#allocation2 + $0x100] sm:$0xff] %v1212
      %1476 = vst [vmem:[#allocation2 + $0x108] sm:$0xff] %v1214
      %1477 = vst [vmem:[#allocation2 + $0x110] sm:$0xff] %v1216
      %1478 = vst [vmem:[#allocation2 + $0x118] sm:$0xff] %v1218
      %1479 = vst [vmem:[#allocation2 + $0x120] sm:$0xff] %v1220
      %1480 = vst [vmem:[#allocation2 + $0x128] sm:$0xff] %v1222
      %1481 = vst [vmem:[#allocation2 + $0x130] sm:$0xff] %v1224
      %1482 = vst [vmem:[#allocation2 + $0x138] sm:$0xff] %v1226
      %1483 = vst [vmem:[#allocation2 + $0x140] sm:$0xff] %v1228
      %1484 = vst [vmem:[#allocation2 + $0x148] sm:$0xff] %v1230
      %1485 = vst [vmem:[#allocation2 + $0x150] sm:$0xff] %v1232
      %1486 = vst [vmem:[#allocation2 + $0x158] sm:$0xff] %v1234
      %1487 = vst [vmem:[#allocation2 + $0x160] sm:$0xff] %v1236
      %1488 = vst [vmem:[#allocation2 + $0x168] sm:$0xff] %v1238
      %1489 = vst [vmem:[#allocation2 + $0x170] sm:$0xff] %v1240
      %1490 = vst [vmem:[#allocation2 + $0x178] sm:$0xff] %v1242
      %1491 = vst [vmem:[#allocation2 + $0x180] sm:$0xff] %v1244
      %1492 = vst [vmem:[#allocation2 + $0x188] sm:$0xff] %v1246
      %1493 = vst [vmem:[#allocation2 + $0x190] sm:$0xff] %v1248
      %1494 = vst [vmem:[#allocation2 + $0x198] sm:$0xff] %v1250
      %1495 = vst [vmem:[#allocation2 + $0x1a0] sm:$0xff] %v1252
      %1496 = vst [vmem:[#allocation2 + $0x1a8] sm:$0xff] %v1254
      %1497 = vst [vmem:[#allocation2 + $0x1b0] sm:$0xff] %v1256
      %1498 = vst [vmem:[#allocation2 + $0x1b8] sm:$0xff] %v1258
      %1499 = vst [vmem:[#allocation2 + $0x1c0] sm:$0xff] %v1260
      %1500 = vst [vmem:[#allocation2 + $0x1c8] sm:$0xff] %v1262
      %1501 = vst [vmem:[#allocation2 + $0x1d0] sm:$0xff] %v1264
      %1502 = vst [vmem:[#allocation2 + $0x1d8] sm:$0xff] %v1266
      %1503 = vst [vmem:[#allocation2 + $0x1e0] sm:$0xff] %v1268
      %1504 = vst [vmem:[#allocation2 + $0x1e8] sm:$0xff] %v1270
      %1505 = vst [vmem:[#allocation2 + $0x1f0] sm:$0xff] %v1272
      %1506 = vst [vmem:[#allocation2 + $0x1f8] sm:$0xff] %v1274
      %1507 = vst [vmem:[#allocation2 + $0x200] sm:$0xff] %v1276
      %1508 = vst [vmem:[#allocation2 + $0x208] sm:$0xff] %v1278
      %1509 = vst [vmem:[#allocation2 + $0x210] sm:$0xff] %v1280
      %1510 = vst [vmem:[#allocation2 + $0x218] sm:$0xff] %v1282
      %1511 = vst [vmem:[#allocation2 + $0x220] sm:$0xff] %v1284
      %1512 = vst [vmem:[#allocation2 + $0x228] sm:$0xff] %v1286
      %1513 = vst [vmem:[#allocation2 + $0x230] sm:$0xff] %v1288
      %1514 = vst [vmem:[#allocation2 + $0x238] sm:$0xff] %v1290
      %1515 = vst [vmem:[#allocation2 + $0x240] sm:$0xff] %v1292
      %1516 = vst [vmem:[#allocation2 + $0x248] sm:$0xff] %v1294
      %1517 = vst [vmem:[#allocation2 + $0x250] sm:$0xff] %v1296
      %1518 = vst [vmem:[#allocation2 + $0x258] sm:$0xff] %v1298
      %1519 = vst [vmem:[#allocation2 + $0x260] sm:$0xff] %v1300
      %1520 = vst [vmem:[#allocation2 + $0x268] sm:$0xff] %v1302
      %1521 = vst [vmem:[#allocation2 + $0x270] sm:$0xff] %v1304
      %1522 = vst [vmem:[#allocation2 + $0x278] sm:$0xff] %v1306
      %1523 = vst [vmem:[#allocation2 + $0x280] sm:$0xff] %v1308
      %1524 = vst [vmem:[#allocation2 + $0x288] sm:$0xff] %v1310
      %1525 = vst [vmem:[#allocation2 + $0x290] sm:$0xff] %v1312
      %1526 = vst [vmem:[#allocation2 + $0x298] sm:$0xff] %v1314
      %1527 = vst [vmem:[#allocation2 + $0x2a0] sm:$0xff] %v1316
      %1528 = vst [vmem:[#allocation2 + $0x2a8] sm:$0xff] %v1318
      %1529 = vst [vmem:[#allocation2 + $0x2b0] sm:$0xff] %v1320
      %1530 = vst [vmem:[#allocation2 + $0x2b8] sm:$0xff] %v1322
      %1531 = vst [vmem:[#allocation2 + $0x2c0] sm:$0xff] %v1324
      %1532 = vst [vmem:[#allocation2 + $0x2c8] sm:$0xff] %v1326
      %1533 = vst [vmem:[#allocation2 + $0x2d0] sm:$0xff] %v1328
      %1534 = vst [vmem:[#allocation2 + $0x2d8] sm:$0xff] %v1330
      %1535 = vst [vmem:[#allocation2 + $0x2e0] sm:$0xff] %v1332
      %1536 = vst [vmem:[#allocation2 + $0x2e8] sm:$0xff] %v1334
      %1537 = vst [vmem:[#allocation2 + $0x2f0] sm:$0xff] %v1336
      %1538 = vst [vmem:[#allocation2 + $0x2f8] sm:$0xff] %v1338
      %1539 = vst [vmem:[#allocation2 + $0x300] sm:$0xff] %v1340
      %1540 = vst [vmem:[#allocation2 + $0x308] sm:$0xff] %v1342
      %1541 = vst [vmem:[#allocation2 + $0x310] sm:$0x7f] %v1339
      %1542 = vst [vmem:[#allocation2 + $0x318] sm:$0x7f] %v1341
      %v1543 = vlaneseq
      %vm1544 = vcmp.ge.s32.totalorder %v1543, 0
      %vm1545 = vcmp.lt.s32.totalorder %v1543, 256
      %vm1546 = vmand %vm1544, %vm1545
      %s1547 = scalar_lea.vmem [#allocation2], 791
      %1548 = vst.msk [vmem:[%s1547] ss:$8 sm:$0x3] %vm1546, 0.0
      %1549 = vst.msk [vmem:[%s1547] ss:$8 sm:$0x0] %vm1546, 0.0
      %v1550 = vld [vmem:[#allocation2] sm:$0xff]
      %v1551 = vld [vmem:[#allocation2 + $0x8] sm:$0xff]
      %v1552 = vld [vmem:[#allocation2 + $0x10] sm:$0xff]
      %v1553 = vld [vmem:[#allocation2 + $0x18] sm:$0xff]
      %v1554 = vld [vmem:[#allocation2 + $0x20] sm:$0xff]
      %v1555 = vld [vmem:[#allocation2 + $0x28] sm:$0xff]
      %v1556 = vld [vmem:[#allocation2 + $0x30] sm:$0xff]
      %v1557 = vld [vmem:[#allocation2 + $0x38] sm:$0xff]
      %v1558 = vld [vmem:[#allocation2 + $0x40] sm:$0xff]
      %v1559 = vld [vmem:[#allocation2 + $0x48] sm:$0xff]
      %v1560 = vld [vmem:[#allocation2 + $0x50] sm:$0xff]
      %v1561 = vld [vmem:[#allocation2 + $0x58] sm:$0xff]
      %v1562 = vld [vmem:[#allocation2 + $0x60] sm:$0xff]
      %v1563 = vld [vmem:[#allocation2 + $0x68] sm:$0xff]
      %v1564 = vld [vmem:[#allocation2 + $0x70] sm:$0xff]
      %v1565 = vld [vmem:[#allocation2 + $0x78] sm:$0xff]
      %v1566 = vld [vmem:[#allocation2 + $0x80] sm:$0xff]
      %v1567 = vld [vmem:[#allocation2 + $0x88] sm:$0xff]
      %v1568 = vld [vmem:[#allocation2 + $0x90] sm:$0xff]
      %v1569 = vld [vmem:[#allocation2 + $0x98] sm:$0xff]
      %v1570 = vld [vmem:[#allocation2 + $0xa0] sm:$0xff]
      %v1571 = vld [vmem:[#allocation2 + $0xa8] sm:$0xff]
      %v1572 = vld [vmem:[#allocation2 + $0xb0] sm:$0xff]
      %v1573 = vld [vmem:[#allocation2 + $0xb8] sm:$0xff]
      %v1574 = vld [vmem:[#allocation2 + $0xc0] sm:$0xff]
      %v1575 = vld [vmem:[#allocation2 + $0xc8] sm:$0xff]
      %v1576 = vld [vmem:[#allocation2 + $0xd0] sm:$0xff]
      %v1577 = vld [vmem:[#allocation2 + $0xd8] sm:$0xff]
      %v1578 = vld [vmem:[#allocation2 + $0xe0] sm:$0xff]
      %v1579 = vld [vmem:[#allocation2 + $0xe8] sm:$0xff]
      %v1580 = vld [vmem:[#allocation2 + $0xf0] sm:$0xff]
      %v1581 = vld [vmem:[#allocation2 + $0xf8] sm:$0xff]
      %v1582 = vld [vmem:[#allocation2 + $0x100] sm:$0xff]
      %v1583 = vld [vmem:[#allocation2 + $0x108] sm:$0xff]
      %v1584 = vld [vmem:[#allocation2 + $0x110] sm:$0xff]
      %v1585 = vld [vmem:[#allocation2 + $0x118] sm:$0xff]
      %v1586 = vld [vmem:[#allocation2 + $0x120] sm:$0xff]
      %v1587 = vld [vmem:[#allocation2 + $0x128] sm:$0xff]
      %v1588 = vld [vmem:[#allocation2 + $0x130] sm:$0xff]
      %v1589 = vld [vmem:[#allocation2 + $0x138] sm:$0xff]
      %v1590 = vld [vmem:[#allocation2 + $0x140] sm:$0xff]
      %v1591 = vld [vmem:[#allocation2 + $0x148] sm:$0xff]
      %v1592 = vld [vmem:[#allocation2 + $0x150] sm:$0xff]
      %v1593 = vld [vmem:[#allocation2 + $0x158] sm:$0xff]
      %v1594 = vld [vmem:[#allocation2 + $0x160] sm:$0xff]
      %v1595 = vld [vmem:[#allocation2 + $0x168] sm:$0xff]
      %v1596 = vld [vmem:[#allocation2 + $0x170] sm:$0xff]
      %v1597 = vld [vmem:[#allocation2 + $0x178] sm:$0xff]
      %v1598 = vld [vmem:[#allocation2 + $0x180] sm:$0xff]
      %v1599 = vld [vmem:[#allocation2 + $0x188] sm:$0xff]
      %v1600 = vld [vmem:[#allocation2 + $0x190] sm:$0xff]
      %v1601 = vld [vmem:[#allocation2 + $0x198] sm:$0xff]
      %v1602 = vld [vmem:[#allocation2 + $0x1a0] sm:$0xff]
      %v1603 = vld [vmem:[#allocation2 + $0x1a8] sm:$0xff]
      %v1604 = vld [vmem:[#allocation2 + $0x1b0] sm:$0xff]
      %v1605 = vld [vmem:[#allocation2 + $0x1b8] sm:$0xff]
      %v1606 = vld [vmem:[#allocation2 + $0x1c0] sm:$0xff]
      %v1607 = vld [vmem:[#allocation2 + $0x1c8] sm:$0xff]
      %v1608 = vld [vmem:[#allocation2 + $0x1d0] sm:$0xff]
      %v1609 = vld [vmem:[#allocation2 + $0x1d8] sm:$0xff]
      %v1610 = vld [vmem:[#allocation2 + $0x1e0] sm:$0xff]
      %v1611 = vld [vmem:[#allocation2 + $0x1e8] sm:$0xff]
      %v1612 = vld [vmem:[#allocation2 + $0x1f0] sm:$0xff]
      %v1613 = vld [vmem:[#allocation2 + $0x1f8] sm:$0xff]
      %v1614 = vld [vmem:[#allocation2 + $0x200] sm:$0xff]
      %v1615 = vld [vmem:[#allocation2 + $0x208] sm:$0xff]
      %v1616 = vld [vmem:[#allocation2 + $0x210] sm:$0xff]
      %v1617 = vld [vmem:[#allocation2 + $0x218] sm:$0xff]
      %v1618 = vld [vmem:[#allocation2 + $0x220] sm:$0xff]
      %v1619 = vld [vmem:[#allocation2 + $0x228] sm:$0xff]
      %v1620 = vld [vmem:[#allocation2 + $0x230] sm:$0xff]
      %v1621 = vld [vmem:[#allocation2 + $0x238] sm:$0xff]
      %v1622 = vld [vmem:[#allocation2 + $0x240] sm:$0xff]
      %v1623 = vld [vmem:[#allocation2 + $0x248] sm:$0xff]
      %v1624 = vld [vmem:[#allocation2 + $0x250] sm:$0xff]
      %v1625 = vld [vmem:[#allocation2 + $0x258] sm:$0xff]
      %v1626 = vld [vmem:[#allocation2 + $0x260] sm:$0xff]
      %v1627 = vld [vmem:[#allocation2 + $0x268] sm:$0xff]
      %v1628 = vld [vmem:[#allocation2 + $0x270] sm:$0xff]
      %v1629 = vld [vmem:[#allocation2 + $0x278] sm:$0xff]
      %v1630 = vld [vmem:[#allocation2 + $0x280] sm:$0xff]
      %v1631 = vld [vmem:[#allocation2 + $0x288] sm:$0xff]
      %v1632 = vld [vmem:[#allocation2 + $0x290] sm:$0xff]
      %v1633 = vld [vmem:[#allocation2 + $0x298] sm:$0xff]
      %v1634 = vld [vmem:[#allocation2 + $0x2a0] sm:$0xff]
      %v1635 = vld [vmem:[#allocation2 + $0x2a8] sm:$0xff]
      %v1636 = vld [vmem:[#allocation2 + $0x2b0] sm:$0xff]
      %v1637 = vld [vmem:[#allocation2 + $0x2b8] sm:$0xff]
      %v1638 = vld [vmem:[#allocation2 + $0x2c0] sm:$0xff]
      %v1639 = vld [vmem:[#allocation2 + $0x2c8] sm:$0xff]
      %v1640 = vld [vmem:[#allocation2 + $0x2d0] sm:$0xff]
      %v1641 = vld [vmem:[#allocation2 + $0x2d8] sm:$0xff]
      %v1642 = vld [vmem:[#allocation2 + $0x2e0] sm:$0xff]
      %v1643 = vld [vmem:[#allocation2 + $0x2e8] sm:$0xff]
      %v1644 = vld [vmem:[#allocation2 + $0x2f0] sm:$0xff]
      %v1645 = vld [vmem:[#allocation2 + $0x2f8] sm:$0xff]
      %v1646 = vld [vmem:[#allocation2 + $0x300] sm:$0xff]
      %v1647 = vld [vmem:[#allocation2 + $0x308] sm:$0xff]
      %v1648 = vld [vmem:[#allocation2 + $0x310] sm:$0xff]
      %v1649 = vld [vmem:[#allocation2 + $0x318] sm:$0xff]
      %v1650 = vpack.c.bf16 %v347, %v345
      %v1651 = vpack.c.bf16 %v348, %v346
      %v1652 = vpack.c.bf16 %v351, %v349
      %v1653 = vpack.c.bf16 %v352, %v350
      %v1654 = vpack.c.bf16 %v355, %v353
      %v1655 = vpack.c.bf16 %v356, %v354
      %v1656 = vpack.c.bf16 %v359, %v357
      %v1657 = vpack.c.bf16 %v360, %v358
      %v1658 = vpack.c.bf16 %v363, %v361
      %v1659 = vpack.c.bf16 %v364, %v362
      %v1660 = vpack.c.bf16 %v367, %v365
      %v1661 = vpack.c.bf16 %v368, %v366
      %v1662 = vpack.c.bf16 %v371, %v369
      %v1663 = vpack.c.bf16 %v372, %v370
      %v1664 = vpack.c.bf16 %v375, %v373
      %v1665 = vpack.c.bf16 %v376, %v374
      %v1666 = vpack.c.bf16 %v379, %v377
      %v1667 = vpack.c.bf16 %v380, %v378
      %v1668 = vpack.c.bf16 %v383, %v381
      %v1669 = vpack.c.bf16 %v384, %v382
      %v1670 = vpack.c.bf16 %v387, %v385
      %v1671 = vpack.c.bf16 %v388, %v386
      %v1672 = vpack.c.bf16 %v391, %v389
      %v1673 = vpack.c.bf16 %v392, %v390
      %v1674 = vpack.c.bf16 %v395, %v393
      %v1675 = vpack.c.bf16 %v396, %v394
      %v1676 = vpack.c.bf16 %v399, %v397
      %v1677 = vpack.c.bf16 %v400, %v398
      %v1678 = vpack.c.bf16 %v403, %v401
      %v1679 = vpack.c.bf16 %v404, %v402
      %v1680 = vpack.c.bf16 %v407, %v405
      %v1681 = vpack.c.bf16 %v408, %v406
      %v1682 = vpack.c.bf16 %v411, %v409
      %v1683 = vpack.c.bf16 %v412, %v410
      %v1684 = vpack.c.bf16 %v415, %v413
      %v1685 = vpack.c.bf16 %v416, %v414
      %v1686 = vpack.c.bf16 %v419, %v417
      %v1687 = vpack.c.bf16 %v420, %v418
      %v1688 = vpack.c.bf16 %v423, %v421
      %v1689 = vpack.c.bf16 %v424, %v422
      %v1690 = vpack.c.bf16 %v427, %v425
      %v1691 = vpack.c.bf16 %v428, %v426
      %v1692 = vpack.c.bf16 %v431, %v429
      %v1693 = vpack.c.bf16 %v432, %v430
      %v1694 = vpack.c.bf16 %v435, %v433
      %v1695 = vpack.c.bf16 %v436, %v434
      %v1696 = vpack.c.bf16 %v439, %v437
      %v1697 = vpack.c.bf16 %v440, %v438
      %v1698 = vpack.c.bf16 %v443, %v441
      %v1699 = vpack.c.bf16 %v444, %v442
      %v1700 = vld [vmem:[%s1] sm:$0xf]
      %v1701 = vld [vmem:[%s1 + $0x4] sm:$0xf]
      %v1702 = vld [vmem:[%s1 + $0x8] sm:$0xf]
      %v1703 = vld [vmem:[%s1 + $0xc] sm:$0xf]
      %v1704 = vld [vmem:[%s1 + $0x10] sm:$0xf]
      %v1705 = vld [vmem:[%s1 + $0x14] sm:$0xf]
      %v1706 = vld [vmem:[%s1 + $0x18] sm:$0xf]
      %v1707 = vld [vmem:[%s1 + $0x1c] sm:$0xf]
      %v1708 = vld [vmem:[%s1 + $0x20] sm:$0xf]
      %v1709 = vld [vmem:[%s1 + $0x24] sm:$0xf]
      %v1710 = vld [vmem:[%s1 + $0x28] sm:$0xf]
      %v1711 = vld [vmem:[%s1 + $0x2c] sm:$0xf]
      %v1712 = vld [vmem:[%s1 + $0x30] sm:$0xf]
      %v1713 = vld [vmem:[%s1 + $0x34] sm:$0xf]
      %v1714 = vld [vmem:[%s1 + $0x38] sm:$0xf]
      %v1715 = vld [vmem:[%s1 + $0x3c] sm:$0xf]
      %v1716 = vld [vmem:[%s1 + $0x40] sm:$0xf]
      %v1717 = vld [vmem:[%s1 + $0x44] sm:$0xf]
      %v1718 = vld [vmem:[%s1 + $0x48] sm:$0xf]
      %v1719 = vld [vmem:[%s1 + $0x4c] sm:$0xf]
      %v1720 = vld [vmem:[%s1 + $0x50] sm:$0xf]
      %v1721 = vld [vmem:[%s1 + $0x54] sm:$0xf]
      %v1722 = vld [vmem:[%s1 + $0x58] sm:$0xf]
      %v1723 = vld [vmem:[%s1 + $0x5c] sm:$0xf]
      %v1724 = vld [vmem:[%s1 + $0x60] sm:$0xf]
      %v1725 = vld [vmem:[%s1 + $0x64] sm:$0xf]
      %v1726 = vld [vmem:[%s1 + $0x68] sm:$0xf]
      %v1727 = vld [vmem:[%s1 + $0x6c] sm:$0xf]
      %v1728 = vld [vmem:[%s1 + $0x70] sm:$0xf]
      %v1729 = vld [vmem:[%s1 + $0x74] sm:$0xf]
      %v1730 = vld [vmem:[%s1 + $0x78] sm:$0xf]
      %v1731 = vld [vmem:[%s1 + $0x7c] sm:$0xf]
      %v1732 = vld [vmem:[%s2] sm:$0x1]
      %v1734 = vlaneseq
      %v1735 = vshrl.u32 %v1734, 7
      %v1736 = vsub.s32 0, %v1735
      %v1737 = vrot.slane %v1732, %v1736
      %v1771 = vunpack.c.l.b16 %v1700
      %v1772 = vunpack.c.l.b16 %v1701
      %v1773 = vunpack.c.l.b16 %v1702
      %v1774 = vunpack.c.l.b16 %v1703
      %v1775 = vunpack.c.l.b16 %v1704
      %v1776 = vunpack.c.l.b16 %v1705
      %v1777 = vunpack.c.l.b16 %v1706
      %v1778 = vunpack.c.l.b16 %v1707
      %v1779 = vunpack.c.l.b16 %v1708
      %v1780 = vunpack.c.l.b16 %v1709
      %v1781 = vunpack.c.l.b16 %v1710
      %v1782 = vunpack.c.l.b16 %v1711
      %v1783 = vunpack.c.l.b16 %v1712
      %v1784 = vunpack.c.l.b16 %v1713
      %v1785 = vunpack.c.l.b16 %v1714
      %v1786 = vunpack.c.l.b16 %v1715
      %v1787 = vunpack.c.l.b16 %v1716
      %v1788 = vunpack.c.l.b16 %v1717
      %v1789 = vunpack.c.l.b16 %v1718
      %v1790 = vunpack.c.l.b16 %v1719
      %v1791 = vunpack.c.l.b16 %v1720
      %v1792 = vunpack.c.l.b16 %v1721
      %v1793 = vunpack.c.l.b16 %v1722
      %v1794 = vunpack.c.l.b16 %v1723
      %v1795 = vunpack.c.l.b16 %v1724
      %v1796 = vunpack.c.l.b16 %v1725
      %v1797 = vunpack.c.l.b16 %v1726
      %v1798 = vunpack.c.l.b16 %v1727
      %v1799 = vunpack.c.l.b16 %v1728
      %v1800 = vunpack.c.l.b16 %v1729
      %v1801 = vunpack.c.l.b16 %v1730
      %v1802 = vunpack.c.l.b16 %v1731
      %v1803 = vpack.c.b16 %v1772, %v1771
      %v1804 = vpack.c.b16 %v1774, %v1773
      %v1805 = vpack.c.b16 %v1776, %v1775
      %v1806 = vpack.c.b16 %v1778, %v1777
      %v1807 = vpack.c.b16 %v1780, %v1779
      %v1808 = vpack.c.b16 %v1782, %v1781
      %v1809 = vpack.c.b16 %v1784, %v1783
      %v1810 = vpack.c.b16 %v1786, %v1785
      %v1811 = vpack.c.b16 %v1788, %v1787
      %v1812 = vpack.c.b16 %v1790, %v1789
      %v1813 = vpack.c.b16 %v1792, %v1791
      %v1814 = vpack.c.b16 %v1794, %v1793
      %v1815 = vpack.c.b16 %v1796, %v1795
      %v1816 = vpack.c.b16 %v1798, %v1797
      %v1817 = vpack.c.b16 %v1800, %v1799
      %v1818 = vpack.c.b16 %v1802, %v1801
      %1835 = vmatprep.subr.bf16.mxu0 0
      %1836 = vmatpush1.bf16.msra.mxu0 %v1810
      %1837 = vmatprep.subr.bf16.mxu0 0
      %1838 = vmatpush1.bf16.msra.mxu0 %v1809
      %1839 = vmatprep.subr.bf16.mxu0 0
      %1840 = vmatpush1.bf16.msra.mxu0 %v1808
      %1841 = vmatprep.subr.bf16.mxu0 0
      %1842 = vmatpush1.bf16.msra.mxu0 %v1807
      %1843 = vmatprep.subr.bf16.mxu0 0
      %1844 = vmatpush1.bf16.msra.mxu0 %v1806
      %1845 = vmatprep.subr.bf16.mxu0 0
      %1846 = vmatpush1.bf16.msra.mxu0 %v1805
      %1847 = vmatprep.subr.bf16.mxu0 0
      %1848 = vmatpush1.bf16.msra.mxu0 %v1804
      %1849 = vmatprep.subr.bf16.mxu0 0
      %1850 = vmatpush1.bf16.msra.mxu0 %v1803
      %1851 = vmatprep.subr.bf16.mxu0 0
      %1852 = vmatpush2.bf16.msra.mxu0 %v1818
      %1853 = vmatprep.subr.bf16.mxu0 0
      %1854 = vmatpush2.bf16.msra.mxu0 %v1817
      %1855 = vmatprep.subr.bf16.mxu0 0
      %1856 = vmatpush2.bf16.msra.mxu0 %v1816
      %1857 = vmatprep.subr.bf16.mxu0 0
      %1858 = vmatpush2.bf16.msra.mxu0 %v1815
      %1859 = vmatprep.subr.bf16.mxu0 0
      %1860 = vmatpush2.bf16.msra.mxu0 %v1814
      %1861 = vmatprep.subr.bf16.mxu0 0
      %1862 = vmatpush2.bf16.msra.mxu0 %v1813
      %1863 = vmatprep.subr.bf16.mxu0 0
      %1864 = vmatpush2.bf16.msra.mxu0 %v1812
      %1865 = vmatprep.subr.bf16.mxu0 0
      %1866 = vmatpush2.bf16.msra.mxu0 %v1811
      %1867 = vmatprep.mubr.bf16.mxu0 %v1651
      %1868 = vmatmul.mubr.bf16.gmra.mxu0 %v1650
      %v1869 = vpop.f32.mrf.mxu0
      %v1870 = vadd.f32 %v1737, %v1869
      %v1871 = vpop.f32.mrf.mxu0
      %v1872 = vpop.f32.mrf.mxu0
      %v1873 = vadd.f32 %v1737, %v1872
      %v1874 = vpop.f32.mrf.mxu0
      %1875 = vmatprep.mubr.bf16.mxu0 %v1653
      %1876 = vmatmul.mubr.bf16.gmra.mxu0 %v1652
      %v1877 = vpop.f32.mrf.mxu0
      %v1878 = vadd.f32 %v1737, %v1877
      %v1879 = vpop.f32.mrf.mxu0
      %v1880 = vpop.f32.mrf.mxu0
      %v1881 = vadd.f32 %v1737, %v1880
      %v1882 = vpop.f32.mrf.mxu0
      %1883 = vmatprep.mubr.bf16.mxu0 %v1655
      %1884 = vmatmul.mubr.bf16.gmra.mxu0 %v1654
      %v1885 = vpop.f32.mrf.mxu0
      %v1886 = vadd.f32 %v1737, %v1885
      %v1887 = vpop.f32.mrf.mxu0
      %v1888 = vpop.f32.mrf.mxu0
      %v1889 = vadd.f32 %v1737, %v1888
      %v1890 = vpop.f32.mrf.mxu0
      %1891 = vmatprep.mubr.bf16.mxu0 %v1657
      %1892 = vmatmul.mubr.bf16.gmra.mxu0 %v1656
      %v1893 = vpop.f32.mrf.mxu0
      %v1894 = vadd.f32 %v1737, %v1893
      %v1895 = vpop.f32.mrf.mxu0
      %v1896 = vpop.f32.mrf.mxu0
      %v1897 = vadd.f32 %v1737, %v1896
      %v1898 = vpop.f32.mrf.mxu0
      %1899 = vmatprep.mubr.bf16.mxu0 %v1659
      %1900 = vmatmul.mubr.bf16.gmra.mxu0 %v1658
      %v1901 = vpop.f32.mrf.mxu0
      %v1902 = vadd.f32 %v1737, %v1901
      %v1903 = vpop.f32.mrf.mxu0
      %v1904 = vpop.f32.mrf.mxu0
      %v1905 = vadd.f32 %v1737, %v1904
      %v1906 = vpop.f32.mrf.mxu0
      %1907 = vmatprep.mubr.bf16.mxu0 %v1661
      %1908 = vmatmul.mubr.bf16.gmra.mxu0 %v1660
      %v1909 = vpop.f32.mrf.mxu0
      %v1910 = vadd.f32 %v1737, %v1909
      %v1911 = vpop.f32.mrf.mxu0
      %v1912 = vpop.f32.mrf.mxu0
      %v1913 = vadd.f32 %v1737, %v1912
      %v1914 = vpop.f32.mrf.mxu0
      %1915 = vmatprep.mubr.bf16.mxu0 %v1663
      %1916 = vmatmul.mubr.bf16.gmra.mxu0 %v1662
      %v1917 = vpop.f32.mrf.mxu0
      %v1918 = vadd.f32 %v1737, %v1917
      %v1919 = vpop.f32.mrf.mxu0
      %v1920 = vpop.f32.mrf.mxu0
      %v1921 = vadd.f32 %v1737, %v1920
      %v1922 = vpop.f32.mrf.mxu0
      %1923 = vmatprep.mubr.bf16.mxu0 %v1665
      %1924 = vmatmul.mubr.bf16.gmra.mxu0 %v1664
      %v1925 = vpop.f32.mrf.mxu0
      %v1926 = vadd.f32 %v1737, %v1925
      %v1927 = vpop.f32.mrf.mxu0
      %v1928 = vpop.f32.mrf.mxu0
      %v1929 = vadd.f32 %v1737, %v1928
      %v1930 = vpop.f32.mrf.mxu0
      %1931 = vmatprep.mubr.bf16.mxu0 %v1667
      %1932 = vmatmul.mubr.bf16.gmra.mxu0 %v1666
      %v1933 = vpop.f32.mrf.mxu0
      %v1934 = vadd.f32 %v1737, %v1933
      %v1935 = vpop.f32.mrf.mxu0
      %v1936 = vpop.f32.mrf.mxu0
      %v1937 = vadd.f32 %v1737, %v1936
      %v1938 = vpop.f32.mrf.mxu0
      %1939 = vmatprep.mubr.bf16.mxu0 %v1669
      %1940 = vmatmul.mubr.bf16.gmra.mxu0 %v1668
      %v1941 = vpop.f32.mrf.mxu0
      %v1942 = vadd.f32 %v1737, %v1941
      %v1943 = vpop.f32.mrf.mxu0
      %v1944 = vpop.f32.mrf.mxu0
      %v1945 = vadd.f32 %v1737, %v1944
      %v1946 = vpop.f32.mrf.mxu0
      %1947 = vmatprep.mubr.bf16.mxu0 %v1671
      %1948 = vmatmul.mubr.bf16.gmra.mxu0 %v1670
      %v1949 = vpop.f32.mrf.mxu0
      %v1950 = vadd.f32 %v1737, %v1949
      %v1951 = vpop.f32.mrf.mxu0
      %v1952 = vpop.f32.mrf.mxu0
      %v1953 = vadd.f32 %v1737, %v1952
      %v1954 = vpop.f32.mrf.mxu0
      %1955 = vmatprep.mubr.bf16.mxu0 %v1673
      %1956 = vmatmul.mubr.bf16.gmra.mxu0 %v1672
      %v1957 = vpop.f32.mrf.mxu0
      %v1958 = vadd.f32 %v1737, %v1957
      %v1959 = vpop.f32.mrf.mxu0
      %v1960 = vpop.f32.mrf.mxu0
      %v1961 = vadd.f32 %v1737, %v1960
      %v1962 = vpop.f32.mrf.mxu0
      %1963 = vmatprep.mubr.bf16.mxu0 %v1675
      %1964 = vmatmul.mubr.bf16.gmra.mxu0 %v1674
      %v1965 = vpop.f32.mrf.mxu0
      %v1966 = vadd.f32 %v1737, %v1965
      %v1967 = vpop.f32.mrf.mxu0
      %v1968 = vpop.f32.mrf.mxu0
      %v1969 = vadd.f32 %v1737, %v1968
      %v1970 = vpop.f32.mrf.mxu0
      %1971 = vmatprep.mubr.bf16.mxu0 %v1677
      %1972 = vmatmul.mubr.bf16.gmra.mxu0 %v1676
      %v1973 = vpop.f32.mrf.mxu0
      %v1974 = vadd.f32 %v1737, %v1973
      %v1975 = vpop.f32.mrf.mxu0
      %v1976 = vpop.f32.mrf.mxu0
      %v1977 = vadd.f32 %v1737, %v1976
      %v1978 = vpop.f32.mrf.mxu0
      %1979 = vmatprep.mubr.bf16.mxu0 %v1679
      %1980 = vmatmul.mubr.bf16.gmra.mxu0 %v1678
      %v1981 = vpop.f32.mrf.mxu0
      %v1982 = vadd.f32 %v1737, %v1981
      %v1983 = vpop.f32.mrf.mxu0
      %v1984 = vpop.f32.mrf.mxu0
      %v1985 = vadd.f32 %v1737, %v1984
      %v1986 = vpop.f32.mrf.mxu0
      %1987 = vmatprep.mubr.bf16.mxu0 %v1681
      %1988 = vmatmul.mubr.bf16.gmra.mxu0 %v1680
      %v1989 = vpop.f32.mrf.mxu0
      %v1990 = vadd.f32 %v1737, %v1989
      %v1991 = vpop.f32.mrf.mxu0
      %v1992 = vpop.f32.mrf.mxu0
      %v1993 = vadd.f32 %v1737, %v1992
      %v1994 = vpop.f32.mrf.mxu0
      %1995 = vmatprep.mubr.bf16.mxu0 %v1683
      %1996 = vmatmul.mubr.bf16.gmra.mxu0 %v1682
      %v1997 = vpop.f32.mrf.mxu0
      %v1998 = vadd.f32 %v1737, %v1997
      %v1999 = vpop.f32.mrf.mxu0
      %v2000 = vpop.f32.mrf.mxu0
      %v2001 = vadd.f32 %v1737, %v2000
      %v2002 = vpop.f32.mrf.mxu0
      %2003 = vmatprep.mubr.bf16.mxu0 %v1685
      %2004 = vmatmul.mubr.bf16.gmra.mxu0 %v1684
      %v2005 = vpop.f32.mrf.mxu0
      %v2006 = vadd.f32 %v1737, %v2005
      %v2007 = vpop.f32.mrf.mxu0
      %v2008 = vpop.f32.mrf.mxu0
      %v2009 = vadd.f32 %v1737, %v2008
      %v2010 = vpop.f32.mrf.mxu0
      %2011 = vmatprep.mubr.bf16.mxu0 %v1687
      %2012 = vmatmul.mubr.bf16.gmra.mxu0 %v1686
      %v2013 = vpop.f32.mrf.mxu0
      %v2014 = vadd.f32 %v1737, %v2013
      %v2015 = vpop.f32.mrf.mxu0
      %v2016 = vpop.f32.mrf.mxu0
      %v2017 = vadd.f32 %v1737, %v2016
      %v2018 = vpop.f32.mrf.mxu0
      %2019 = vmatprep.mubr.bf16.mxu0 %v1689
      %2020 = vmatmul.mubr.bf16.gmra.mxu0 %v1688
      %v2021 = vpop.f32.mrf.mxu0
      %v2022 = vadd.f32 %v1737, %v2021
      %v2023 = vpop.f32.mrf.mxu0
      %v2024 = vpop.f32.mrf.mxu0
      %v2025 = vadd.f32 %v1737, %v2024
      %v2026 = vpop.f32.mrf.mxu0
      %2027 = vmatprep.mubr.bf16.mxu0 %v1691
      %2028 = vmatmul.mubr.bf16.gmra.mxu0 %v1690
      %v2029 = vpop.f32.mrf.mxu0
      %v2030 = vadd.f32 %v1737, %v2029
      %v2031 = vpop.f32.mrf.mxu0
      %v2032 = vpop.f32.mrf.mxu0
      %v2033 = vadd.f32 %v1737, %v2032
      %v2034 = vpop.f32.mrf.mxu0
      %2035 = vmatprep.mubr.bf16.mxu0 %v1693
      %2036 = vmatmul.mubr.bf16.gmra.mxu0 %v1692
      %v2037 = vpop.f32.mrf.mxu0
      %v2038 = vadd.f32 %v1737, %v2037
      %v2039 = vpop.f32.mrf.mxu0
      %v2040 = vpop.f32.mrf.mxu0
      %v2041 = vadd.f32 %v1737, %v2040
      %v2042 = vpop.f32.mrf.mxu0
      %2043 = vmatprep.mubr.bf16.mxu0 %v1695
      %2044 = vmatmul.mubr.bf16.gmra.mxu0 %v1694
      %v2045 = vpop.f32.mrf.mxu0
      %v2046 = vadd.f32 %v1737, %v2045
      %v2047 = vpop.f32.mrf.mxu0
      %v2048 = vpop.f32.mrf.mxu0
      %v2049 = vadd.f32 %v1737, %v2048
      %v2050 = vpop.f32.mrf.mxu0
      %2051 = vmatprep.mubr.bf16.mxu0 %v1697
      %2052 = vmatmul.mubr.bf16.gmra.mxu0 %v1696
      %v2053 = vpop.f32.mrf.mxu0
      %v2054 = vadd.f32 %v1737, %v2053
      %v2055 = vpop.f32.mrf.mxu0
      %v2056 = vpop.f32.mrf.mxu0
      %v2057 = vadd.f32 %v1737, %v2056
      %v2058 = vpop.f32.mrf.mxu0
      %2059 = vmatprep.mubr.bf16.mxu0 %v1699
      %2060 = vmatmul.mubr.bf16.gmra.mxu0 %v1698
      %v2061 = vpop.f32.mrf.mxu0
      %v2062 = vadd.f32 %v1737, %v2061
      %v2063 = vpop.f32.mrf.mxu0
      %v2064 = vpop.f32.mrf.mxu0
      %v2065 = vadd.f32 %v1737, %v2064
      %v2066 = vpop.f32.mrf.mxu0
      %2067 = vdwg.mxu0
      %v2068 = vmax.f32 %v1870, 0.0
      %v2069 = vmax.f32 %v1873, 0.0
      %v2070 = vmax.f32 %v1878, 0.0
      %v2071 = vmax.f32 %v1881, 0.0
      %v2072 = vmax.f32 %v1886, 0.0
      %v2073 = vmax.f32 %v1889, 0.0
      %v2074 = vmax.f32 %v1894, 0.0
      %v2075 = vmax.f32 %v1897, 0.0
      %v2076 = vmax.f32 %v1902, 0.0
      %v2077 = vmax.f32 %v1905, 0.0
      %v2078 = vmax.f32 %v1910, 0.0
      %v2079 = vmax.f32 %v1913, 0.0
      %v2080 = vmax.f32 %v1918, 0.0
      %v2081 = vmax.f32 %v1921, 0.0
      %v2082 = vmax.f32 %v1926, 0.0
      %v2083 = vmax.f32 %v1929, 0.0
      %v2084 = vmax.f32 %v1934, 0.0
      %v2085 = vmax.f32 %v1937, 0.0
      %v2086 = vmax.f32 %v1942, 0.0
      %v2087 = vmax.f32 %v1945, 0.0
      %v2088 = vmax.f32 %v1950, 0.0
      %v2089 = vmax.f32 %v1953, 0.0
      %v2090 = vmax.f32 %v1958, 0.0
      %v2091 = vmax.f32 %v1961, 0.0
      %v2092 = vmax.f32 %v1966, 0.0
      %v2093 = vmax.f32 %v1969, 0.0
      %v2094 = vmax.f32 %v1974, 0.0
      %v2095 = vmax.f32 %v1977, 0.0
      %v2096 = vmax.f32 %v1982, 0.0
      %v2097 = vmax.f32 %v1985, 0.0
      %v2098 = vmax.f32 %v1990, 0.0
      %v2099 = vmax.f32 %v1993, 0.0
      %v2100 = vmax.f32 %v1998, 0.0
      %v2101 = vmax.f32 %v2001, 0.0
      %v2102 = vmax.f32 %v2006, 0.0
      %v2103 = vmax.f32 %v2009, 0.0
      %v2104 = vmax.f32 %v2014, 0.0
      %v2105 = vmax.f32 %v2017, 0.0
      %v2106 = vmax.f32 %v2022, 0.0
      %v2107 = vmax.f32 %v2025, 0.0
      %v2108 = vmax.f32 %v2030, 0.0
      %v2109 = vmax.f32 %v2033, 0.0
      %v2110 = vmax.f32 %v2038, 0.0
      %v2111 = vmax.f32 %v2041, 0.0
      %v2112 = vmax.f32 %v2046, 0.0
      %v2113 = vmax.f32 %v2049, 0.0
      %v2114 = vmax.f32 %v2054, 0.0
      %v2115 = vmax.f32 %v2057, 0.0
      %v2116 = vmax.f32 %v2062, 0.0
      %v2117 = vmax.f32 %v2065, 0.0
      %v2118 = vpack.c.bf16 %v1552, %v1550
      %v2119 = vpack.c.bf16 %v1553, %v1551
      %v2120 = vpack.c.bf16 %v1556, %v1554
      %v2121 = vpack.c.bf16 %v1557, %v1555
      %v2122 = vpack.c.bf16 %v1560, %v1558
      %v2123 = vpack.c.bf16 %v1561, %v1559
      %v2124 = vpack.c.bf16 %v1564, %v1562
      %v2125 = vpack.c.bf16 %v1565, %v1563
      %v2126 = vpack.c.bf16 %v1568, %v1566
      %v2127 = vpack.c.bf16 %v1569, %v1567
      %v2128 = vpack.c.bf16 %v1572, %v1570
      %v2129 = vpack.c.bf16 %v1573, %v1571
      %v2130 = vpack.c.bf16 %v1576, %v1574
      %v2131 = vpack.c.bf16 %v1577, %v1575
      %v2132 = vpack.c.bf16 %v1580, %v1578
      %v2133 = vpack.c.bf16 %v1581, %v1579
      %v2134 = vpack.c.bf16 %v1584, %v1582
      %v2135 = vpack.c.bf16 %v1585, %v1583
      %v2136 = vpack.c.bf16 %v1588, %v1586
      %v2137 = vpack.c.bf16 %v1589, %v1587
      %v2138 = vpack.c.bf16 %v1592, %v1590
      %v2139 = vpack.c.bf16 %v1593, %v1591
      %v2140 = vpack.c.bf16 %v1596, %v1594
      %v2141 = vpack.c.bf16 %v1597, %v1595
      %v2142 = vpack.c.bf16 %v1600, %v1598
      %v2143 = vpack.c.bf16 %v1601, %v1599
      %v2144 = vpack.c.bf16 %v1604, %v1602
      %v2145 = vpack.c.bf16 %v1605, %v1603
      %v2146 = vpack.c.bf16 %v1608, %v1606
      %v2147 = vpack.c.bf16 %v1609, %v1607
      %v2148 = vpack.c.bf16 %v1612, %v1610
      %v2149 = vpack.c.bf16 %v1613, %v1611
      %v2150 = vpack.c.bf16 %v1616, %v1614
      %v2151 = vpack.c.bf16 %v1617, %v1615
      %v2152 = vpack.c.bf16 %v1620, %v1618
      %v2153 = vpack.c.bf16 %v1621, %v1619
      %v2154 = vpack.c.bf16 %v1624, %v1622
      %v2155 = vpack.c.bf16 %v1625, %v1623
      %v2156 = vpack.c.bf16 %v1628, %v1626
      %v2157 = vpack.c.bf16 %v1629, %v1627
      %v2158 = vpack.c.bf16 %v1632, %v1630
      %v2159 = vpack.c.bf16 %v1633, %v1631
      %v2160 = vpack.c.bf16 %v1636, %v1634
      %v2161 = vpack.c.bf16 %v1637, %v1635
      %v2162 = vpack.c.bf16 %v1640, %v1638
      %v2163 = vpack.c.bf16 %v1641, %v1639
      %v2164 = vpack.c.bf16 %v1644, %v1642
      %v2165 = vpack.c.bf16 %v1645, %v1643
      %v2166 = vpack.c.bf16 %v1648, %v1646
      %v2167 = vpack.c.bf16 %v1649, %v1647
      %v2168 = vld [vmem:[%s3] sm:$0xf]
      %v2169 = vld [vmem:[%s3 + $0x4] sm:$0xf]
      %v2170 = vld [vmem:[%s3 + $0x8] sm:$0xf]
      %v2171 = vld [vmem:[%s3 + $0xc] sm:$0xf]
      %v2172 = vld [vmem:[%s3 + $0x10] sm:$0xf]
      %v2173 = vld [vmem:[%s3 + $0x14] sm:$0xf]
      %v2174 = vld [vmem:[%s3 + $0x18] sm:$0xf]
      %v2175 = vld [vmem:[%s3 + $0x1c] sm:$0xf]
      %v2176 = vld [vmem:[%s3 + $0x20] sm:$0xf]
      %v2177 = vld [vmem:[%s3 + $0x24] sm:$0xf]
      %v2178 = vld [vmem:[%s3 + $0x28] sm:$0xf]
      %v2179 = vld [vmem:[%s3 + $0x2c] sm:$0xf]
      %v2180 = vld [vmem:[%s3 + $0x30] sm:$0xf]
      %v2181 = vld [vmem:[%s3 + $0x34] sm:$0xf]
      %v2182 = vld [vmem:[%s3 + $0x38] sm:$0xf]
      %v2183 = vld [vmem:[%s3 + $0x3c] sm:$0xf]
      %v2184 = vld [vmem:[%s3 + $0x40] sm:$0xf]
      %v2185 = vld [vmem:[%s3 + $0x44] sm:$0xf]
      %v2186 = vld [vmem:[%s3 + $0x48] sm:$0xf]
      %v2187 = vld [vmem:[%s3 + $0x4c] sm:$0xf]
      %v2188 = vld [vmem:[%s3 + $0x50] sm:$0xf]
      %v2189 = vld [vmem:[%s3 + $0x54] sm:$0xf]
      %v2190 = vld [vmem:[%s3 + $0x58] sm:$0xf]
      %v2191 = vld [vmem:[%s3 + $0x5c] sm:$0xf]
      %v2192 = vld [vmem:[%s3 + $0x60] sm:$0xf]
      %v2193 = vld [vmem:[%s3 + $0x64] sm:$0xf]
      %v2194 = vld [vmem:[%s3 + $0x68] sm:$0xf]
      %v2195 = vld [vmem:[%s3 + $0x6c] sm:$0xf]
      %v2196 = vld [vmem:[%s3 + $0x70] sm:$0xf]
      %v2197 = vld [vmem:[%s3 + $0x74] sm:$0xf]
      %v2198 = vld [vmem:[%s3 + $0x78] sm:$0xf]
      %v2199 = vld [vmem:[%s3 + $0x7c] sm:$0xf]
      %v2200 = vld [vmem:[%s4] sm:$0x1]
      %v2202 = vlaneseq
      %v2203 = vshrl.u32 %v2202, 7
      %v2204 = vsub.s32 0, %v2203
      %v2205 = vrot.slane %v2200, %v2204
      %v2239 = vunpack.c.l.b16 %v2168
      %v2240 = vunpack.c.l.b16 %v2169
      %v2241 = vunpack.c.l.b16 %v2170
      %v2242 = vunpack.c.l.b16 %v2171
      %v2243 = vunpack.c.l.b16 %v2172
      %v2244 = vunpack.c.l.b16 %v2173
      %v2245 = vunpack.c.l.b16 %v2174
      %v2246 = vunpack.c.l.b16 %v2175
      %v2247 = vunpack.c.l.b16 %v2176
      %v2248 = vunpack.c.l.b16 %v2177
      %v2249 = vunpack.c.l.b16 %v2178
      %v2250 = vunpack.c.l.b16 %v2179
      %v2251 = vunpack.c.l.b16 %v2180
      %v2252 = vunpack.c.l.b16 %v2181
      %v2253 = vunpack.c.l.b16 %v2182
      %v2254 = vunpack.c.l.b16 %v2183
      %v2255 = vunpack.c.l.b16 %v2184
      %v2256 = vunpack.c.l.b16 %v2185
      %v2257 = vunpack.c.l.b16 %v2186
      %v2258 = vunpack.c.l.b16 %v2187
      %v2259 = vunpack.c.l.b16 %v2188
      %v2260 = vunpack.c.l.b16 %v2189
      %v2261 = vunpack.c.l.b16 %v2190
      %v2262 = vunpack.c.l.b16 %v2191
      %v2263 = vunpack.c.l.b16 %v2192
      %v2264 = vunpack.c.l.b16 %v2193
      %v2265 = vunpack.c.l.b16 %v2194
      %v2266 = vunpack.c.l.b16 %v2195
      %v2267 = vunpack.c.l.b16 %v2196
      %v2268 = vunpack.c.l.b16 %v2197
      %v2269 = vunpack.c.l.b16 %v2198
      %v2270 = vunpack.c.l.b16 %v2199
      %v2271 = vpack.c.b16 %v2240, %v2239
      %v2272 = vpack.c.b16 %v2242, %v2241
      %v2273 = vpack.c.b16 %v2244, %v2243
      %v2274 = vpack.c.b16 %v2246, %v2245
      %v2275 = vpack.c.b16 %v2248, %v2247
      %v2276 = vpack.c.b16 %v2250, %v2249
      %v2277 = vpack.c.b16 %v2252, %v2251
      %v2278 = vpack.c.b16 %v2254, %v2253
      %v2279 = vpack.c.b16 %v2256, %v2255
      %v2280 = vpack.c.b16 %v2258, %v2257
      %v2281 = vpack.c.b16 %v2260, %v2259
      %v2282 = vpack.c.b16 %v2262, %v2261
      %v2283 = vpack.c.b16 %v2264, %v2263
      %v2284 = vpack.c.b16 %v2266, %v2265
      %v2285 = vpack.c.b16 %v2268, %v2267
      %v2286 = vpack.c.b16 %v2270, %v2269
      %2303 = vmatprep.subr.bf16.mxu0 0
      %2304 = vmatpush1.bf16.msra.mxu0 %v2278
      %2305 = vmatprep.subr.bf16.mxu0 0
      %2306 = vmatpush1.bf16.msra.mxu0 %v2277
      %2307 = vmatprep.subr.bf16.mxu0 0
      %2308 = vmatpush1.bf16.msra.mxu0 %v2276
      %2309 = vmatprep.subr.bf16.mxu0 0
      %2310 = vmatpush1.bf16.msra.mxu0 %v2275
      %2311 = vmatprep.subr.bf16.mxu0 0
      %2312 = vmatpush1.bf16.msra.mxu0 %v2274
      %2313 = vmatprep.subr.bf16.mxu0 0
      %2314 = vmatpush1.bf16.msra.mxu0 %v2273
      %2315 = vmatprep.subr.bf16.mxu0 0
      %2316 = vmatpush1.bf16.msra.mxu0 %v2272
      %2317 = vmatprep.subr.bf16.mxu0 0
      %2318 = vmatpush1.bf16.msra.mxu0 %v2271
      %2319 = vmatprep.subr.bf16.mxu0 0
      %2320 = vmatpush2.bf16.msra.mxu0 %v2286
      %2321 = vmatprep.subr.bf16.mxu0 0
      %2322 = vmatpush2.bf16.msra.mxu0 %v2285
      %2323 = vmatprep.subr.bf16.mxu0 0
      %2324 = vmatpush2.bf16.msra.mxu0 %v2284
      %2325 = vmatprep.subr.bf16.mxu0 0
      %2326 = vmatpush2.bf16.msra.mxu0 %v2283
      %2327 = vmatprep.subr.bf16.mxu0 0
      %2328 = vmatpush2.bf16.msra.mxu0 %v2282
      %2329 = vmatprep.subr.bf16.mxu0 0
      %2330 = vmatpush2.bf16.msra.mxu0 %v2281
      %2331 = vmatprep.subr.bf16.mxu0 0
      %2332 = vmatpush2.bf16.msra.mxu0 %v2280
      %2333 = vmatprep.subr.bf16.mxu0 0
      %2334 = vmatpush2.bf16.msra.mxu0 %v2279
      %2335 = vmatprep.mubr.bf16.mxu0 %v2119
      %2336 = vmatmul.mubr.bf16.gmra.mxu0 %v2118
      %v2337 = vpop.f32.mrf.mxu0
      %v2338 = vadd.f32 %v2205, %v2337
      %v2339 = vpop.f32.mrf.mxu0
      %v2340 = vpop.f32.mrf.mxu0
      %v2341 = vadd.f32 %v2205, %v2340
      %v2342 = vpop.f32.mrf.mxu0
      %2343 = vmatprep.mubr.bf16.mxu0 %v2121
      %2344 = vmatmul.mubr.bf16.gmra.mxu0 %v2120
      %v2345 = vpop.f32.mrf.mxu0
      %v2346 = vadd.f32 %v2205, %v2345
      %v2347 = vpop.f32.mrf.mxu0
      %v2348 = vpop.f32.mrf.mxu0
      %v2349 = vadd.f32 %v2205, %v2348
      %v2350 = vpop.f32.mrf.mxu0
      %2351 = vmatprep.mubr.bf16.mxu0 %v2123
      %2352 = vmatmul.mubr.bf16.gmra.mxu0 %v2122
      %v2353 = vpop.f32.mrf.mxu0
      %v2354 = vadd.f32 %v2205, %v2353
      %v2355 = vpop.f32.mrf.mxu0
      %v2356 = vpop.f32.mrf.mxu0
      %v2357 = vadd.f32 %v2205, %v2356
      %v2358 = vpop.f32.mrf.mxu0
      %2359 = vmatprep.mubr.bf16.mxu0 %v2125
      %2360 = vmatmul.mubr.bf16.gmra.mxu0 %v2124
      %v2361 = vpop.f32.mrf.mxu0
      %v2362 = vadd.f32 %v2205, %v2361
      %v2363 = vpop.f32.mrf.mxu0
      %v2364 = vpop.f32.mrf.mxu0
      %v2365 = vadd.f32 %v2205, %v2364
      %v2366 = vpop.f32.mrf.mxu0
      %2367 = vmatprep.mubr.bf16.mxu0 %v2127
      %2368 = vmatmul.mubr.bf16.gmra.mxu0 %v2126
      %v2369 = vpop.f32.mrf.mxu0
      %v2370 = vadd.f32 %v2205, %v2369
      %v2371 = vpop.f32.mrf.mxu0
      %v2372 = vpop.f32.mrf.mxu0
      %v2373 = vadd.f32 %v2205, %v2372
      %v2374 = vpop.f32.mrf.mxu0
      %2375 = vmatprep.mubr.bf16.mxu0 %v2129
      %2376 = vmatmul.mubr.bf16.gmra.mxu0 %v2128
      %v2377 = vpop.f32.mrf.mxu0
      %v2378 = vadd.f32 %v2205, %v2377
      %v2379 = vpop.f32.mrf.mxu0
      %v2380 = vpop.f32.mrf.mxu0
      %v2381 = vadd.f32 %v2205, %v2380
      %v2382 = vpop.f32.mrf.mxu0
      %2383 = vmatprep.mubr.bf16.mxu0 %v2131
      %2384 = vmatmul.mubr.bf16.gmra.mxu0 %v2130
      %v2385 = vpop.f32.mrf.mxu0
      %v2386 = vadd.f32 %v2205, %v2385
      %v2387 = vpop.f32.mrf.mxu0
      %v2388 = vpop.f32.mrf.mxu0
      %v2389 = vadd.f32 %v2205, %v2388
      %v2390 = vpop.f32.mrf.mxu0
      %2391 = vmatprep.mubr.bf16.mxu0 %v2133
      %2392 = vmatmul.mubr.bf16.gmra.mxu0 %v2132
      %v2393 = vpop.f32.mrf.mxu0
      %v2394 = vadd.f32 %v2205, %v2393
      %v2395 = vpop.f32.mrf.mxu0
      %v2396 = vpop.f32.mrf.mxu0
      %v2397 = vadd.f32 %v2205, %v2396
      %v2398 = vpop.f32.mrf.mxu0
      %2399 = vmatprep.mubr.bf16.mxu0 %v2135
      %2400 = vmatmul.mubr.bf16.gmra.mxu0 %v2134
      %v2401 = vpop.f32.mrf.mxu0
      %v2402 = vadd.f32 %v2205, %v2401
      %v2403 = vpop.f32.mrf.mxu0
      %v2404 = vpop.f32.mrf.mxu0
      %v2405 = vadd.f32 %v2205, %v2404
      %v2406 = vpop.f32.mrf.mxu0
      %2407 = vmatprep.mubr.bf16.mxu0 %v2137
      %2408 = vmatmul.mubr.bf16.gmra.mxu0 %v2136
      %v2409 = vpop.f32.mrf.mxu0
      %v2410 = vadd.f32 %v2205, %v2409
      %v2411 = vpop.f32.mrf.mxu0
      %v2412 = vpop.f32.mrf.mxu0
      %v2413 = vadd.f32 %v2205, %v2412
      %v2414 = vpop.f32.mrf.mxu0
      %2415 = vmatprep.mubr.bf16.mxu0 %v2139
      %2416 = vmatmul.mubr.bf16.gmra.mxu0 %v2138
      %v2417 = vpop.f32.mrf.mxu0
      %v2418 = vadd.f32 %v2205, %v2417
      %v2419 = vpop.f32.mrf.mxu0
      %v2420 = vpop.f32.mrf.mxu0
      %v2421 = vadd.f32 %v2205, %v2420
      %v2422 = vpop.f32.mrf.mxu0
      %2423 = vmatprep.mubr.bf16.mxu0 %v2141
      %2424 = vmatmul.mubr.bf16.gmra.mxu0 %v2140
      %v2425 = vpop.f32.mrf.mxu0
      %v2426 = vadd.f32 %v2205, %v2425
      %v2427 = vpop.f32.mrf.mxu0
      %v2428 = vpop.f32.mrf.mxu0
      %v2429 = vadd.f32 %v2205, %v2428
      %v2430 = vpop.f32.mrf.mxu0
      %2431 = vmatprep.mubr.bf16.mxu0 %v2143
      %2432 = vmatmul.mubr.bf16.gmra.mxu0 %v2142
      %v2433 = vpop.f32.mrf.mxu0
      %v2434 = vadd.f32 %v2205, %v2433
      %v2435 = vpop.f32.mrf.mxu0
      %v2436 = vpop.f32.mrf.mxu0
      %v2437 = vadd.f32 %v2205, %v2436
      %v2438 = vpop.f32.mrf.mxu0
      %2439 = vmatprep.mubr.bf16.mxu0 %v2145
      %2440 = vmatmul.mubr.bf16.gmra.mxu0 %v2144
      %v2441 = vpop.f32.mrf.mxu0
      %v2442 = vadd.f32 %v2205, %v2441
      %v2443 = vpop.f32.mrf.mxu0
      %v2444 = vpop.f32.mrf.mxu0
      %v2445 = vadd.f32 %v2205, %v2444
      %v2446 = vpop.f32.mrf.mxu0
      %2447 = vmatprep.mubr.bf16.mxu0 %v2147
      %2448 = vmatmul.mubr.bf16.gmra.mxu0 %v2146
      %v2449 = vpop.f32.mrf.mxu0
      %v2450 = vadd.f32 %v2205, %v2449
      %v2451 = vpop.f32.mrf.mxu0
      %v2452 = vpop.f32.mrf.mxu0
      %v2453 = vadd.f32 %v2205, %v2452
      %v2454 = vpop.f32.mrf.mxu0
      %2455 = vmatprep.mubr.bf16.mxu0 %v2149
      %2456 = vmatmul.mubr.bf16.gmra.mxu0 %v2148
      %v2457 = vpop.f32.mrf.mxu0
      %v2458 = vadd.f32 %v2205, %v2457
      %v2459 = vpop.f32.mrf.mxu0
      %v2460 = vpop.f32.mrf.mxu0
      %v2461 = vadd.f32 %v2205, %v2460
      %v2462 = vpop.f32.mrf.mxu0
      %2463 = vmatprep.mubr.bf16.mxu0 %v2151
      %2464 = vmatmul.mubr.bf16.gmra.mxu0 %v2150
      %v2465 = vpop.f32.mrf.mxu0
      %v2466 = vadd.f32 %v2205, %v2465
      %v2467 = vpop.f32.mrf.mxu0
      %v2468 = vpop.f32.mrf.mxu0
      %v2469 = vadd.f32 %v2205, %v2468
      %v2470 = vpop.f32.mrf.mxu0
      %2471 = vmatprep.mubr.bf16.mxu0 %v2153
      %2472 = vmatmul.mubr.bf16.gmra.mxu0 %v2152
      %v2473 = vpop.f32.mrf.mxu0
      %v2474 = vadd.f32 %v2205, %v2473
      %v2475 = vpop.f32.mrf.mxu0
      %v2476 = vpop.f32.mrf.mxu0
      %v2477 = vadd.f32 %v2205, %v2476
      %v2478 = vpop.f32.mrf.mxu0
      %2479 = vmatprep.mubr.bf16.mxu0 %v2155
      %2480 = vmatmul.mubr.bf16.gmra.mxu0 %v2154
      %v2481 = vpop.f32.mrf.mxu0
      %v2482 = vadd.f32 %v2205, %v2481
      %v2483 = vpop.f32.mrf.mxu0
      %v2484 = vpop.f32.mrf.mxu0
      %v2485 = vadd.f32 %v2205, %v2484
      %v2486 = vpop.f32.mrf.mxu0
      %2487 = vmatprep.mubr.bf16.mxu0 %v2157
      %2488 = vmatmul.mubr.bf16.gmra.mxu0 %v2156
      %v2489 = vpop.f32.mrf.mxu0
      %v2490 = vadd.f32 %v2205, %v2489
      %v2491 = vpop.f32.mrf.mxu0
      %v2492 = vpop.f32.mrf.mxu0
      %v2493 = vadd.f32 %v2205, %v2492
      %v2494 = vpop.f32.mrf.mxu0
      %2495 = vmatprep.mubr.bf16.mxu0 %v2159
      %2496 = vmatmul.mubr.bf16.gmra.mxu0 %v2158
      %v2497 = vpop.f32.mrf.mxu0
      %v2498 = vadd.f32 %v2205, %v2497
      %v2499 = vpop.f32.mrf.mxu0
      %v2500 = vpop.f32.mrf.mxu0
      %v2501 = vadd.f32 %v2205, %v2500
      %v2502 = vpop.f32.mrf.mxu0
      %2503 = vmatprep.mubr.bf16.mxu0 %v2161
      %2504 = vmatmul.mubr.bf16.gmra.mxu0 %v2160
      %v2505 = vpop.f32.mrf.mxu0
      %v2506 = vadd.f32 %v2205, %v2505
      %v2507 = vpop.f32.mrf.mxu0
      %v2508 = vpop.f32.mrf.mxu0
      %v2509 = vadd.f32 %v2205, %v2508
      %v2510 = vpop.f32.mrf.mxu0
      %2511 = vmatprep.mubr.bf16.mxu0 %v2163
      %2512 = vmatmul.mubr.bf16.gmra.mxu0 %v2162
      %v2513 = vpop.f32.mrf.mxu0
      %v2514 = vadd.f32 %v2205, %v2513
      %v2515 = vpop.f32.mrf.mxu0
      %v2516 = vpop.f32.mrf.mxu0
      %v2517 = vadd.f32 %v2205, %v2516
      %v2518 = vpop.f32.mrf.mxu0
      %2519 = vmatprep.mubr.bf16.mxu0 %v2165
      %2520 = vmatmul.mubr.bf16.gmra.mxu0 %v2164
      %v2521 = vpop.f32.mrf.mxu0
      %v2522 = vadd.f32 %v2205, %v2521
      %v2523 = vpop.f32.mrf.mxu0
      %v2524 = vpop.f32.mrf.mxu0
      %v2525 = vadd.f32 %v2205, %v2524
      %v2526 = vpop.f32.mrf.mxu0
      %2527 = vmatprep.mubr.bf16.mxu0 %v2167
      %2528 = vmatmul.mubr.bf16.gmra.mxu0 %v2166
      %v2529 = vpop.f32.mrf.mxu0
      %v2530 = vadd.f32 %v2205, %v2529
      %v2531 = vpop.f32.mrf.mxu0
      %v2532 = vpop.f32.mrf.mxu0
      %v2533 = vadd.f32 %v2205, %v2532
      %v2534 = vpop.f32.mrf.mxu0
      %2535 = vdwg.mxu0
      %v2536 = vmax.f32 %v2338, 0.0
      %v2537 = vmax.f32 %v2341, 0.0
      %v2538 = vmax.f32 %v2346, 0.0
      %v2539 = vmax.f32 %v2349, 0.0
      %v2540 = vmax.f32 %v2354, 0.0
      %v2541 = vmax.f32 %v2357, 0.0
      %v2542 = vmax.f32 %v2362, 0.0
      %v2543 = vmax.f32 %v2365, 0.0
      %v2544 = vmax.f32 %v2370, 0.0
      %v2545 = vmax.f32 %v2373, 0.0
      %v2546 = vmax.f32 %v2378, 0.0
      %v2547 = vmax.f32 %v2381, 0.0
      %v2548 = vmax.f32 %v2386, 0.0
      %v2549 = vmax.f32 %v2389, 0.0
      %v2550 = vmax.f32 %v2394, 0.0
      %v2551 = vmax.f32 %v2397, 0.0
      %v2552 = vmax.f32 %v2402, 0.0
      %v2553 = vmax.f32 %v2405, 0.0
      %v2554 = vmax.f32 %v2410, 0.0
      %v2555 = vmax.f32 %v2413, 0.0
      %v2556 = vmax.f32 %v2418, 0.0
      %v2557 = vmax.f32 %v2421, 0.0
      %v2558 = vmax.f32 %v2426, 0.0
      %v2559 = vmax.f32 %v2429, 0.0
      %v2560 = vmax.f32 %v2434, 0.0
      %v2561 = vmax.f32 %v2437, 0.0
      %v2562 = vmax.f32 %v2442, 0.0
      %v2563 = vmax.f32 %v2445, 0.0
      %v2564 = vmax.f32 %v2450, 0.0
      %v2565 = vmax.f32 %v2453, 0.0
      %v2566 = vmax.f32 %v2458, 0.0
      %v2567 = vmax.f32 %v2461, 0.0
      %v2568 = vmax.f32 %v2466, 0.0
      %v2569 = vmax.f32 %v2469, 0.0
      %v2570 = vmax.f32 %v2474, 0.0
      %v2571 = vmax.f32 %v2477, 0.0
      %v2572 = vmax.f32 %v2482, 0.0
      %v2573 = vmax.f32 %v2485, 0.0
      %v2574 = vmax.f32 %v2490, 0.0
      %v2575 = vmax.f32 %v2493, 0.0
      %v2576 = vmax.f32 %v2498, 0.0
      %v2577 = vmax.f32 %v2501, 0.0
      %v2578 = vmax.f32 %v2506, 0.0
      %v2579 = vmax.f32 %v2509, 0.0
      %v2580 = vmax.f32 %v2514, 0.0
      %v2581 = vmax.f32 %v2517, 0.0
      %v2582 = vmax.f32 %v2522, 0.0
      %v2583 = vmax.f32 %v2525, 0.0
      %v2584 = vmax.f32 %v2530, 0.0
      %v2585 = vmax.f32 %v2533, 0.0
      %v2586 = vpack.c.bf16 %v2069, %v2068
      %v2587 = vpack.c.bf16 %v2071, %v2070
      %v2588 = vpack.c.bf16 %v2073, %v2072
      %v2589 = vpack.c.bf16 %v2075, %v2074
      %v2590 = vpack.c.bf16 %v2077, %v2076
      %v2591 = vpack.c.bf16 %v2079, %v2078
      %v2592 = vpack.c.bf16 %v2081, %v2080
      %v2593 = vpack.c.bf16 %v2083, %v2082
      %v2594 = vpack.c.bf16 %v2085, %v2084
      %v2595 = vpack.c.bf16 %v2087, %v2086
      %v2596 = vpack.c.bf16 %v2089, %v2088
      %v2597 = vpack.c.bf16 %v2091, %v2090
      %v2598 = vpack.c.bf16 %v2093, %v2092
      %v2599 = vpack.c.bf16 %v2095, %v2094
      %v2600 = vpack.c.bf16 %v2097, %v2096
      %v2601 = vpack.c.bf16 %v2099, %v2098
      %v2602 = vpack.c.bf16 %v2101, %v2100
      %v2603 = vpack.c.bf16 %v2103, %v2102
      %v2604 = vpack.c.bf16 %v2105, %v2104
      %v2605 = vpack.c.bf16 %v2107, %v2106
      %v2606 = vpack.c.bf16 %v2109, %v2108
      %v2607 = vpack.c.bf16 %v2111, %v2110
      %v2608 = vpack.c.bf16 %v2113, %v2112
      %v2609 = vpack.c.bf16 %v2115, %v2114
      %v2610 = vpack.c.bf16 %v2117, %v2116
      %v2611 = vpack.c.bf16 %v2537, %v2536
      %v2612 = vpack.c.bf16 %v2539, %v2538
      %v2613 = vpack.c.bf16 %v2541, %v2540
      %v2614 = vpack.c.bf16 %v2543, %v2542
      %v2615 = vpack.c.bf16 %v2545, %v2544
      %v2616 = vpack.c.bf16 %v2547, %v2546
      %v2617 = vpack.c.bf16 %v2549, %v2548
      %v2618 = vpack.c.bf16 %v2551, %v2550
      %v2619 = vpack.c.bf16 %v2553, %v2552
      %v2620 = vpack.c.bf16 %v2555, %v2554
      %v2621 = vpack.c.bf16 %v2557, %v2556
      %v2622 = vpack.c.bf16 %v2559, %v2558
      %v2623 = vpack.c.bf16 %v2561, %v2560
      %v2624 = vpack.c.bf16 %v2563, %v2562
      %v2625 = vpack.c.bf16 %v2565, %v2564
      %v2626 = vpack.c.bf16 %v2567, %v2566
      %v2627 = vpack.c.bf16 %v2569, %v2568
      %v2628 = vpack.c.bf16 %v2571, %v2570
      %v2629 = vpack.c.bf16 %v2573, %v2572
      %v2630 = vpack.c.bf16 %v2575, %v2574
      %v2631 = vpack.c.bf16 %v2577, %v2576
      %v2632 = vpack.c.bf16 %v2579, %v2578
      %v2633 = vpack.c.bf16 %v2581, %v2580
      %v2634 = vpack.c.bf16 %v2583, %v2582
      %v2635 = vpack.c.bf16 %v2585, %v2584
      %v2636 = vld [vmem:[%s5] sm:$0xff]
      %v2637 = vld [vmem:[%s5 + $0x8] sm:$0xff]
      %v2638 = vld [vmem:[%s5 + $0x10] sm:$0xff]
      %v2639 = vld [vmem:[%s5 + $0x18] sm:$0xff]
      %v2640 = vld [vmem:[%s5 + $0x20] sm:$0xff]
      %v2641 = vld [vmem:[%s5 + $0x28] sm:$0xff]
      %v2642 = vld [vmem:[%s5 + $0x30] sm:$0xff]
      %v2643 = vld [vmem:[%s5 + $0x38] sm:$0xff]
      %v2644 = vld [vmem:[%s5 + $0x40] sm:$0xff]
      %v2645 = vld [vmem:[%s5 + $0x48] sm:$0xff]
      %v2646 = vld [vmem:[%s5 + $0x50] sm:$0xff]
      %v2647 = vld [vmem:[%s5 + $0x58] sm:$0xff]
      %v2648 = vld [vmem:[%s5 + $0x60] sm:$0xff]
      %v2649 = vld [vmem:[%s5 + $0x68] sm:$0xff]
      %v2650 = vld [vmem:[%s5 + $0x70] sm:$0xff]
      %v2651 = vld [vmem:[%s5 + $0x78] sm:$0xff]
      %v2652 = vld [vmem:[%s5 + $0x80] sm:$0xff]
      %v2653 = vld [vmem:[%s5 + $0x88] sm:$0xff]
      %v2654 = vld [vmem:[%s5 + $0x90] sm:$0xff]
      %v2655 = vld [vmem:[%s5 + $0x98] sm:$0xff]
      %v2656 = vld [vmem:[%s5 + $0xa0] sm:$0xff]
      %v2657 = vld [vmem:[%s5 + $0xa8] sm:$0xff]
      %v2658 = vld [vmem:[%s5 + $0xb0] sm:$0xff]
      %v2659 = vld [vmem:[%s5 + $0xb8] sm:$0xff]
      %v2660 = vld [vmem:[%s5 + $0xc0] sm:$0xff]
      %v2661 = vld [vmem:[%s5 + $0xc8] sm:$0xff]
      %v2662 = vld [vmem:[%s5 + $0xd0] sm:$0xff]
      %v2663 = vld [vmem:[%s5 + $0xd8] sm:$0xff]
      %v2664 = vld [vmem:[%s5 + $0xe0] sm:$0xff]
      %v2665 = vld [vmem:[%s5 + $0xe8] sm:$0xff]
      %v2666 = vld [vmem:[%s5 + $0xf0] sm:$0xff]
      %v2667 = vld [vmem:[%s5 + $0xf8] sm:$0xff]
      %v2668 = vld [vmem:[%s5 + $0x100] sm:$0xff]
      %v2669 = vld [vmem:[%s5 + $0x108] sm:$0xff]
      %v2670 = vld [vmem:[%s5 + $0x110] sm:$0xff]
      %v2671 = vld [vmem:[%s5 + $0x118] sm:$0xff]
      %v2672 = vld [vmem:[%s5 + $0x120] sm:$0xff]
      %v2673 = vld [vmem:[%s5 + $0x128] sm:$0xff]
      %v2674 = vld [vmem:[%s5 + $0x130] sm:$0xff]
      %v2675 = vld [vmem:[%s5 + $0x138] sm:$0xff]
      %v2676 = vld [vmem:[%s5 + $0x140] sm:$0xff]
      %v2677 = vld [vmem:[%s5 + $0x148] sm:$0xff]
      %v2678 = vld [vmem:[%s5 + $0x150] sm:$0xff]
      %v2679 = vld [vmem:[%s5 + $0x158] sm:$0xff]
      %v2680 = vld [vmem:[%s5 + $0x160] sm:$0xff]
      %v2681 = vld [vmem:[%s5 + $0x168] sm:$0xff]
      %v2682 = vld [vmem:[%s5 + $0x170] sm:$0xff]
      %v2683 = vld [vmem:[%s5 + $0x178] sm:$0xff]
      %v2684 = vld [vmem:[%s5 + $0x180] sm:$0xff]
      %v2685 = vld [vmem:[%s5 + $0x188] sm:$0xff]
      %v2686 = vld [vmem:[%s5 + $0x190] sm:$0xff]
      %v2687 = vld [vmem:[%s5 + $0x198] sm:$0xff]
      %v2688 = vld [vmem:[%s5 + $0x1a0] sm:$0xff]
      %v2689 = vld [vmem:[%s5 + $0x1a8] sm:$0xff]
      %v2690 = vld [vmem:[%s5 + $0x1b0] sm:$0xff]
      %v2691 = vld [vmem:[%s5 + $0x1b8] sm:$0xff]
      %v2692 = vld [vmem:[%s5 + $0x1c0] sm:$0xff]
      %v2693 = vld [vmem:[%s5 + $0x1c8] sm:$0xff]
      %v2694 = vld [vmem:[%s5 + $0x1d0] sm:$0xff]
      %v2695 = vld [vmem:[%s5 + $0x1d8] sm:$0xff]
      %v2696 = vld [vmem:[%s5 + $0x1e0] sm:$0xff]
      %v2697 = vld [vmem:[%s5 + $0x1e8] sm:$0xff]
      %v2698 = vld [vmem:[%s5 + $0x1f0] sm:$0xff]
      %v2699 = vld [vmem:[%s5 + $0x1f8] sm:$0xff]
      %v2700 = vld [vmem:[%s5 + $0x200] sm:$0xff]
      %v2701 = vld [vmem:[%s5 + $0x208] sm:$0xff]
      %v2702 = vld [vmem:[%s5 + $0x210] sm:$0xff]
      %v2703 = vld [vmem:[%s5 + $0x218] sm:$0xff]
      %v2704 = vld [vmem:[%s5 + $0x220] sm:$0xff]
      %v2705 = vld [vmem:[%s5 + $0x228] sm:$0xff]
      %v2706 = vld [vmem:[%s5 + $0x230] sm:$0xff]
      %v2707 = vld [vmem:[%s5 + $0x238] sm:$0xff]
      %v2708 = vld [vmem:[%s5 + $0x240] sm:$0xff]
      %v2709 = vld [vmem:[%s5 + $0x248] sm:$0xff]
      %v2710 = vld [vmem:[%s5 + $0x250] sm:$0xff]
      %v2711 = vld [vmem:[%s5 + $0x258] sm:$0xff]
      %v2712 = vld [vmem:[%s5 + $0x260] sm:$0xff]
      %v2713 = vld [vmem:[%s5 + $0x268] sm:$0xff]
      %v2714 = vld [vmem:[%s5 + $0x270] sm:$0xff]
      %v2715 = vld [vmem:[%s5 + $0x278] sm:$0xff]
      %v2716 = vld [vmem:[%s5 + $0x280] sm:$0xff]
      %v2717 = vld [vmem:[%s5 + $0x288] sm:$0xff]
      %v2718 = vld [vmem:[%s5 + $0x290] sm:$0xff]
      %v2719 = vld [vmem:[%s5 + $0x298] sm:$0xff]
      %v2720 = vld [vmem:[%s5 + $0x2a0] sm:$0xff]
      %v2721 = vld [vmem:[%s5 + $0x2a8] sm:$0xff]
      %v2722 = vld [vmem:[%s5 + $0x2b0] sm:$0xff]
      %v2723 = vld [vmem:[%s5 + $0x2b8] sm:$0xff]
      %v2724 = vld [vmem:[%s5 + $0x2c0] sm:$0xff]
      %v2725 = vld [vmem:[%s5 + $0x2c8] sm:$0xff]
      %v2726 = vld [vmem:[%s5 + $0x2d0] sm:$0xff]
      %v2727 = vld [vmem:[%s5 + $0x2d8] sm:$0xff]
      %v2728 = vld [vmem:[%s5 + $0x2e0] sm:$0xff]
      %v2729 = vld [vmem:[%s5 + $0x2e8] sm:$0xff]
      %v2730 = vld [vmem:[%s5 + $0x2f0] sm:$0xff]
      %v2731 = vld [vmem:[%s5 + $0x2f8] sm:$0xff]
      %v2732 = vld [vmem:[%s5 + $0x300] sm:$0xff]
      %v2733 = vld [vmem:[%s5 + $0x308] sm:$0xff]
      %v2734 = vld [vmem:[%s5 + $0x310] sm:$0xff]
      %v2735 = vld [vmem:[%s5 + $0x318] sm:$0xff]
      %v2836 = vunpack.c.l.b16 %v2636
      %v2837 = vunpack.c.h.b16 %v2636
      %v2838 = vunpack.c.l.b16 %v2637
      %v2839 = vunpack.c.h.b16 %v2637
      %v2840 = vunpack.c.l.b16 %v2638
      %v2841 = vunpack.c.h.b16 %v2638
      %v2842 = vunpack.c.l.b16 %v2639
      %v2843 = vunpack.c.h.b16 %v2639
      %v2844 = vunpack.c.l.b16 %v2640
      %v2845 = vunpack.c.h.b16 %v2640
      %v2846 = vunpack.c.l.b16 %v2641
      %v2847 = vunpack.c.h.b16 %v2641
      %v2848 = vunpack.c.l.b16 %v2642
      %v2849 = vunpack.c.h.b16 %v2642
      %v2850 = vunpack.c.l.b16 %v2643
      %v2851 = vunpack.c.h.b16 %v2643
      %v2852 = vunpack.c.l.b16 %v2644
      %v2853 = vunpack.c.h.b16 %v2644
      %v2854 = vunpack.c.l.b16 %v2645
      %v2855 = vunpack.c.h.b16 %v2645
      %v2856 = vunpack.c.l.b16 %v2646
      %v2857 = vunpack.c.h.b16 %v2646
      %v2858 = vunpack.c.l.b16 %v2647
      %v2859 = vunpack.c.h.b16 %v2647
      %v2860 = vunpack.c.l.b16 %v2648
      %v2861 = vunpack.c.h.b16 %v2648
      %v2862 = vunpack.c.l.b16 %v2649
      %v2863 = vunpack.c.h.b16 %v2649
      %v2864 = vunpack.c.l.b16 %v2650
      %v2865 = vunpack.c.h.b16 %v2650
      %v2866 = vunpack.c.l.b16 %v2651
      %v2867 = vunpack.c.h.b16 %v2651
      %v2868 = vunpack.c.l.b16 %v2652
      %v2869 = vunpack.c.h.b16 %v2652
      %v2870 = vunpack.c.l.b16 %v2653
      %v2871 = vunpack.c.h.b16 %v2653
      %v2872 = vunpack.c.l.b16 %v2654
      %v2873 = vunpack.c.h.b16 %v2654
      %v2874 = vunpack.c.l.b16 %v2655
      %v2875 = vunpack.c.h.b16 %v2655
      %v2876 = vunpack.c.l.b16 %v2656
      %v2877 = vunpack.c.h.b16 %v2656
      %v2878 = vunpack.c.l.b16 %v2657
      %v2879 = vunpack.c.h.b16 %v2657
      %v2880 = vunpack.c.l.b16 %v2658
      %v2881 = vunpack.c.h.b16 %v2658
      %v2882 = vunpack.c.l.b16 %v2659
      %v2883 = vunpack.c.h.b16 %v2659
      %v2884 = vunpack.c.l.b16 %v2660
      %v2885 = vunpack.c.h.b16 %v2660
      %v2886 = vunpack.c.l.b16 %v2661
      %v2887 = vunpack.c.h.b16 %v2661
      %v2888 = vunpack.c.l.b16 %v2662
      %v2889 = vunpack.c.h.b16 %v2662
      %v2890 = vunpack.c.l.b16 %v2663
      %v2891 = vunpack.c.h.b16 %v2663
      %v2892 = vunpack.c.l.b16 %v2664
      %v2893 = vunpack.c.h.b16 %v2664
      %v2894 = vunpack.c.l.b16 %v2665
      %v2895 = vunpack.c.h.b16 %v2665
      %v2896 = vunpack.c.l.b16 %v2666
      %v2897 = vunpack.c.h.b16 %v2666
      %v2898 = vunpack.c.l.b16 %v2667
      %v2899 = vunpack.c.h.b16 %v2667
      %v2900 = vunpack.c.l.b16 %v2668
      %v2901 = vunpack.c.h.b16 %v2668
      %v2902 = vunpack.c.l.b16 %v2669
      %v2903 = vunpack.c.h.b16 %v2669
      %v2904 = vunpack.c.l.b16 %v2670
      %v2905 = vunpack.c.h.b16 %v2670
      %v2906 = vunpack.c.l.b16 %v2671
      %v2907 = vunpack.c.h.b16 %v2671
      %v2908 = vunpack.c.l.b16 %v2672
      %v2909 = vunpack.c.h.b16 %v2672
      %v2910 = vunpack.c.l.b16 %v2673
      %v2911 = vunpack.c.h.b16 %v2673
      %v2912 = vunpack.c.l.b16 %v2674
      %v2913 = vunpack.c.h.b16 %v2674
      %v2914 = vunpack.c.l.b16 %v2675
      %v2915 = vunpack.c.h.b16 %v2675
      %v2916 = vunpack.c.l.b16 %v2676
      %v2917 = vunpack.c.h.b16 %v2676
      %v2918 = vunpack.c.l.b16 %v2677
      %v2919 = vunpack.c.h.b16 %v2677
      %v2920 = vunpack.c.l.b16 %v2678
      %v2921 = vunpack.c.h.b16 %v2678
      %v2922 = vunpack.c.l.b16 %v2679
      %v2923 = vunpack.c.h.b16 %v2679
      %v2924 = vunpack.c.l.b16 %v2680
      %v2925 = vunpack.c.h.b16 %v2680
      %v2926 = vunpack.c.l.b16 %v2681
      %v2927 = vunpack.c.h.b16 %v2681
      %v2928 = vunpack.c.l.b16 %v2682
      %v2929 = vunpack.c.h.b16 %v2682
      %v2930 = vunpack.c.l.b16 %v2683
      %v2931 = vunpack.c.h.b16 %v2683
      %v2932 = vunpack.c.l.b16 %v2684
      %v2933 = vunpack.c.h.b16 %v2684
      %v2934 = vunpack.c.l.b16 %v2685
      %v2935 = vunpack.c.h.b16 %v2685
      %v2936 = vunpack.c.l.b16 %v2686
      %v2937 = vunpack.c.h.b16 %v2686
      %v2938 = vunpack.c.l.b16 %v2687
      %v2939 = vunpack.c.h.b16 %v2687
      %v2940 = vunpack.c.l.b16 %v2688
      %v2941 = vunpack.c.h.b16 %v2688
      %v2942 = vunpack.c.l.b16 %v2689
      %v2943 = vunpack.c.h.b16 %v2689
      %v2944 = vunpack.c.l.b16 %v2690
      %v2945 = vunpack.c.h.b16 %v2690
      %v2946 = vunpack.c.l.b16 %v2691
      %v2947 = vunpack.c.h.b16 %v2691
      %v2948 = vunpack.c.l.b16 %v2692
      %v2949 = vunpack.c.h.b16 %v2692
      %v2950 = vunpack.c.l.b16 %v2693
      %v2951 = vunpack.c.h.b16 %v2693
      %v2952 = vunpack.c.l.b16 %v2694
      %v2953 = vunpack.c.h.b16 %v2694
      %v2954 = vunpack.c.l.b16 %v2695
      %v2955 = vunpack.c.h.b16 %v2695
      %v2956 = vunpack.c.l.b16 %v2696
      %v2957 = vunpack.c.h.b16 %v2696
      %v2958 = vunpack.c.l.b16 %v2697
      %v2959 = vunpack.c.h.b16 %v2697
      %v2960 = vunpack.c.l.b16 %v2698
      %v2961 = vunpack.c.h.b16 %v2698
      %v2962 = vunpack.c.l.b16 %v2699
      %v2963 = vunpack.c.h.b16 %v2699
      %v2964 = vunpack.c.l.b16 %v2700
      %v2965 = vunpack.c.h.b16 %v2700
      %v2966 = vunpack.c.l.b16 %v2701
      %v2967 = vunpack.c.h.b16 %v2701
      %v2968 = vunpack.c.l.b16 %v2702
      %v2969 = vunpack.c.h.b16 %v2702
      %v2970 = vunpack.c.l.b16 %v2703
      %v2971 = vunpack.c.h.b16 %v2703
      %v2972 = vunpack.c.l.b16 %v2704
      %v2973 = vunpack.c.h.b16 %v2704
      %v2974 = vunpack.c.l.b16 %v2705
      %v2975 = vunpack.c.h.b16 %v2705
      %v2976 = vunpack.c.l.b16 %v2706
      %v2977 = vunpack.c.h.b16 %v2706
      %v2978 = vunpack.c.l.b16 %v2707
      %v2979 = vunpack.c.h.b16 %v2707
      %v2980 = vunpack.c.l.b16 %v2708
      %v2981 = vunpack.c.h.b16 %v2708
      %v2982 = vunpack.c.l.b16 %v2709
      %v2983 = vunpack.c.h.b16 %v2709
      %v2984 = vunpack.c.l.b16 %v2710
      %v2985 = vunpack.c.h.b16 %v2710
      %v2986 = vunpack.c.l.b16 %v2711
      %v2987 = vunpack.c.h.b16 %v2711
      %v2988 = vunpack.c.l.b16 %v2712
      %v2989 = vunpack.c.h.b16 %v2712
      %v2990 = vunpack.c.l.b16 %v2713
      %v2991 = vunpack.c.h.b16 %v2713
      %v2992 = vunpack.c.l.b16 %v2714
      %v2993 = vunpack.c.h.b16 %v2714
      %v2994 = vunpack.c.l.b16 %v2715
      %v2995 = vunpack.c.h.b16 %v2715
      %v2996 = vunpack.c.l.b16 %v2716
      %v2997 = vunpack.c.h.b16 %v2716
      %v2998 = vunpack.c.l.b16 %v2717
      %v2999 = vunpack.c.h.b16 %v2717
      %v3000 = vunpack.c.l.b16 %v2718
      %v3001 = vunpack.c.h.b16 %v2718
      %v3002 = vunpack.c.l.b16 %v2719
      %v3003 = vunpack.c.h.b16 %v2719
      %v3004 = vunpack.c.l.b16 %v2720
      %v3005 = vunpack.c.h.b16 %v2720
      %v3006 = vunpack.c.l.b16 %v2721
      %v3007 = vunpack.c.h.b16 %v2721
      %v3008 = vunpack.c.l.b16 %v2722
      %v3009 = vunpack.c.h.b16 %v2722
      %v3010 = vunpack.c.l.b16 %v2723
      %v3011 = vunpack.c.h.b16 %v2723
      %v3012 = vunpack.c.l.b16 %v2724
      %v3013 = vunpack.c.h.b16 %v2724
      %v3014 = vunpack.c.l.b16 %v2725
      %v3015 = vunpack.c.h.b16 %v2725
      %v3016 = vunpack.c.l.b16 %v2726
      %v3017 = vunpack.c.h.b16 %v2726
      %v3018 = vunpack.c.l.b16 %v2727
      %v3019 = vunpack.c.h.b16 %v2727
      %v3020 = vunpack.c.l.b16 %v2728
      %v3021 = vunpack.c.h.b16 %v2728
      %v3022 = vunpack.c.l.b16 %v2729
      %v3023 = vunpack.c.h.b16 %v2729
      %v3024 = vunpack.c.l.b16 %v2730
      %v3025 = vunpack.c.h.b16 %v2730
      %v3026 = vunpack.c.l.b16 %v2731
      %v3027 = vunpack.c.h.b16 %v2731
      %v3028 = vunpack.c.l.b16 %v2732
      %v3029 = vunpack.c.h.b16 %v2732
      %v3030 = vunpack.c.l.b16 %v2733
      %v3031 = vunpack.c.h.b16 %v2733
      %v3032 = vunpack.c.l.b16 %v2734
      %v3033 = vunpack.c.h.b16 %v2734
      %v3034 = vunpack.c.l.b16 %v2735
      %v3035 = vunpack.c.h.b16 %v2735
      %v3036 = vpack.c.b16 %v2840, %v2836
      %v3037 = vpack.c.b16 %v2841, %v2837
      %v3038 = vpack.c.b16 %v2842, %v2838
      %v3039 = vpack.c.b16 %v2843, %v2839
      %v3040 = vpack.c.b16 %v2848, %v2844
      %v3041 = vpack.c.b16 %v2849, %v2845
      %v3042 = vpack.c.b16 %v2850, %v2846
      %v3043 = vpack.c.b16 %v2851, %v2847
      %v3044 = vpack.c.b16 %v2856, %v2852
      %v3045 = vpack.c.b16 %v2857, %v2853
      %v3046 = vpack.c.b16 %v2858, %v2854
      %v3047 = vpack.c.b16 %v2859, %v2855
      %v3048 = vpack.c.b16 %v2864, %v2860
      %v3049 = vpack.c.b16 %v2865, %v2861
      %v3050 = vpack.c.b16 %v2866, %v2862
      %v3051 = vpack.c.b16 %v2867, %v2863
      %v3052 = vpack.c.b16 %v2872, %v2868
      %v3053 = vpack.c.b16 %v2873, %v2869
      %v3054 = vpack.c.b16 %v2874, %v2870
      %v3055 = vpack.c.b16 %v2875, %v2871
      %v3056 = vpack.c.b16 %v2880, %v2876
      %v3057 = vpack.c.b16 %v2881, %v2877
      %v3058 = vpack.c.b16 %v2882, %v2878
      %v3059 = vpack.c.b16 %v2883, %v2879
      %v3060 = vpack.c.b16 %v2888, %v2884
      %v3061 = vpack.c.b16 %v2889, %v2885
      %v3062 = vpack.c.b16 %v2890, %v2886
      %v3063 = vpack.c.b16 %v2891, %v2887
      %v3064 = vpack.c.b16 %v2896, %v2892
      %v3065 = vpack.c.b16 %v2897, %v2893
      %v3066 = vpack.c.b16 %v2898, %v2894
      %v3067 = vpack.c.b16 %v2899, %v2895
      %v3068 = vpack.c.b16 %v2904, %v2900
      %v3069 = vpack.c.b16 %v2905, %v2901
      %v3070 = vpack.c.b16 %v2906, %v2902
      %v3071 = vpack.c.b16 %v2907, %v2903
      %v3072 = vpack.c.b16 %v2912, %v2908
      %v3073 = vpack.c.b16 %v2913, %v2909
      %v3074 = vpack.c.b16 %v2914, %v2910
      %v3075 = vpack.c.b16 %v2915, %v2911
      %v3076 = vpack.c.b16 %v2920, %v2916
      %v3077 = vpack.c.b16 %v2921, %v2917
      %v3078 = vpack.c.b16 %v2922, %v2918
      %v3079 = vpack.c.b16 %v2923, %v2919
      %v3080 = vpack.c.b16 %v2928, %v2924
      %v3081 = vpack.c.b16 %v2929, %v2925
      %v3082 = vpack.c.b16 %v2930, %v2926
      %v3083 = vpack.c.b16 %v2931, %v2927
      %v3084 = vpack.c.b16 %v2936, %v2932
      %v3085 = vpack.c.b16 %v2937, %v2933
      %v3086 = vpack.c.b16 %v2938, %v2934
      %v3087 = vpack.c.b16 %v2939, %v2935
      %v3088 = vpack.c.b16 %v2944, %v2940
      %v3089 = vpack.c.b16 %v2945, %v2941
      %v3090 = vpack.c.b16 %v2946, %v2942
      %v3091 = vpack.c.b16 %v2947, %v2943
      %v3092 = vpack.c.b16 %v2952, %v2948
      %v3093 = vpack.c.b16 %v2953, %v2949
      %v3094 = vpack.c.b16 %v2954, %v2950
      %v3095 = vpack.c.b16 %v2955, %v2951
      %v3096 = vpack.c.b16 %v2960, %v2956
      %v3097 = vpack.c.b16 %v2961, %v2957
      %v3098 = vpack.c.b16 %v2962, %v2958
      %v3099 = vpack.c.b16 %v2963, %v2959
      %v3100 = vpack.c.b16 %v2968, %v2964
      %v3101 = vpack.c.b16 %v2969, %v2965
      %v3102 = vpack.c.b16 %v2970, %v2966
      %v3103 = vpack.c.b16 %v2971, %v2967
      %v3104 = vpack.c.b16 %v2976, %v2972
      %v3105 = vpack.c.b16 %v2977, %v2973
      %v3106 = vpack.c.b16 %v2978, %v2974
      %v3107 = vpack.c.b16 %v2979, %v2975
      %v3108 = vpack.c.b16 %v2984, %v2980
      %v3109 = vpack.c.b16 %v2985, %v2981
      %v3110 = vpack.c.b16 %v2986, %v2982
      %v3111 = vpack.c.b16 %v2987, %v2983
      %v3112 = vpack.c.b16 %v2992, %v2988
      %v3113 = vpack.c.b16 %v2993, %v2989
      %v3114 = vpack.c.b16 %v2994, %v2990
      %v3115 = vpack.c.b16 %v2995, %v2991
      %v3116 = vpack.c.b16 %v3000, %v2996
      %v3117 = vpack.c.b16 %v3001, %v2997
      %v3118 = vpack.c.b16 %v3002, %v2998
      %v3119 = vpack.c.b16 %v3003, %v2999
      %v3120 = vpack.c.b16 %v3008, %v3004
      %v3121 = vpack.c.b16 %v3009, %v3005
      %v3122 = vpack.c.b16 %v3010, %v3006
      %v3123 = vpack.c.b16 %v3011, %v3007
      %v3124 = vpack.c.b16 %v3016, %v3012
      %v3125 = vpack.c.b16 %v3017, %v3013
      %v3126 = vpack.c.b16 %v3018, %v3014
      %v3127 = vpack.c.b16 %v3019, %v3015
      %v3128 = vpack.c.b16 %v3024, %v3020
      %v3129 = vpack.c.b16 %v3025, %v3021
      %v3130 = vpack.c.b16 %v3026, %v3022
      %v3131 = vpack.c.b16 %v3027, %v3023
      %v3132 = vpack.c.b16 %v3032, %v3028
      %v3133 = vpack.c.b16 %v3033, %v3029
      %v3134 = vpack.c.b16 %v3034, %v3030
      %v3135 = vpack.c.b16 %v3035, %v3031
      %vm3211 = vcmask 130048
      %v3213 = vsel %vm3211, %v3039, 0
      %v3216 = vsel %vm3211, %v3043, 0
      %v3219 = vsel %vm3211, %v3047, 0
      %v3222 = vsel %vm3211, %v3051, 0
      %v3225 = vsel %vm3211, %v3055, 0
      %v3228 = vsel %vm3211, %v3059, 0
      %v3231 = vsel %vm3211, %v3063, 0
      %v3234 = vsel %vm3211, %v3067, 0
      %v3237 = vsel %vm3211, %v3071, 0
      %v3240 = vsel %vm3211, %v3075, 0
      %v3243 = vsel %vm3211, %v3079, 0
      %v3246 = vsel %vm3211, %v3083, 0
      %v3249 = vsel %vm3211, %v3087, 0
      %v3252 = vsel %vm3211, %v3091, 0
      %v3255 = vsel %vm3211, %v3095, 0
      %v3258 = vsel %vm3211, %v3099, 0
      %v3261 = vsel %vm3211, %v3103, 0
      %v3264 = vsel %vm3211, %v3107, 0
      %v3267 = vsel %vm3211, %v3111, 0
      %v3270 = vsel %vm3211, %v3115, 0
      %v3273 = vsel %vm3211, %v3119, 0
      %v3276 = vsel %vm3211, %v3123, 0
      %v3279 = vsel %vm3211, %v3127, 0
      %v3282 = vsel %vm3211, %v3131, 0
      %v3285 = vsel %vm3211, %v3135, 0
      %3287 = vmatprep.subr.bf16.mxu0 %v2618
      %3288 = vmatpush1.bf16.msra.mxu0 %v2593
      %3289 = vmatprep.subr.bf16.mxu0 %v2617
      %3290 = vmatpush1.bf16.msra.mxu0 %v2592
      %3291 = vmatprep.subr.bf16.mxu0 %v2616
      %3292 = vmatpush1.bf16.msra.mxu0 %v2591
      %3293 = vmatprep.subr.bf16.mxu0 %v2615
      %3294 = vmatpush1.bf16.msra.mxu0 %v2590
      %3295 = vmatprep.subr.bf16.mxu0 %v2614
      %3296 = vmatpush1.bf16.msra.mxu0 %v2589
      %3297 = vmatprep.subr.bf16.mxu0 %v2613
      %3298 = vmatpush1.bf16.msra.mxu0 %v2588
      %3299 = vmatprep.subr.bf16.mxu0 %v2612
      %3300 = vmatpush1.bf16.msra.mxu0 %v2587
      %3301 = vmatprep.subr.bf16.mxu0 %v2611
      %3302 = vmatpush1.bf16.msra.mxu0 %v2586
      %3303 = vmatprep.subr.bf16.mxu0 %v2626
      %3304 = vmatpush2.bf16.msra.mxu0 %v2601
      %3305 = vmatprep.subr.bf16.mxu0 %v2625
      %3306 = vmatpush2.bf16.msra.mxu0 %v2600
      %3307 = vmatprep.subr.bf16.mxu0 %v2624
      %3308 = vmatpush2.bf16.msra.mxu0 %v2599
      %3309 = vmatprep.subr.bf16.mxu0 %v2623
      %3310 = vmatpush2.bf16.msra.mxu0 %v2598
      %3311 = vmatprep.subr.bf16.mxu0 %v2622
      %3312 = vmatpush2.bf16.msra.mxu0 %v2597
      %3313 = vmatprep.subr.bf16.mxu0 %v2621
      %3314 = vmatpush2.bf16.msra.mxu0 %v2596
      %3315 = vmatprep.subr.bf16.mxu0 %v2620
      %3316 = vmatpush2.bf16.msra.mxu0 %v2595
      %3317 = vmatprep.subr.bf16.mxu0 %v2619
      %3318 = vmatpush2.bf16.msra.mxu0 %v2594
      %3319 = vmatprep.mubr.bf16.mxu0 %v3037
      %3320 = vmatmul.mubr.bf16.gmra.mxu0 %v3036
      %v3321 = vpop.f32.mrf.mxu0
      %v3322 = vadd.f32 0.0, %v3321
      %v3323 = vpop.f32.mrf.mxu0
      %v3324 = vadd.f32 0.0, %v3323
      %v3325 = vpop.f32.mrf.mxu0
      %v3326 = vadd.f32 0.0, %v3325
      %v3327 = vpop.f32.mrf.mxu0
      %v3328 = vadd.f32 0.0, %v3327
      %3329 = vmatprep.mubr.bf16.mxu0 %v3041
      %3330 = vmatmul.mubr.bf16.gmra.mxu0 %v3040
      %v3331 = vpop.f32.mrf.mxu0
      %v3332 = vadd.f32 0.0, %v3331
      %v3333 = vpop.f32.mrf.mxu0
      %v3334 = vadd.f32 0.0, %v3333
      %v3335 = vpop.f32.mrf.mxu0
      %v3336 = vadd.f32 0.0, %v3335
      %v3337 = vpop.f32.mrf.mxu0
      %v3338 = vadd.f32 0.0, %v3337
      %3339 = vmatprep.mubr.bf16.mxu0 %v3045
      %3340 = vmatmul.mubr.bf16.gmra.mxu0 %v3044
      %v3341 = vpop.f32.mrf.mxu0
      %v3342 = vadd.f32 0.0, %v3341
      %v3343 = vpop.f32.mrf.mxu0
      %v3344 = vadd.f32 0.0, %v3343
      %v3345 = vpop.f32.mrf.mxu0
      %v3346 = vadd.f32 0.0, %v3345
      %v3347 = vpop.f32.mrf.mxu0
      %v3348 = vadd.f32 0.0, %v3347
      %3349 = vmatprep.mubr.bf16.mxu0 %v3049
      %3350 = vmatmul.mubr.bf16.gmra.mxu0 %v3048
      %v3351 = vpop.f32.mrf.mxu0
      %v3352 = vadd.f32 0.0, %v3351
      %v3353 = vpop.f32.mrf.mxu0
      %v3354 = vadd.f32 0.0, %v3353
      %v3355 = vpop.f32.mrf.mxu0
      %v3356 = vadd.f32 0.0, %v3355
      %v3357 = vpop.f32.mrf.mxu0
      %v3358 = vadd.f32 0.0, %v3357
      %3359 = vmatprep.mubr.bf16.mxu0 %v3053
      %3360 = vmatmul.mubr.bf16.gmra.mxu0 %v3052
      %v3361 = vpop.f32.mrf.mxu0
      %v3362 = vadd.f32 0.0, %v3361
      %v3363 = vpop.f32.mrf.mxu0
      %v3364 = vadd.f32 0.0, %v3363
      %v3365 = vpop.f32.mrf.mxu0
      %v3366 = vadd.f32 0.0, %v3365
      %v3367 = vpop.f32.mrf.mxu0
      %v3368 = vadd.f32 0.0, %v3367
      %3369 = vmatprep.mubr.bf16.mxu0 %v3057
      %3370 = vmatmul.mubr.bf16.gmra.mxu0 %v3056
      %v3371 = vpop.f32.mrf.mxu0
      %v3372 = vadd.f32 0.0, %v3371
      %v3373 = vpop.f32.mrf.mxu0
      %v3374 = vadd.f32 0.0, %v3373
      %v3375 = vpop.f32.mrf.mxu0
      %v3376 = vadd.f32 0.0, %v3375
      %v3377 = vpop.f32.mrf.mxu0
      %v3378 = vadd.f32 0.0, %v3377
      %3379 = vmatprep.mubr.bf16.mxu0 %v3061
      %3380 = vmatmul.mubr.bf16.gmra.mxu0 %v3060
      %v3381 = vpop.f32.mrf.mxu0
      %v3382 = vadd.f32 0.0, %v3381
      %v3383 = vpop.f32.mrf.mxu0
      %v3384 = vadd.f32 0.0, %v3383
      %v3385 = vpop.f32.mrf.mxu0
      %v3386 = vadd.f32 0.0, %v3385
      %v3387 = vpop.f32.mrf.mxu0
      %v3388 = vadd.f32 0.0, %v3387
      %3389 = vmatprep.mubr.bf16.mxu0 %v3065
      %3390 = vmatmul.mubr.bf16.gmra.mxu0 %v3064
      %v3391 = vpop.f32.mrf.mxu0
      %v3392 = vadd.f32 0.0, %v3391
      %v3393 = vpop.f32.mrf.mxu0
      %v3394 = vadd.f32 0.0, %v3393
      %v3395 = vpop.f32.mrf.mxu0
      %v3396 = vadd.f32 0.0, %v3395
      %v3397 = vpop.f32.mrf.mxu0
      %v3398 = vadd.f32 0.0, %v3397
      %3399 = vmatprep.mubr.bf16.mxu0 %v3069
      %3400 = vmatmul.mubr.bf16.gmra.mxu0 %v3068
      %v3401 = vpop.f32.mrf.mxu0
      %v3402 = vadd.f32 0.0, %v3401
      %v3403 = vpop.f32.mrf.mxu0
      %v3404 = vadd.f32 0.0, %v3403
      %v3405 = vpop.f32.mrf.mxu0
      %v3406 = vadd.f32 0.0, %v3405
      %v3407 = vpop.f32.mrf.mxu0
      %v3408 = vadd.f32 0.0, %v3407
      %3409 = vmatprep.mubr.bf16.mxu0 %v3073
      %3410 = vmatmul.mubr.bf16.gmra.mxu0 %v3072
      %v3411 = vpop.f32.mrf.mxu0
      %v3412 = vadd.f32 0.0, %v3411
      %v3413 = vpop.f32.mrf.mxu0
      %v3414 = vadd.f32 0.0, %v3413
      %v3415 = vpop.f32.mrf.mxu0
      %v3416 = vadd.f32 0.0, %v3415
      %v3417 = vpop.f32.mrf.mxu0
      %v3418 = vadd.f32 0.0, %v3417
      %3419 = vmatprep.mubr.bf16.mxu0 %v3077
      %3420 = vmatmul.mubr.bf16.gmra.mxu0 %v3076
      %v3421 = vpop.f32.mrf.mxu0
      %v3422 = vadd.f32 0.0, %v3421
      %v3423 = vpop.f32.mrf.mxu0
      %v3424 = vadd.f32 0.0, %v3423
      %v3425 = vpop.f32.mrf.mxu0
      %v3426 = vadd.f32 0.0, %v3425
      %v3427 = vpop.f32.mrf.mxu0
      %v3428 = vadd.f32 0.0, %v3427
      %3429 = vmatprep.mubr.bf16.mxu0 %v3081
      %3430 = vmatmul.mubr.bf16.gmra.mxu0 %v3080
      %v3431 = vpop.f32.mrf.mxu0
      %v3432 = vadd.f32 0.0, %v3431
      %v3433 = vpop.f32.mrf.mxu0
      %v3434 = vadd.f32 0.0, %v3433
      %v3435 = vpop.f32.mrf.mxu0
      %v3436 = vadd.f32 0.0, %v3435
      %v3437 = vpop.f32.mrf.mxu0
      %v3438 = vadd.f32 0.0, %v3437
      %3439 = vmatprep.mubr.bf16.mxu0 %v3085
      %3440 = vmatmul.mubr.bf16.gmra.mxu0 %v3084
      %v3441 = vpop.f32.mrf.mxu0
      %v3442 = vadd.f32 0.0, %v3441
      %v3443 = vpop.f32.mrf.mxu0
      %v3444 = vadd.f32 0.0, %v3443
      %v3445 = vpop.f32.mrf.mxu0
      %v3446 = vadd.f32 0.0, %v3445
      %v3447 = vpop.f32.mrf.mxu0
      %v3448 = vadd.f32 0.0, %v3447
      %3449 = vmatprep.mubr.bf16.mxu0 %v3089
      %3450 = vmatmul.mubr.bf16.gmra.mxu0 %v3088
      %v3451 = vpop.f32.mrf.mxu0
      %v3452 = vadd.f32 0.0, %v3451
      %v3453 = vpop.f32.mrf.mxu0
      %v3454 = vadd.f32 0.0, %v3453
      %v3455 = vpop.f32.mrf.mxu0
      %v3456 = vadd.f32 0.0, %v3455
      %v3457 = vpop.f32.mrf.mxu0
      %v3458 = vadd.f32 0.0, %v3457
      %3459 = vmatprep.mubr.bf16.mxu0 %v3093
      %3460 = vmatmul.mubr.bf16.gmra.mxu0 %v3092
      %v3461 = vpop.f32.mrf.mxu0
      %v3462 = vadd.f32 0.0, %v3461
      %v3463 = vpop.f32.mrf.mxu0
      %v3464 = vadd.f32 0.0, %v3463
      %v3465 = vpop.f32.mrf.mxu0
      %v3466 = vadd.f32 0.0, %v3465
      %v3467 = vpop.f32.mrf.mxu0
      %v3468 = vadd.f32 0.0, %v3467
      %3469 = vmatprep.mubr.bf16.mxu0 %v3097
      %3470 = vmatmul.mubr.bf16.gmra.mxu0 %v3096
      %v3471 = vpop.f32.mrf.mxu0
      %v3472 = vadd.f32 0.0, %v3471
      %v3473 = vpop.f32.mrf.mxu0
      %v3474 = vadd.f32 0.0, %v3473
      %v3475 = vpop.f32.mrf.mxu0
      %v3476 = vadd.f32 0.0, %v3475
      %v3477 = vpop.f32.mrf.mxu0
      %v3478 = vadd.f32 0.0, %v3477
      %3479 = vmatprep.mubr.bf16.mxu0 %v3101
      %3480 = vmatmul.mubr.bf16.gmra.mxu0 %v3100
      %v3481 = vpop.f32.mrf.mxu0
      %v3482 = vadd.f32 0.0, %v3481
      %v3483 = vpop.f32.mrf.mxu0
      %v3484 = vadd.f32 0.0, %v3483
      %v3485 = vpop.f32.mrf.mxu0
      %v3486 = vadd.f32 0.0, %v3485
      %v3487 = vpop.f32.mrf.mxu0
      %v3488 = vadd.f32 0.0, %v3487
      %3489 = vmatprep.mubr.bf16.mxu0 %v3105
      %3490 = vmatmul.mubr.bf16.gmra.mxu0 %v3104
      %v3491 = vpop.f32.mrf.mxu0
      %v3492 = vadd.f32 0.0, %v3491
      %v3493 = vpop.f32.mrf.mxu0
      %v3494 = vadd.f32 0.0, %v3493
      %v3495 = vpop.f32.mrf.mxu0
      %v3496 = vadd.f32 0.0, %v3495
      %v3497 = vpop.f32.mrf.mxu0
      %v3498 = vadd.f32 0.0, %v3497
      %3499 = vmatprep.mubr.bf16.mxu0 %v3109
      %3500 = vmatmul.mubr.bf16.gmra.mxu0 %v3108
      %v3501 = vpop.f32.mrf.mxu0
      %v3502 = vadd.f32 0.0, %v3501
      %v3503 = vpop.f32.mrf.mxu0
      %v3504 = vadd.f32 0.0, %v3503
      %v3505 = vpop.f32.mrf.mxu0
      %v3506 = vadd.f32 0.0, %v3505
      %v3507 = vpop.f32.mrf.mxu0
      %v3508 = vadd.f32 0.0, %v3507
      %3509 = vmatprep.mubr.bf16.mxu0 %v3113
      %3510 = vmatmul.mubr.bf16.gmra.mxu0 %v3112
      %v3511 = vpop.f32.mrf.mxu0
      %v3512 = vadd.f32 0.0, %v3511
      %v3513 = vpop.f32.mrf.mxu0
      %v3514 = vadd.f32 0.0, %v3513
      %v3515 = vpop.f32.mrf.mxu0
      %v3516 = vadd.f32 0.0, %v3515
      %v3517 = vpop.f32.mrf.mxu0
      %v3518 = vadd.f32 0.0, %v3517
      %3519 = vmatprep.mubr.bf16.mxu0 %v3117
      %3520 = vmatmul.mubr.bf16.gmra.mxu0 %v3116
      %v3521 = vpop.f32.mrf.mxu0
      %v3522 = vadd.f32 0.0, %v3521
      %v3523 = vpop.f32.mrf.mxu0
      %v3524 = vadd.f32 0.0, %v3523
      %v3525 = vpop.f32.mrf.mxu0
      %v3526 = vadd.f32 0.0, %v3525
      %v3527 = vpop.f32.mrf.mxu0
      %v3528 = vadd.f32 0.0, %v3527
      %3529 = vmatprep.mubr.bf16.mxu0 %v3121
      %3530 = vmatmul.mubr.bf16.gmra.mxu0 %v3120
      %v3531 = vpop.f32.mrf.mxu0
      %v3532 = vadd.f32 0.0, %v3531
      %v3533 = vpop.f32.mrf.mxu0
      %v3534 = vadd.f32 0.0, %v3533
      %v3535 = vpop.f32.mrf.mxu0
      %v3536 = vadd.f32 0.0, %v3535
      %v3537 = vpop.f32.mrf.mxu0
      %v3538 = vadd.f32 0.0, %v3537
      %3539 = vmatprep.mubr.bf16.mxu0 %v3125
      %3540 = vmatmul.mubr.bf16.gmra.mxu0 %v3124
      %v3541 = vpop.f32.mrf.mxu0
      %v3542 = vadd.f32 0.0, %v3541
      %v3543 = vpop.f32.mrf.mxu0
      %v3544 = vadd.f32 0.0, %v3543
      %v3545 = vpop.f32.mrf.mxu0
      %v3546 = vadd.f32 0.0, %v3545
      %v3547 = vpop.f32.mrf.mxu0
      %v3548 = vadd.f32 0.0, %v3547
      %3549 = vmatprep.mubr.bf16.mxu0 %v3129
      %3550 = vmatmul.mubr.bf16.gmra.mxu0 %v3128
      %v3551 = vpop.f32.mrf.mxu0
      %v3552 = vadd.f32 0.0, %v3551
      %v3553 = vpop.f32.mrf.mxu0
      %v3554 = vadd.f32 0.0, %v3553
      %v3555 = vpop.f32.mrf.mxu0
      %v3556 = vadd.f32 0.0, %v3555
      %v3557 = vpop.f32.mrf.mxu0
      %v3558 = vadd.f32 0.0, %v3557
      %3559 = vmatprep.mubr.bf16.mxu0 %v3133
      %3560 = vmatmul.mubr.bf16.gmra.mxu0 %v3132
      %v3561 = vpop.f32.mrf.mxu0
      %v3562 = vadd.f32 0.0, %v3561
      %v3563 = vpop.f32.mrf.mxu0
      %v3564 = vadd.f32 0.0, %v3563
      %v3565 = vpop.f32.mrf.mxu0
      %v3566 = vadd.f32 0.0, %v3565
      %v3567 = vpop.f32.mrf.mxu0
      %v3568 = vadd.f32 0.0, %v3567
      %3569 = vdwg.mxu0
      %3570 = vmatprep.subr.bf16.mxu0 %v2634
      %3571 = vmatpush1.bf16.msra.mxu0 %v2609
      %3572 = vmatprep.subr.bf16.mxu0 %v2633
      %3573 = vmatpush1.bf16.msra.mxu0 %v2608
      %3574 = vmatprep.subr.bf16.mxu0 %v2632
      %3575 = vmatpush1.bf16.msra.mxu0 %v2607
      %3576 = vmatprep.subr.bf16.mxu0 %v2631
      %3577 = vmatpush1.bf16.msra.mxu0 %v2606
      %3578 = vmatprep.subr.bf16.mxu0 %v2630
      %3579 = vmatpush1.bf16.msra.mxu0 %v2605
      %3580 = vmatprep.subr.bf16.mxu0 %v2629
      %3581 = vmatpush1.bf16.msra.mxu0 %v2604
      %3582 = vmatprep.subr.bf16.mxu0 %v2628
      %3583 = vmatpush1.bf16.msra.mxu0 %v2603
      %3584 = vmatprep.subr.bf16.mxu0 %v2627
      %3585 = vmatpush1.bf16.msra.mxu0 %v2602
      %3586 = vmatprep.subr.bf16.mxu0 0
      %3587 = vmatpush2.bf16.msra.mxu0 0
      %3588 = vmatprep.subr.bf16.mxu0 0
      %3589 = vmatpush2.bf16.msra.mxu0 0
      %3590 = vmatprep.subr.bf16.mxu0 0
      %3591 = vmatpush2.bf16.msra.mxu0 0
      %3592 = vmatprep.subr.bf16.mxu0 0
      %3593 = vmatpush2.bf16.msra.mxu0 0
      %3594 = vmatprep.subr.bf16.mxu0 0
      %3595 = vmatpush2.bf16.msra.mxu0 0
      %3596 = vmatprep.subr.bf16.mxu0 0
      %3597 = vmatpush2.bf16.msra.mxu0 0
      %3598 = vmatprep.subr.bf16.mxu0 0
      %3599 = vmatpush2.bf16.msra.mxu0 0
      %3600 = vmatprep.subr.bf16.mxu0 %v2635
      %3601 = vmatpush2.bf16.msra.mxu0 %v2610
      %3602 = vmatprep.mubr.bf16.mxu0 %v3213
      %3603 = vmatmul.mubr.bf16.gmra.mxu0 %v3038
      %v3604 = vpop.f32.mrf.mxu0
      %v3605 = vadd.f32 %v3322, %v3604
      %v3606 = vpop.f32.mrf.mxu0
      %v3607 = vadd.f32 %v3324, %v3606
      %v3608 = vpop.f32.mrf.mxu0
      %v3609 = vadd.f32 %v3326, %v3608
      %v3610 = vpop.f32.mrf.mxu0
      %v3611 = vadd.f32 %v3328, %v3610
      %3612 = vmatprep.mubr.bf16.mxu0 %v3216
      %3613 = vmatmul.mubr.bf16.gmra.mxu0 %v3042
      %v3614 = vpop.f32.mrf.mxu0
      %v3615 = vadd.f32 %v3332, %v3614
      %v3616 = vpop.f32.mrf.mxu0
      %v3617 = vadd.f32 %v3334, %v3616
      %v3618 = vpop.f32.mrf.mxu0
      %v3619 = vadd.f32 %v3336, %v3618
      %v3620 = vpop.f32.mrf.mxu0
      %v3621 = vadd.f32 %v3338, %v3620
      %3622 = vmatprep.mubr.bf16.mxu0 %v3219
      %3623 = vmatmul.mubr.bf16.gmra.mxu0 %v3046
      %v3624 = vpop.f32.mrf.mxu0
      %v3625 = vadd.f32 %v3342, %v3624
      %v3626 = vpop.f32.mrf.mxu0
      %v3627 = vadd.f32 %v3344, %v3626
      %v3628 = vpop.f32.mrf.mxu0
      %v3629 = vadd.f32 %v3346, %v3628
      %v3630 = vpop.f32.mrf.mxu0
      %v3631 = vadd.f32 %v3348, %v3630
      %3632 = vmatprep.mubr.bf16.mxu0 %v3222
      %3633 = vmatmul.mubr.bf16.gmra.mxu0 %v3050
      %v3634 = vpop.f32.mrf.mxu0
      %v3635 = vadd.f32 %v3352, %v3634
      %v3636 = vpop.f32.mrf.mxu0
      %v3637 = vadd.f32 %v3354, %v3636
      %v3638 = vpop.f32.mrf.mxu0
      %v3639 = vadd.f32 %v3356, %v3638
      %v3640 = vpop.f32.mrf.mxu0
      %v3641 = vadd.f32 %v3358, %v3640
      %3642 = vmatprep.mubr.bf16.mxu0 %v3225
      %3643 = vmatmul.mubr.bf16.gmra.mxu0 %v3054
      %v3644 = vpop.f32.mrf.mxu0
      %v3645 = vadd.f32 %v3362, %v3644
      %v3646 = vpop.f32.mrf.mxu0
      %v3647 = vadd.f32 %v3364, %v3646
      %v3648 = vpop.f32.mrf.mxu0
      %v3649 = vadd.f32 %v3366, %v3648
      %v3650 = vpop.f32.mrf.mxu0
      %v3651 = vadd.f32 %v3368, %v3650
      %3652 = vmatprep.mubr.bf16.mxu0 %v3228
      %3653 = vmatmul.mubr.bf16.gmra.mxu0 %v3058
      %v3654 = vpop.f32.mrf.mxu0
      %v3655 = vadd.f32 %v3372, %v3654
      %v3656 = vpop.f32.mrf.mxu0
      %v3657 = vadd.f32 %v3374, %v3656
      %v3658 = vpop.f32.mrf.mxu0
      %v3659 = vadd.f32 %v3376, %v3658
      %v3660 = vpop.f32.mrf.mxu0
      %v3661 = vadd.f32 %v3378, %v3660
      %3662 = vmatprep.mubr.bf16.mxu0 %v3231
      %3663 = vmatmul.mubr.bf16.gmra.mxu0 %v3062
      %v3664 = vpop.f32.mrf.mxu0
      %v3665 = vadd.f32 %v3382, %v3664
      %v3666 = vpop.f32.mrf.mxu0
      %v3667 = vadd.f32 %v3384, %v3666
      %v3668 = vpop.f32.mrf.mxu0
      %v3669 = vadd.f32 %v3386, %v3668
      %v3670 = vpop.f32.mrf.mxu0
      %v3671 = vadd.f32 %v3388, %v3670
      %3672 = vmatprep.mubr.bf16.mxu0 %v3234
      %3673 = vmatmul.mubr.bf16.gmra.mxu0 %v3066
      %v3674 = vpop.f32.mrf.mxu0
      %v3675 = vadd.f32 %v3392, %v3674
      %v3676 = vpop.f32.mrf.mxu0
      %v3677 = vadd.f32 %v3394, %v3676
      %v3678 = vpop.f32.mrf.mxu0
      %v3679 = vadd.f32 %v3396, %v3678
      %v3680 = vpop.f32.mrf.mxu0
      %v3681 = vadd.f32 %v3398, %v3680
      %3682 = vmatprep.mubr.bf16.mxu0 %v3237
      %3683 = vmatmul.mubr.bf16.gmra.mxu0 %v3070
      %v3684 = vpop.f32.mrf.mxu0
      %v3685 = vadd.f32 %v3402, %v3684
      %v3686 = vpop.f32.mrf.mxu0
      %v3687 = vadd.f32 %v3404, %v3686
      %v3688 = vpop.f32.mrf.mxu0
      %v3689 = vadd.f32 %v3406, %v3688
      %v3690 = vpop.f32.mrf.mxu0
      %v3691 = vadd.f32 %v3408, %v3690
      %3692 = vmatprep.mubr.bf16.mxu0 %v3240
      %3693 = vmatmul.mubr.bf16.gmra.mxu0 %v3074
      %v3694 = vpop.f32.mrf.mxu0
      %v3695 = vadd.f32 %v3412, %v3694
      %v3696 = vpop.f32.mrf.mxu0
      %v3697 = vadd.f32 %v3414, %v3696
      %v3698 = vpop.f32.mrf.mxu0
      %v3699 = vadd.f32 %v3416, %v3698
      %v3700 = vpop.f32.mrf.mxu0
      %v3701 = vadd.f32 %v3418, %v3700
      %3702 = vmatprep.mubr.bf16.mxu0 %v3243
      %3703 = vmatmul.mubr.bf16.gmra.mxu0 %v3078
      %v3704 = vpop.f32.mrf.mxu0
      %v3705 = vadd.f32 %v3422, %v3704
      %v3706 = vpop.f32.mrf.mxu0
      %v3707 = vadd.f32 %v3424, %v3706
      %v3708 = vpop.f32.mrf.mxu0
      %v3709 = vadd.f32 %v3426, %v3708
      %v3710 = vpop.f32.mrf.mxu0
      %v3711 = vadd.f32 %v3428, %v3710
      %3712 = vmatprep.mubr.bf16.mxu0 %v3246
      %3713 = vmatmul.mubr.bf16.gmra.mxu0 %v3082
      %v3714 = vpop.f32.mrf.mxu0
      %v3715 = vadd.f32 %v3432, %v3714
      %v3716 = vpop.f32.mrf.mxu0
      %v3717 = vadd.f32 %v3434, %v3716
      %v3718 = vpop.f32.mrf.mxu0
      %v3719 = vadd.f32 %v3436, %v3718
      %v3720 = vpop.f32.mrf.mxu0
      %v3721 = vadd.f32 %v3438, %v3720
      %3722 = vmatprep.mubr.bf16.mxu0 %v3249
      %3723 = vmatmul.mubr.bf16.gmra.mxu0 %v3086
      %v3724 = vpop.f32.mrf.mxu0
      %v3725 = vadd.f32 %v3442, %v3724
      %v3726 = vpop.f32.mrf.mxu0
      %v3727 = vadd.f32 %v3444, %v3726
      %v3728 = vpop.f32.mrf.mxu0
      %v3729 = vadd.f32 %v3446, %v3728
      %v3730 = vpop.f32.mrf.mxu0
      %v3731 = vadd.f32 %v3448, %v3730
      %3732 = vmatprep.mubr.bf16.mxu0 %v3252
      %3733 = vmatmul.mubr.bf16.gmra.mxu0 %v3090
      %v3734 = vpop.f32.mrf.mxu0
      %v3735 = vadd.f32 %v3452, %v3734
      %v3736 = vpop.f32.mrf.mxu0
      %v3737 = vadd.f32 %v3454, %v3736
      %v3738 = vpop.f32.mrf.mxu0
      %v3739 = vadd.f32 %v3456, %v3738
      %v3740 = vpop.f32.mrf.mxu0
      %v3741 = vadd.f32 %v3458, %v3740
      %3742 = vmatprep.mubr.bf16.mxu0 %v3255
      %3743 = vmatmul.mubr.bf16.gmra.mxu0 %v3094
      %v3744 = vpop.f32.mrf.mxu0
      %v3745 = vadd.f32 %v3462, %v3744
      %v3746 = vpop.f32.mrf.mxu0
      %v3747 = vadd.f32 %v3464, %v3746
      %v3748 = vpop.f32.mrf.mxu0
      %v3749 = vadd.f32 %v3466, %v3748
      %v3750 = vpop.f32.mrf.mxu0
      %v3751 = vadd.f32 %v3468, %v3750
      %3752 = vmatprep.mubr.bf16.mxu0 %v3258
      %3753 = vmatmul.mubr.bf16.gmra.mxu0 %v3098
      %v3754 = vpop.f32.mrf.mxu0
      %v3755 = vadd.f32 %v3472, %v3754
      %v3756 = vpop.f32.mrf.mxu0
      %v3757 = vadd.f32 %v3474, %v3756
      %v3758 = vpop.f32.mrf.mxu0
      %v3759 = vadd.f32 %v3476, %v3758
      %v3760 = vpop.f32.mrf.mxu0
      %v3761 = vadd.f32 %v3478, %v3760
      %3762 = vmatprep.mubr.bf16.mxu0 %v3261
      %3763 = vmatmul.mubr.bf16.gmra.mxu0 %v3102
      %v3764 = vpop.f32.mrf.mxu0
      %v3765 = vadd.f32 %v3482, %v3764
      %v3766 = vpop.f32.mrf.mxu0
      %v3767 = vadd.f32 %v3484, %v3766
      %v3768 = vpop.f32.mrf.mxu0
      %v3769 = vadd.f32 %v3486, %v3768
      %v3770 = vpop.f32.mrf.mxu0
      %v3771 = vadd.f32 %v3488, %v3770
      %3772 = vmatprep.mubr.bf16.mxu0 %v3264
      %3773 = vmatmul.mubr.bf16.gmra.mxu0 %v3106
      %v3774 = vpop.f32.mrf.mxu0
      %v3775 = vadd.f32 %v3492, %v3774
      %v3776 = vpop.f32.mrf.mxu0
      %v3777 = vadd.f32 %v3494, %v3776
      %v3778 = vpop.f32.mrf.mxu0
      %v3779 = vadd.f32 %v3496, %v3778
      %v3780 = vpop.f32.mrf.mxu0
      %v3781 = vadd.f32 %v3498, %v3780
      %3782 = vmatprep.mubr.bf16.mxu0 %v3267
      %3783 = vmatmul.mubr.bf16.gmra.mxu0 %v3110
      %v3784 = vpop.f32.mrf.mxu0
      %v3785 = vadd.f32 %v3502, %v3784
      %v3786 = vpop.f32.mrf.mxu0
      %v3787 = vadd.f32 %v3504, %v3786
      %v3788 = vpop.f32.mrf.mxu0
      %v3789 = vadd.f32 %v3506, %v3788
      %v3790 = vpop.f32.mrf.mxu0
      %v3791 = vadd.f32 %v3508, %v3790
      %3792 = vmatprep.mubr.bf16.mxu0 %v3270
      %3793 = vmatmul.mubr.bf16.gmra.mxu0 %v3114
      %v3794 = vpop.f32.mrf.mxu0
      %v3795 = vadd.f32 %v3512, %v3794
      %v3796 = vpop.f32.mrf.mxu0
      %v3797 = vadd.f32 %v3514, %v3796
      %v3798 = vpop.f32.mrf.mxu0
      %v3799 = vadd.f32 %v3516, %v3798
      %v3800 = vpop.f32.mrf.mxu0
      %v3801 = vadd.f32 %v3518, %v3800
      %3802 = vmatprep.mubr.bf16.mxu0 %v3273
      %3803 = vmatmul.mubr.bf16.gmra.mxu0 %v3118
      %v3804 = vpop.f32.mrf.mxu0
      %v3805 = vadd.f32 %v3522, %v3804
      %v3806 = vpop.f32.mrf.mxu0
      %v3807 = vadd.f32 %v3524, %v3806
      %v3808 = vpop.f32.mrf.mxu0
      %v3809 = vadd.f32 %v3526, %v3808
      %v3810 = vpop.f32.mrf.mxu0
      %v3811 = vadd.f32 %v3528, %v3810
      %3812 = vmatprep.mubr.bf16.mxu0 %v3276
      %3813 = vmatmul.mubr.bf16.gmra.mxu0 %v3122
      %v3814 = vpop.f32.mrf.mxu0
      %v3815 = vadd.f32 %v3532, %v3814
      %v3816 = vpop.f32.mrf.mxu0
      %v3817 = vadd.f32 %v3534, %v3816
      %v3818 = vpop.f32.mrf.mxu0
      %v3819 = vadd.f32 %v3536, %v3818
      %v3820 = vpop.f32.mrf.mxu0
      %v3821 = vadd.f32 %v3538, %v3820
      %3822 = vmatprep.mubr.bf16.mxu0 %v3279
      %3823 = vmatmul.mubr.bf16.gmra.mxu0 %v3126
      %v3824 = vpop.f32.mrf.mxu0
      %v3825 = vadd.f32 %v3542, %v3824
      %v3826 = vpop.f32.mrf.mxu0
      %v3827 = vadd.f32 %v3544, %v3826
      %v3828 = vpop.f32.mrf.mxu0
      %v3829 = vadd.f32 %v3546, %v3828
      %v3830 = vpop.f32.mrf.mxu0
      %v3831 = vadd.f32 %v3548, %v3830
      %3832 = vmatprep.mubr.bf16.mxu0 %v3282
      %3833 = vmatmul.mubr.bf16.gmra.mxu0 %v3130
      %v3834 = vpop.f32.mrf.mxu0
      %v3835 = vadd.f32 %v3552, %v3834
      %v3836 = vpop.f32.mrf.mxu0
      %v3837 = vadd.f32 %v3554, %v3836
      %v3838 = vpop.f32.mrf.mxu0
      %v3839 = vadd.f32 %v3556, %v3838
      %v3840 = vpop.f32.mrf.mxu0
      %v3841 = vadd.f32 %v3558, %v3840
      %3842 = vmatprep.mubr.bf16.mxu0 %v3285
      %3843 = vmatmul.mubr.bf16.gmra.mxu0 %v3134
      %v3844 = vpop.f32.mrf.mxu0
      %v3845 = vadd.f32 %v3562, %v3844
      %v3846 = vpop.f32.mrf.mxu0
      %v3847 = vadd.f32 %v3564, %v3846
      %v3848 = vpop.f32.mrf.mxu0
      %v3849 = vadd.f32 %v3566, %v3848
      %v3850 = vpop.f32.mrf.mxu0
      %v3851 = vadd.f32 %v3568, %v3850
      %3852 = vdwg.mxu0
      %3853 = vst [vmem:[%s339] sm:$0xff] %v3605
      %3854 = vst [vmem:[%s339 + $0x8] sm:$0xff] %v3607
      %3855 = vst [vmem:[%s339 + $0x20] sm:$0xff] %v3609
      %3856 = vst [vmem:[%s339 + $0x28] sm:$0xff] %v3611
      %3857 = vst [vmem:[%s339 + $0x40] sm:$0xff] %v3615
      %3858 = vst [vmem:[%s339 + $0x48] sm:$0xff] %v3617
      %3859 = vst [vmem:[%s339 + $0x60] sm:$0xff] %v3619
      %3860 = vst [vmem:[%s339 + $0x68] sm:$0xff] %v3621
      %3861 = vst [vmem:[%s339 + $0x80] sm:$0xff] %v3625
      %3862 = vst [vmem:[%s339 + $0x88] sm:$0xff] %v3627
      %3863 = vst [vmem:[%s339 + $0xa0] sm:$0xff] %v3629
      %3864 = vst [vmem:[%s339 + $0xa8] sm:$0xff] %v3631
      %3865 = vst [vmem:[%s339 + $0xc0] sm:$0xff] %v3635
      %3866 = vst [vmem:[%s339 + $0xc8] sm:$0xff] %v3637
      %3867 = vst [vmem:[%s339 + $0xe0] sm:$0xff] %v3639
      %3868 = vst [vmem:[%s339 + $0xe8] sm:$0xff] %v3641
      %3869 = vst [vmem:[%s339 + $0x100] sm:$0xff] %v3645
      %3870 = vst [vmem:[%s339 + $0x108] sm:$0xff] %v3647
      %3871 = vst [vmem:[%s339 + $0x120] sm:$0xff] %v3649
      %3872 = vst [vmem:[%s339 + $0x128] sm:$0xff] %v3651
      %3873 = vst [vmem:[%s339 + $0x140] sm:$0xff] %v3655
      %3874 = vst [vmem:[%s339 + $0x148] sm:$0xff] %v3657
      %3875 = vst [vmem:[%s339 + $0x160] sm:$0xff] %v3659
      %3876 = vst [vmem:[%s339 + $0x168] sm:$0xff] %v3661
      %3877 = vst [vmem:[%s339 + $0x180] sm:$0xff] %v3665
      %3878 = vst [vmem:[%s339 + $0x188] sm:$0xff] %v3667
      %3879 = vst [vmem:[%s339 + $0x1a0] sm:$0xff] %v3669
      %3880 = vst [vmem:[%s339 + $0x1a8] sm:$0xff] %v3671
      %3881 = vst [vmem:[%s339 + $0x1c0] sm:$0xff] %v3675
      %3882 = vst [vmem:[%s339 + $0x1c8] sm:$0xff] %v3677
      %3883 = vst [vmem:[%s339 + $0x1e0] sm:$0xff] %v3679
      %3884 = vst [vmem:[%s339 + $0x1e8] sm:$0xff] %v3681
      %3885 = vst [vmem:[%s339 + $0x200] sm:$0xff] %v3685
      %3886 = vst [vmem:[%s339 + $0x208] sm:$0xff] %v3687
      %3887 = vst [vmem:[%s339 + $0x220] sm:$0xff] %v3689
      %3888 = vst [vmem:[%s339 + $0x228] sm:$0xff] %v3691
      %3889 = vst [vmem:[%s339 + $0x240] sm:$0xff] %v3695
      %3890 = vst [vmem:[%s339 + $0x248] sm:$0xff] %v3697
      %3891 = vst [vmem:[%s339 + $0x260] sm:$0xff] %v3699
      %3892 = vst [vmem:[%s339 + $0x268] sm:$0xff] %v3701
      %3893 = vst [vmem:[%s339 + $0x280] sm:$0xff] %v3705
      %3894 = vst [vmem:[%s339 + $0x288] sm:$0xff] %v3707
      %3895 = vst [vmem:[%s339 + $0x2a0] sm:$0xff] %v3709
      %3896 = vst [vmem:[%s339 + $0x2a8] sm:$0xff] %v3711
      %3897 = vst [vmem:[%s339 + $0x2c0] sm:$0xff] %v3715
      %3898 = vst [vmem:[%s339 + $0x2c8] sm:$0xff] %v3717
      %3899 = vst [vmem:[%s339 + $0x2e0] sm:$0xff] %v3719
      %3900 = vst [vmem:[%s339 + $0x2e8] sm:$0xff] %v3721
      %3901 = vst [vmem:[%s339 + $0x300] sm:$0xff] %v3725
      %3902 = vst [vmem:[%s339 + $0x308] sm:$0xff] %v3727
      %3903 = vst [vmem:[%s339 + $0x320] sm:$0xff] %v3729
      %3904 = vst [vmem:[%s339 + $0x328] sm:$0xff] %v3731
      %3905 = vst [vmem:[%s339 + $0x340] sm:$0xff] %v3735
      %3906 = vst [vmem:[%s339 + $0x348] sm:$0xff] %v3737
      %3907 = vst [vmem:[%s339 + $0x360] sm:$0xff] %v3739
      %3908 = vst [vmem:[%s339 + $0x368] sm:$0xff] %v3741
      %3909 = vst [vmem:[%s339 + $0x380] sm:$0xff] %v3745
      %3910 = vst [vmem:[%s339 + $0x388] sm:$0xff] %v3747
      %3911 = vst [vmem:[%s339 + $0x3a0] sm:$0xff] %v3749
      %3912 = vst [vmem:[%s339 + $0x3a8] sm:$0xff] %v3751
      %3913 = vst [vmem:[%s339 + $0x3c0] sm:$0xff] %v3755
      %3914 = vst [vmem:[%s339 + $0x3c8] sm:$0xff] %v3757
      %3915 = vst [vmem:[%s339 + $0x3e0] sm:$0xff] %v3759
      %3916 = vst [vmem:[%s339 + $0x3e8] sm:$0xff] %v3761
      %3917 = vst [vmem:[%s339 + $0x400] sm:$0xff] %v3765
      %3918 = vst [vmem:[%s339 + $0x408] sm:$0xff] %v3767
      %3919 = vst [vmem:[%s339 + $0x420] sm:$0xff] %v3769
      %3920 = vst [vmem:[%s339 + $0x428] sm:$0xff] %v3771
      %3921 = vst [vmem:[%s339 + $0x440] sm:$0xff] %v3775
      %3922 = vst [vmem:[%s339 + $0x448] sm:$0xff] %v3777
      %3923 = vst [vmem:[%s339 + $0x460] sm:$0xff] %v3779
      %3924 = vst [vmem:[%s339 + $0x468] sm:$0xff] %v3781
      %3925 = vst [vmem:[%s339 + $0x480] sm:$0xff] %v3785
      %3926 = vst [vmem:[%s339 + $0x488] sm:$0xff] %v3787
      %3927 = vst [vmem:[%s339 + $0x4a0] sm:$0xff] %v3789
      %3928 = vst [vmem:[%s339 + $0x4a8] sm:$0xff] %v3791
      %3929 = vst [vmem:[%s339 + $0x4c0] sm:$0xff] %v3795
      %3930 = vst [vmem:[%s339 + $0x4c8] sm:$0xff] %v3797
      %3931 = vst [vmem:[%s339 + $0x4e0] sm:$0xff] %v3799
      %3932 = vst [vmem:[%s339 + $0x4e8] sm:$0xff] %v3801
      %3933 = vst [vmem:[%s339 + $0x500] sm:$0xff] %v3805
      %3934 = vst [vmem:[%s339 + $0x508] sm:$0xff] %v3807
      %3935 = vst [vmem:[%s339 + $0x520] sm:$0xff] %v3809
      %3936 = vst [vmem:[%s339 + $0x528] sm:$0xff] %v3811
      %3937 = vst [vmem:[%s339 + $0x540] sm:$0xff] %v3815
      %3938 = vst [vmem:[%s339 + $0x548] sm:$0xff] %v3817
      %3939 = vst [vmem:[%s339 + $0x560] sm:$0xff] %v3819
      %3940 = vst [vmem:[%s339 + $0x568] sm:$0xff] %v3821
      %3941 = vst [vmem:[%s339 + $0x580] sm:$0xff] %v3825
      %3942 = vst [vmem:[%s339 + $0x588] sm:$0xff] %v3827
      %3943 = vst [vmem:[%s339 + $0x5a0] sm:$0xff] %v3829
      %3944 = vst [vmem:[%s339 + $0x5a8] sm:$0xff] %v3831
      %3945 = vst [vmem:[%s339 + $0x5c0] sm:$0xff] %v3835
      %3946 = vst [vmem:[%s339 + $0x5c8] sm:$0xff] %v3837
      %3947 = vst [vmem:[%s339 + $0x5e0] sm:$0xff] %v3839
      %3948 = vst [vmem:[%s339 + $0x5e8] sm:$0xff] %v3841
      %3949 = vst [vmem:[%s339 + $0x600] sm:$0xff] %v3845
      %3950 = vst [vmem:[%s339 + $0x608] sm:$0xff] %v3847
      %3951 = vst [vmem:[%s339 + $0x620] sm:$0xff] %v3849
      %3952 = vst [vmem:[%s339 + $0x628] sm:$0xff] %v3851
      %3953 = vst [vmem:[%s339 + $0x10] sm:$0xff] %v2068
      %3954 = vst [vmem:[%s339 + $0x30] sm:$0xff] %v2069
      %3955 = vst [vmem:[%s339 + $0x50] sm:$0xff] %v2070
      %3956 = vst [vmem:[%s339 + $0x70] sm:$0xff] %v2071
      %3957 = vst [vmem:[%s339 + $0x90] sm:$0xff] %v2072
      %3958 = vst [vmem:[%s339 + $0xb0] sm:$0xff] %v2073
      %3959 = vst [vmem:[%s339 + $0xd0] sm:$0xff] %v2074
      %3960 = vst [vmem:[%s339 + $0xf0] sm:$0xff] %v2075
      %3961 = vst [vmem:[%s339 + $0x110] sm:$0xff] %v2076
      %3962 = vst [vmem:[%s339 + $0x130] sm:$0xff] %v2077
      %3963 = vst [vmem:[%s339 + $0x150] sm:$0xff] %v2078
      %3964 = vst [vmem:[%s339 + $0x170] sm:$0xff] %v2079
      %3965 = vst [vmem:[%s339 + $0x190] sm:$0xff] %v2080
      %3966 = vst [vmem:[%s339 + $0x1b0] sm:$0xff] %v2081
      %3967 = vst [vmem:[%s339 + $0x1d0] sm:$0xff] %v2082
      %3968 = vst [vmem:[%s339 + $0x1f0] sm:$0xff] %v2083
      %3969 = vst [vmem:[%s339 + $0x210] sm:$0xff] %v2084
      %3970 = vst [vmem:[%s339 + $0x230] sm:$0xff] %v2085
      %3971 = vst [vmem:[%s339 + $0x250] sm:$0xff] %v2086
      %3972 = vst [vmem:[%s339 + $0x270] sm:$0xff] %v2087
      %3973 = vst [vmem:[%s339 + $0x290] sm:$0xff] %v2088
      %3974 = vst [vmem:[%s339 + $0x2b0] sm:$0xff] %v2089
      %3975 = vst [vmem:[%s339 + $0x2d0] sm:$0xff] %v2090
      %3976 = vst [vmem:[%s339 + $0x2f0] sm:$0xff] %v2091
      %3977 = vst [vmem:[%s339 + $0x310] sm:$0xff] %v2092
      %3978 = vst [vmem:[%s339 + $0x330] sm:$0xff] %v2093
      %3979 = vst [vmem:[%s339 + $0x350] sm:$0xff] %v2094
      %3980 = vst [vmem:[%s339 + $0x370] sm:$0xff] %v2095
      %3981 = vst [vmem:[%s339 + $0x390] sm:$0xff] %v2096
      %3982 = vst [vmem:[%s339 + $0x3b0] sm:$0xff] %v2097
      %3983 = vst [vmem:[%s339 + $0x3d0] sm:$0xff] %v2098
      %3984 = vst [vmem:[%s339 + $0x3f0] sm:$0xff] %v2099
      %3985 = vst [vmem:[%s339 + $0x410] sm:$0xff] %v2100
      %3986 = vst [vmem:[%s339 + $0x430] sm:$0xff] %v2101
      %3987 = vst [vmem:[%s339 + $0x450] sm:$0xff] %v2102
      %3988 = vst [vmem:[%s339 + $0x470] sm:$0xff] %v2103
      %3989 = vst [vmem:[%s339 + $0x490] sm:$0xff] %v2104
      %3990 = vst [vmem:[%s339 + $0x4b0] sm:$0xff] %v2105
      %3991 = vst [vmem:[%s339 + $0x4d0] sm:$0xff] %v2106
      %3992 = vst [vmem:[%s339 + $0x4f0] sm:$0xff] %v2107
      %3993 = vst [vmem:[%s339 + $0x510] sm:$0xff] %v2108
      %3994 = vst [vmem:[%s339 + $0x530] sm:$0xff] %v2109
      %3995 = vst [vmem:[%s339 + $0x550] sm:$0xff] %v2110
      %3996 = vst [vmem:[%s339 + $0x570] sm:$0xff] %v2111
      %3997 = vst [vmem:[%s339 + $0x590] sm:$0xff] %v2112
      %3998 = vst [vmem:[%s339 + $0x5b0] sm:$0xff] %v2113
      %3999 = vst [vmem:[%s339 + $0x5d0] sm:$0xff] %v2114
      %4000 = vst [vmem:[%s339 + $0x5f0] sm:$0xff] %v2115
      %4001 = vst [vmem:[%s339 + $0x610] sm:$0xff] %v2116
      %4002 = vst [vmem:[%s339 + $0x630] sm:$0xff] %v2117
      %4003 = vst [vmem:[%s339 + $0x18] sm:$0xff] %v2536
      %4004 = vst [vmem:[%s339 + $0x38] sm:$0xff] %v2537
      %4005 = vst [vmem:[%s339 + $0x58] sm:$0xff] %v2538
      %4006 = vst [vmem:[%s339 + $0x78] sm:$0xff] %v2539
      %4007 = vst [vmem:[%s339 + $0x98] sm:$0xff] %v2540
      %4008 = vst [vmem:[%s339 + $0xb8] sm:$0xff] %v2541
      %4009 = vst [vmem:[%s339 + $0xd8] sm:$0xff] %v2542
      %4010 = vst [vmem:[%s339 + $0xf8] sm:$0xff] %v2543
      %4011 = vst [vmem:[%s339 + $0x118] sm:$0xff] %v2544
      %4012 = vst [vmem:[%s339 + $0x138] sm:$0xff] %v2545
      %4013 = vst [vmem:[%s339 + $0x158] sm:$0xff] %v2546
      %4014 = vst [vmem:[%s339 + $0x178] sm:$0xff] %v2547
      %4015 = vst [vmem:[%s339 + $0x198] sm:$0xff] %v2548
      %4016 = vst [vmem:[%s339 + $0x1b8] sm:$0xff] %v2549
      %4017 = vst [vmem:[%s339 + $0x1d8] sm:$0xff] %v2550
      %4018 = vst [vmem:[%s339 + $0x1f8] sm:$0xff] %v2551
      %4019 = vst [vmem:[%s339 + $0x218] sm:$0xff] %v2552
      %4020 = vst [vmem:[%s339 + $0x238] sm:$0xff] %v2553
      %4021 = vst [vmem:[%s339 + $0x258] sm:$0xff] %v2554
      %4022 = vst [vmem:[%s339 + $0x278] sm:$0xff] %v2555
      %4023 = vst [vmem:[%s339 + $0x298] sm:$0xff] %v2556
      %4024 = vst [vmem:[%s339 + $0x2b8] sm:$0xff] %v2557
      %4025 = vst [vmem:[%s339 + $0x2d8] sm:$0xff] %v2558
      %4026 = vst [vmem:[%s339 + $0x2f8] sm:$0xff] %v2559
      %4027 = vst [vmem:[%s339 + $0x318] sm:$0xff] %v2560
      %4028 = vst [vmem:[%s339 + $0x338] sm:$0xff] %v2561
      %4029 = vst [vmem:[%s339 + $0x358] sm:$0xff] %v2562
      %4030 = vst [vmem:[%s339 + $0x378] sm:$0xff] %v2563
      %4031 = vst [vmem:[%s339 + $0x398] sm:$0xff] %v2564
      %4032 = vst [vmem:[%s339 + $0x3b8] sm:$0xff] %v2565
      %4033 = vst [vmem:[%s339 + $0x3d8] sm:$0xff] %v2566
      %4034 = vst [vmem:[%s339 + $0x3f8] sm:$0xff] %v2567
      %4035 = vst [vmem:[%s339 + $0x418] sm:$0xff] %v2568
      %4036 = vst [vmem:[%s339 + $0x438] sm:$0xff] %v2569
      %4037 = vst [vmem:[%s339 + $0x458] sm:$0xff] %v2570
      %4038 = vst [vmem:[%s339 + $0x478] sm:$0xff] %v2571
      %4039 = vst [vmem:[%s339 + $0x498] sm:$0xff] %v2572
      %4040 = vst [vmem:[%s339 + $0x4b8] sm:$0xff] %v2573
      %4041 = vst [vmem:[%s339 + $0x4d8] sm:$0xff] %v2574
      %4042 = vst [vmem:[%s339 + $0x4f8] sm:$0xff] %v2575
      %4043 = vst [vmem:[%s339 + $0x518] sm:$0xff] %v2576
      %4044 = vst [vmem:[%s339 + $0x538] sm:$0xff] %v2577
      %4045 = vst [vmem:[%s339 + $0x558] sm:$0xff] %v2578
      %4046 = vst [vmem:[%s339 + $0x578] sm:$0xff] %v2579
      %4047 = vst [vmem:[%s339 + $0x598] sm:$0xff] %v2580
      %4048 = vst [vmem:[%s339 + $0x5b8] sm:$0xff] %v2581
      %4049 = vst [vmem:[%s339 + $0x5d8] sm:$0xff] %v2582
      %4050 = vst [vmem:[%s339 + $0x5f8] sm:$0xff] %v2583
      %4051 = vst [vmem:[%s339 + $0x618] sm:$0xff] %v2584
      %4052 = vst [vmem:[%s339 + $0x638] sm:$0xff] %v2585
      %v4053 = vadd.f32 %v3605, %v3609
      %v4054 = vadd.f32 %v4053, %v3615
      %v4055 = vadd.f32 %v4054, %v3619
      %v4056 = vadd.f32 %v4055, %v3625
      %v4057 = vadd.f32 %v4056, %v3629
      %v4058 = vadd.f32 %v4057, %v3635
      %v4059 = vadd.f32 %v4058, %v3639
      %v4060 = vadd.f32 %v4059, %v3645
      %v4061 = vadd.f32 %v4060, %v3649
      %v4062 = vadd.f32 %v4061, %v3655
      %v4063 = vadd.f32 %v4062, %v3659
      %v4064 = vadd.f32 %v4063, %v3665
      %v4065 = vadd.f32 %v4064, %v3669
      %v4066 = vadd.f32 %v4065, %v3675
      %v4067 = vadd.f32 %v4066, %v3679
      %v4068 = vadd.f32 %v4067, %v3685
      %v4069 = vadd.f32 %v4068, %v3689
      %v4070 = vadd.f32 %v4069, %v3695
      %v4071 = vadd.f32 %v4070, %v3699
      %v4072 = vadd.f32 %v4071, %v3705
      %v4073 = vadd.f32 %v4072, %v3709
      %v4074 = vadd.f32 %v4073, %v3715
      %v4075 = vadd.f32 %v4074, %v3719
      %v4076 = vadd.f32 %v4075, %v3725
      %v4077 = vadd.f32 %v4076, %v3729
      %v4078 = vadd.f32 %v4077, %v3735
      %v4079 = vadd.f32 %v4078, %v3739
      %v4080 = vadd.f32 %v4079, %v3745
      %v4081 = vadd.f32 %v4080, %v3749
      %v4082 = vadd.f32 %v4081, %v3755
      %v4083 = vadd.f32 %v4082, %v3759
      %v4084 = vadd.f32 %v4083, %v3765
      %v4085 = vadd.f32 %v4084, %v3769
      %v4086 = vadd.f32 %v4085, %v3775
      %v4087 = vadd.f32 %v4086, %v3779
      %v4088 = vadd.f32 %v4087, %v3785
      %v4089 = vadd.f32 %v4088, %v3789
      %v4090 = vadd.f32 %v4089, %v3795
      %v4091 = vadd.f32 %v4090, %v3799
      %v4092 = vadd.f32 %v4091, %v3805
      %v4093 = vadd.f32 %v4092, %v3809
      %v4094 = vadd.f32 %v4093, %v3815
      %v4095 = vadd.f32 %v4094, %v3819
      %v4096 = vadd.f32 %v4095, %v3825
      %v4097 = vadd.f32 %v4096, %v3829
      %v4098 = vadd.f32 %v4097, %v3835
      %v4099 = vadd.f32 %v4098, %v3839
      %v4100 = vadd.f32 %v4099, %v3845
      %v4101 = vadd.f32 %v4100, %v3849
      %v4102 = vrot.slane %v4101, 4
      %v4103 = vadd.f32 %v4101, %v4102
      %v4104 = vrot.slane %v4103, 2
      %v4105 = vadd.f32 %v4103, %v4104
      %v4106 = vrot.slane %v4105, 1
      %v4107 = vadd.f32 %v4105, %v4106
      %v4108 = vadd.f32 %v3607, %v3611
      %v4109 = vadd.f32 %v4108, %v3617
      %v4110 = vadd.f32 %v4109, %v3621
      %v4111 = vadd.f32 %v4110, %v3627
      %v4112 = vadd.f32 %v4111, %v3631
      %v4113 = vadd.f32 %v4112, %v3637
      %v4114 = vadd.f32 %v4113, %v3641
      %v4115 = vadd.f32 %v4114, %v3647
      %v4116 = vadd.f32 %v4115, %v3651
      %v4117 = vadd.f32 %v4116, %v3657
      %v4118 = vadd.f32 %v4117, %v3661
      %v4119 = vadd.f32 %v4118, %v3667
      %v4120 = vadd.f32 %v4119, %v3671
      %v4121 = vadd.f32 %v4120, %v3677
      %v4122 = vadd.f32 %v4121, %v3681
      %v4123 = vadd.f32 %v4122, %v3687
      %v4124 = vadd.f32 %v4123, %v3691
      %v4125 = vadd.f32 %v4124, %v3697
      %v4126 = vadd.f32 %v4125, %v3701
      %v4127 = vadd.f32 %v4126, %v3707
      %v4128 = vadd.f32 %v4127, %v3711
      %v4129 = vadd.f32 %v4128, %v3717
      %v4130 = vadd.f32 %v4129, %v3721
      %v4131 = vadd.f32 %v4130, %v3727
      %v4132 = vadd.f32 %v4131, %v3731
      %v4133 = vadd.f32 %v4132, %v3737
      %v4134 = vadd.f32 %v4133, %v3741
      %v4135 = vadd.f32 %v4134, %v3747
      %v4136 = vadd.f32 %v4135, %v3751
      %v4137 = vadd.f32 %v4136, %v3757
      %v4138 = vadd.f32 %v4137, %v3761
      %v4139 = vadd.f32 %v4138, %v3767
      %v4140 = vadd.f32 %v4139, %v3771
      %v4141 = vadd.f32 %v4140, %v3777
      %v4142 = vadd.f32 %v4141, %v3781
      %v4143 = vadd.f32 %v4142, %v3787
      %v4144 = vadd.f32 %v4143, %v3791
      %v4145 = vadd.f32 %v4144, %v3797
      %v4146 = vadd.f32 %v4145, %v3801
      %v4147 = vadd.f32 %v4146, %v3807
      %v4148 = vadd.f32 %v4147, %v3811
      %v4149 = vadd.f32 %v4148, %v3817
      %v4150 = vadd.f32 %v4149, %v3821
      %v4151 = vadd.f32 %v4150, %v3827
      %v4152 = vadd.f32 %v4151, %v3831
      %v4153 = vadd.f32 %v4152, %v3837
      %v4154 = vadd.f32 %v4153, %v3841
      %v4155 = vadd.f32 %v4154, %v3847
      %v4156 = vadd.f32 %v4155, %v3851
      %v4157 = vrot.slane %v4156, 4
      %v4158 = vadd.f32 %v4156, %v4157
      %v4159 = vrot.slane %v4158, 2
      %v4160 = vadd.f32 %v4158, %v4159
      %v4161 = vrot.slane %v4160, 1
      %v4162 = vadd.f32 %v4160, %v4161
      %v4163 = vadd.f32 %v2068, %v2069
      %v4164 = vadd.f32 %v4163, %v2070
      %v4165 = vadd.f32 %v4164, %v2071
      %v4166 = vadd.f32 %v4165, %v2072
      %v4167 = vadd.f32 %v4166, %v2073
      %v4168 = vadd.f32 %v4167, %v2074
      %v4169 = vadd.f32 %v4168, %v2075
      %v4170 = vadd.f32 %v4169, %v2076
      %v4171 = vadd.f32 %v4170, %v2077
      %v4172 = vadd.f32 %v4171, %v2078
      %v4173 = vadd.f32 %v4172, %v2079
      %v4174 = vadd.f32 %v4173, %v2080
      %v4175 = vadd.f32 %v4174, %v2081
      %v4176 = vadd.f32 %v4175, %v2082
      %v4177 = vadd.f32 %v4176, %v2083
      %v4178 = vadd.f32 %v4177, %v2084
      %v4179 = vadd.f32 %v4178, %v2085
      %v4180 = vadd.f32 %v4179, %v2086
      %v4181 = vadd.f32 %v4180, %v2087
      %v4182 = vadd.f32 %v4181, %v2088
      %v4183 = vadd.f32 %v4182, %v2089
      %v4184 = vadd.f32 %v4183, %v2090
      %v4185 = vadd.f32 %v4184, %v2091
      %v4186 = vadd.f32 %v4185, %v2092
      %v4187 = vadd.f32 %v4186, %v2093
      %v4188 = vadd.f32 %v4187, %v2094
      %v4189 = vadd.f32 %v4188, %v2095
      %v4190 = vadd.f32 %v4189, %v2096
      %v4191 = vadd.f32 %v4190, %v2097
      %v4192 = vadd.f32 %v4191, %v2098
      %v4193 = vadd.f32 %v4192, %v2099
      %v4194 = vadd.f32 %v4193, %v2100
      %v4195 = vadd.f32 %v4194, %v2101
      %v4196 = vadd.f32 %v4195, %v2102
      %v4197 = vadd.f32 %v4196, %v2103
      %v4198 = vadd.f32 %v4197, %v2104
      %v4199 = vadd.f32 %v4198, %v2105
      %v4200 = vadd.f32 %v4199, %v2106
      %v4201 = vadd.f32 %v4200, %v2107
      %v4202 = vadd.f32 %v4201, %v2108
      %v4203 = vadd.f32 %v4202, %v2109
      %v4204 = vadd.f32 %v4203, %v2110
      %v4205 = vadd.f32 %v4204, %v2111
      %v4206 = vadd.f32 %v4205, %v2112
      %v4207 = vadd.f32 %v4206, %v2113
      %v4208 = vadd.f32 %v4207, %v2114
      %v4209 = vadd.f32 %v4208, %v2115
      %v4210 = vadd.f32 %v4209, %v2116
      %v4211 = vadd.f32 %v4210, %v2117
      %v4212 = vrot.slane %v4211, 4
      %v4213 = vadd.f32 %v4211, %v4212
      %v4214 = vrot.slane %v4213, 2
      %v4215 = vadd.f32 %v4213, %v4214
      %v4216 = vrot.slane %v4215, 1
      %v4217 = vadd.f32 %v4215, %v4216
      %v4218 = vadd.f32 %v2536, %v2537
      %v4219 = vadd.f32 %v4218, %v2538
      %v4220 = vadd.f32 %v4219, %v2539
      %v4221 = vadd.f32 %v4220, %v2540
      %v4222 = vadd.f32 %v4221, %v2541
      %v4223 = vadd.f32 %v4222, %v2542
      %v4224 = vadd.f32 %v4223, %v2543
      %v4225 = vadd.f32 %v4224, %v2544
      %v4226 = vadd.f32 %v4225, %v2545
      %v4227 = vadd.f32 %v4226, %v2546
      %v4228 = vadd.f32 %v4227, %v2547
      %v4229 = vadd.f32 %v4228, %v2548
      %v4230 = vadd.f32 %v4229, %v2549
      %v4231 = vadd.f32 %v4230, %v2550
      %v4232 = vadd.f32 %v4231, %v2551
      %v4233 = vadd.f32 %v4232, %v2552
      %v4234 = vadd.f32 %v4233, %v2553
      %v4235 = vadd.f32 %v4234, %v2554
      %v4236 = vadd.f32 %v4235, %v2555
      %v4237 = vadd.f32 %v4236, %v2556
      %v4238 = vadd.f32 %v4237, %v2557
      %v4239 = vadd.f32 %v4238, %v2558
      %v4240 = vadd.f32 %v4239, %v2559
      %v4241 = vadd.f32 %v4240, %v2560
      %v4242 = vadd.f32 %v4241, %v2561
      %v4243 = vadd.f32 %v4242, %v2562
      %v4244 = vadd.f32 %v4243, %v2563
      %v4245 = vadd.f32 %v4244, %v2564
      %v4246 = vadd.f32 %v4245, %v2565
      %v4247 = vadd.f32 %v4246, %v2566
      %v4248 = vadd.f32 %v4247, %v2567
      %v4249 = vadd.f32 %v4248, %v2568
      %v4250 = vadd.f32 %v4249, %v2569
      %v4251 = vadd.f32 %v4250, %v2570
      %v4252 = vadd.f32 %v4251, %v2571
      %v4253 = vadd.f32 %v4252, %v2572
      %v4254 = vadd.f32 %v4253, %v2573
      %v4255 = vadd.f32 %v4254, %v2574
      %v4256 = vadd.f32 %v4255, %v2575
      %v4257 = vadd.f32 %v4256, %v2576
      %v4258 = vadd.f32 %v4257, %v2577
      %v4259 = vadd.f32 %v4258, %v2578
      %v4260 = vadd.f32 %v4259, %v2579
      %v4261 = vadd.f32 %v4260, %v2580
      %v4262 = vadd.f32 %v4261, %v2581
      %v4263 = vadd.f32 %v4262, %v2582
      %v4264 = vadd.f32 %v4263, %v2583
      %v4265 = vadd.f32 %v4264, %v2584
      %v4266 = vadd.f32 %v4265, %v2585
      %v4267 = vrot.slane %v4266, 4
      %v4268 = vadd.f32 %v4266, %v4267
      %v4269 = vrot.slane %v4268, 2
      %v4270 = vadd.f32 %v4268, %v4269
      %v4271 = vrot.slane %v4270, 1
      %v4272 = vadd.f32 %v4270, %v4271
      %v4273 = vmul.f32 %v4107, 0.0025
      %v4274 = vmul.f32 %v4162, 0.0025
      %v4275 = vmul.f32 %v4217, 0.0025
      %v4276 = vmul.f32 %v4272, 0.0025
      %v4277 = vmax.f32 %v4273, 0.0
      %v4278 = vmax.f32 %v4274, 0.0
      %v4279 = vmax.f32 %v4275, 0.0
      %v4280 = vmax.f32 %v4276, 0.0
      %v4281 = vpack.c.bf16 %v4277, %v4277
      %v4282 = vpack.c.bf16 %v4278, %v4278
      %v4283 = vpack.c.bf16 %v4279, %v4279
      %v4284 = vpack.c.bf16 %v4280, %v4280
      %v4285 = vld [vmem:[%s6] sm:$0xff]
      %v4286 = vld [vmem:[%s6 + $0x8] sm:$0xff]
      %v4287 = vld [vmem:[%s6 + $0x10] sm:$0xff]
      %v4288 = vld [vmem:[%s6 + $0x18] sm:$0xff]
      %v4289 = vld [vmem:[%s6 + $0x20] sm:$0xff]
      %v4290 = vld [vmem:[%s6 + $0x28] sm:$0xff]
      %v4291 = vld [vmem:[%s6 + $0x30] sm:$0xff]
      %v4292 = vld [vmem:[%s6 + $0x38] sm:$0xff]
      %v4293 = vld [vmem:[%s6 + $0x40] sm:$0xff]
      %v4294 = vld [vmem:[%s6 + $0x48] sm:$0xff]
      %v4295 = vld [vmem:[%s6 + $0x50] sm:$0xff]
      %v4296 = vld [vmem:[%s6 + $0x58] sm:$0xff]
      %v4297 = vld [vmem:[%s6 + $0x60] sm:$0xff]
      %v4298 = vld [vmem:[%s6 + $0x68] sm:$0xff]
      %v4299 = vld [vmem:[%s6 + $0x70] sm:$0xff]
      %v4300 = vld [vmem:[%s6 + $0x78] sm:$0xff]
      %v4301 = vld [vmem:[%s6 + $0x80] sm:$0xff]
      %v4302 = vld [vmem:[%s6 + $0x88] sm:$0xff]
      %v4303 = vld [vmem:[%s6 + $0x90] sm:$0xff]
      %v4304 = vld [vmem:[%s6 + $0x98] sm:$0xff]
      %v4305 = vld [vmem:[%s6 + $0xa0] sm:$0xff]
      %v4306 = vld [vmem:[%s6 + $0xa8] sm:$0xff]
      %v4307 = vld [vmem:[%s6 + $0xb0] sm:$0xff]
      %v4308 = vld [vmem:[%s6 + $0xb8] sm:$0xff]
      %v4309 = vld [vmem:[%s6 + $0xc0] sm:$0xff]
      %v4310 = vld [vmem:[%s6 + $0xc8] sm:$0xff]
      %v4311 = vld [vmem:[%s6 + $0xd0] sm:$0xff]
      %v4312 = vld [vmem:[%s6 + $0xd8] sm:$0xff]
      %v4313 = vld [vmem:[%s6 + $0xe0] sm:$0xff]
      %v4314 = vld [vmem:[%s6 + $0xe8] sm:$0xff]
      %v4315 = vld [vmem:[%s6 + $0xf0] sm:$0xff]
      %v4316 = vld [vmem:[%s6 + $0xf8] sm:$0xff]
      %v4317 = vld [vmem:[%s6 + $0x100] sm:$0xff]
      %v4318 = vld [vmem:[%s6 + $0x108] sm:$0xff]
      %v4319 = vld [vmem:[%s6 + $0x110] sm:$0xff]
      %v4320 = vld [vmem:[%s6 + $0x118] sm:$0xff]
      %v4321 = vld [vmem:[%s6 + $0x120] sm:$0xff]
      %v4322 = vld [vmem:[%s6 + $0x128] sm:$0xff]
      %v4323 = vld [vmem:[%s6 + $0x130] sm:$0xff]
      %v4324 = vld [vmem:[%s6 + $0x138] sm:$0xff]
      %v4325 = vld [vmem:[%s6 + $0x140] sm:$0xff]
      %v4326 = vld [vmem:[%s6 + $0x148] sm:$0xff]
      %v4327 = vld [vmem:[%s6 + $0x150] sm:$0xff]
      %v4328 = vld [vmem:[%s6 + $0x158] sm:$0xff]
      %v4329 = vld [vmem:[%s6 + $0x160] sm:$0xff]
      %v4330 = vld [vmem:[%s6 + $0x168] sm:$0xff]
      %v4331 = vld [vmem:[%s6 + $0x170] sm:$0xff]
      %v4332 = vld [vmem:[%s6 + $0x178] sm:$0xff]
      %v4333 = vld [vmem:[%s6 + $0x180] sm:$0xff]
      %v4334 = vld [vmem:[%s6 + $0x188] sm:$0xff]
      %v4335 = vld [vmem:[%s6 + $0x190] sm:$0xff]
      %v4336 = vld [vmem:[%s6 + $0x198] sm:$0xff]
      %v4337 = vld [vmem:[%s6 + $0x1a0] sm:$0xff]
      %v4338 = vld [vmem:[%s6 + $0x1a8] sm:$0xff]
      %v4339 = vld [vmem:[%s6 + $0x1b0] sm:$0xff]
      %v4340 = vld [vmem:[%s6 + $0x1b8] sm:$0xff]
      %v4341 = vld [vmem:[%s6 + $0x1c0] sm:$0xff]
      %v4342 = vld [vmem:[%s6 + $0x1c8] sm:$0xff]
      %v4343 = vld [vmem:[%s6 + $0x1d0] sm:$0xff]
      %v4344 = vld [vmem:[%s6 + $0x1d8] sm:$0xff]
      %v4345 = vld [vmem:[%s6 + $0x1e0] sm:$0xff]
      %v4346 = vld [vmem:[%s6 + $0x1e8] sm:$0xff]
      %v4347 = vld [vmem:[%s6 + $0x1f0] sm:$0xff]
      %v4348 = vld [vmem:[%s6 + $0x1f8] sm:$0xff]
      %v4349 = vld [vmem:[%s6 + $0x200] sm:$0xff]
      %v4350 = vld [vmem:[%s6 + $0x208] sm:$0xff]
      %v4351 = vld [vmem:[%s6 + $0x210] sm:$0xff]
      %v4352 = vld [vmem:[%s6 + $0x218] sm:$0xff]
      %v4353 = vld [vmem:[%s6 + $0x220] sm:$0xff]
      %v4354 = vld [vmem:[%s6 + $0x228] sm:$0xff]
      %v4355 = vld [vmem:[%s6 + $0x230] sm:$0xff]
      %v4356 = vld [vmem:[%s6 + $0x238] sm:$0xff]
      %v4357 = vld [vmem:[%s6 + $0x240] sm:$0xff]
      %v4358 = vld [vmem:[%s6 + $0x248] sm:$0xff]
      %v4359 = vld [vmem:[%s6 + $0x250] sm:$0xff]
      %v4360 = vld [vmem:[%s6 + $0x258] sm:$0xff]
      %v4361 = vld [vmem:[%s6 + $0x260] sm:$0xff]
      %v4362 = vld [vmem:[%s6 + $0x268] sm:$0xff]
      %v4363 = vld [vmem:[%s6 + $0x270] sm:$0xff]
      %v4364 = vld [vmem:[%s6 + $0x278] sm:$0xff]
      %v4365 = vld [vmem:[%s6 + $0x280] sm:$0xff]
      %v4366 = vld [vmem:[%s6 + $0x288] sm:$0xff]
      %v4367 = vld [vmem:[%s6 + $0x290] sm:$0xff]
      %v4368 = vld [vmem:[%s6 + $0x298] sm:$0xff]
      %v4369 = vld [vmem:[%s6 + $0x2a0] sm:$0xff]
      %v4370 = vld [vmem:[%s6 + $0x2a8] sm:$0xff]
      %v4371 = vld [vmem:[%s6 + $0x2b0] sm:$0xff]
      %v4372 = vld [vmem:[%s6 + $0x2b8] sm:$0xff]
      %v4373 = vld [vmem:[%s6 + $0x2c0] sm:$0xff]
      %v4374 = vld [vmem:[%s6 + $0x2c8] sm:$0xff]
      %v4375 = vld [vmem:[%s6 + $0x2d0] sm:$0xff]
      %v4376 = vld [vmem:[%s6 + $0x2d8] sm:$0xff]
      %v4377 = vld [vmem:[%s6 + $0x2e0] sm:$0xff]
      %v4378 = vld [vmem:[%s6 + $0x2e8] sm:$0xff]
      %v4379 = vld [vmem:[%s6 + $0x2f0] sm:$0xff]
      %v4380 = vld [vmem:[%s6 + $0x2f8] sm:$0xff]
      %v4381 = vld [vmem:[%s6 + $0x300] sm:$0xff]
      %v4382 = vld [vmem:[%s6 + $0x308] sm:$0xff]
      %v4383 = vld [vmem:[%s6 + $0x310] sm:$0xff]
      %v4384 = vld [vmem:[%s6 + $0x318] sm:$0xff]
      %v4385 = vld [vmem:[%s6 + $0x320] sm:$0xff]
      %v4386 = vld [vmem:[%s6 + $0x328] sm:$0xff]
      %v4387 = vld [vmem:[%s6 + $0x330] sm:$0xff]
      %v4388 = vld [vmem:[%s6 + $0x338] sm:$0xff]
      %v4389 = vld [vmem:[%s6 + $0x340] sm:$0xff]
      %v4390 = vld [vmem:[%s6 + $0x348] sm:$0xff]
      %v4391 = vld [vmem:[%s6 + $0x350] sm:$0xff]
      %v4392 = vld [vmem:[%s6 + $0x358] sm:$0xff]
      %v4393 = vld [vmem:[%s6 + $0x360] sm:$0xff]
      %v4394 = vld [vmem:[%s6 + $0x368] sm:$0xff]
      %v4395 = vld [vmem:[%s6 + $0x370] sm:$0xff]
      %v4396 = vld [vmem:[%s6 + $0x378] sm:$0xff]
      %v4397 = vld [vmem:[%s6 + $0x380] sm:$0xff]
      %v4398 = vld [vmem:[%s6 + $0x388] sm:$0xff]
      %v4399 = vld [vmem:[%s6 + $0x390] sm:$0xff]
      %v4400 = vld [vmem:[%s6 + $0x398] sm:$0xff]
      %v4401 = vld [vmem:[%s6 + $0x3a0] sm:$0xff]
      %v4402 = vld [vmem:[%s6 + $0x3a8] sm:$0xff]
      %v4403 = vld [vmem:[%s6 + $0x3b0] sm:$0xff]
      %v4404 = vld [vmem:[%s6 + $0x3b8] sm:$0xff]
      %v4405 = vld [vmem:[%s6 + $0x3c0] sm:$0xff]
      %v4406 = vld [vmem:[%s6 + $0x3c8] sm:$0xff]
      %v4407 = vld [vmem:[%s6 + $0x3d0] sm:$0xff]
      %v4408 = vld [vmem:[%s6 + $0x3d8] sm:$0xff]
      %v4409 = vld [vmem:[%s6 + $0x3e0] sm:$0xff]
      %v4410 = vld [vmem:[%s6 + $0x3e8] sm:$0xff]
      %v4411 = vld [vmem:[%s6 + $0x3f0] sm:$0xff]
      %v4412 = vld [vmem:[%s6 + $0x3f8] sm:$0xff]
      %v4413 = vld [vmem:[%s7] sm:$0xf]
      %v4542 = vunpack.c.l.b16 %v4285
      %v4543 = vunpack.c.h.b16 %v4285
      %v4544 = vunpack.c.l.b16 %v4286
      %v4545 = vunpack.c.h.b16 %v4286
      %v4546 = vunpack.c.l.b16 %v4287
      %v4547 = vunpack.c.h.b16 %v4287
      %v4548 = vunpack.c.l.b16 %v4288
      %v4549 = vunpack.c.h.b16 %v4288
      %v4550 = vunpack.c.l.b16 %v4289
      %v4551 = vunpack.c.h.b16 %v4289
      %v4552 = vunpack.c.l.b16 %v4290
      %v4553 = vunpack.c.h.b16 %v4290
      %v4554 = vunpack.c.l.b16 %v4291
      %v4555 = vunpack.c.h.b16 %v4291
      %v4556 = vunpack.c.l.b16 %v4292
      %v4557 = vunpack.c.h.b16 %v4292
      %v4558 = vunpack.c.l.b16 %v4293
      %v4559 = vunpack.c.h.b16 %v4293
      %v4560 = vunpack.c.l.b16 %v4294
      %v4561 = vunpack.c.h.b16 %v4294
      %v4562 = vunpack.c.l.b16 %v4295
      %v4563 = vunpack.c.h.b16 %v4295
      %v4564 = vunpack.c.l.b16 %v4296
      %v4565 = vunpack.c.h.b16 %v4296
      %v4566 = vunpack.c.l.b16 %v4297
      %v4567 = vunpack.c.h.b16 %v4297
      %v4568 = vunpack.c.l.b16 %v4298
      %v4569 = vunpack.c.h.b16 %v4298
      %v4570 = vunpack.c.l.b16 %v4299
      %v4571 = vunpack.c.h.b16 %v4299
      %v4572 = vunpack.c.l.b16 %v4300
      %v4573 = vunpack.c.h.b16 %v4300
      %v4574 = vunpack.c.l.b16 %v4301
      %v4575 = vunpack.c.h.b16 %v4301
      %v4576 = vunpack.c.l.b16 %v4302
      %v4577 = vunpack.c.h.b16 %v4302
      %v4578 = vunpack.c.l.b16 %v4303
      %v4579 = vunpack.c.h.b16 %v4303
      %v4580 = vunpack.c.l.b16 %v4304
      %v4581 = vunpack.c.h.b16 %v4304
      %v4582 = vunpack.c.l.b16 %v4305
      %v4583 = vunpack.c.h.b16 %v4305
      %v4584 = vunpack.c.l.b16 %v4306
      %v4585 = vunpack.c.h.b16 %v4306
      %v4586 = vunpack.c.l.b16 %v4307
      %v4587 = vunpack.c.h.b16 %v4307
      %v4588 = vunpack.c.l.b16 %v4308
      %v4589 = vunpack.c.h.b16 %v4308
      %v4590 = vunpack.c.l.b16 %v4309
      %v4591 = vunpack.c.h.b16 %v4309
      %v4592 = vunpack.c.l.b16 %v4310
      %v4593 = vunpack.c.h.b16 %v4310
      %v4594 = vunpack.c.l.b16 %v4311
      %v4595 = vunpack.c.h.b16 %v4311
      %v4596 = vunpack.c.l.b16 %v4312
      %v4597 = vunpack.c.h.b16 %v4312
      %v4598 = vunpack.c.l.b16 %v4313
      %v4599 = vunpack.c.h.b16 %v4313
      %v4600 = vunpack.c.l.b16 %v4314
      %v4601 = vunpack.c.h.b16 %v4314
      %v4602 = vunpack.c.l.b16 %v4315
      %v4603 = vunpack.c.h.b16 %v4315
      %v4604 = vunpack.c.l.b16 %v4316
      %v4605 = vunpack.c.h.b16 %v4316
      %v4606 = vunpack.c.l.b16 %v4317
      %v4607 = vunpack.c.h.b16 %v4317
      %v4608 = vunpack.c.l.b16 %v4318
      %v4609 = vunpack.c.h.b16 %v4318
      %v4610 = vunpack.c.l.b16 %v4319
      %v4611 = vunpack.c.h.b16 %v4319
      %v4612 = vunpack.c.l.b16 %v4320
      %v4613 = vunpack.c.h.b16 %v4320
      %v4614 = vunpack.c.l.b16 %v4321
      %v4615 = vunpack.c.h.b16 %v4321
      %v4616 = vunpack.c.l.b16 %v4322
      %v4617 = vunpack.c.h.b16 %v4322
      %v4618 = vunpack.c.l.b16 %v4323
      %v4619 = vunpack.c.h.b16 %v4323
      %v4620 = vunpack.c.l.b16 %v4324
      %v4621 = vunpack.c.h.b16 %v4324
      %v4622 = vunpack.c.l.b16 %v4325
      %v4623 = vunpack.c.h.b16 %v4325
      %v4624 = vunpack.c.l.b16 %v4326
      %v4625 = vunpack.c.h.b16 %v4326
      %v4626 = vunpack.c.l.b16 %v4327
      %v4627 = vunpack.c.h.b16 %v4327
      %v4628 = vunpack.c.l.b16 %v4328
      %v4629 = vunpack.c.h.b16 %v4328
      %v4630 = vunpack.c.l.b16 %v4329
      %v4631 = vunpack.c.h.b16 %v4329
      %v4632 = vunpack.c.l.b16 %v4330
      %v4633 = vunpack.c.h.b16 %v4330
      %v4634 = vunpack.c.l.b16 %v4331
      %v4635 = vunpack.c.h.b16 %v4331
      %v4636 = vunpack.c.l.b16 %v4332
      %v4637 = vunpack.c.h.b16 %v4332
      %v4638 = vunpack.c.l.b16 %v4333
      %v4639 = vunpack.c.h.b16 %v4333
      %v4640 = vunpack.c.l.b16 %v4334
      %v4641 = vunpack.c.h.b16 %v4334
      %v4642 = vunpack.c.l.b16 %v4335
      %v4643 = vunpack.c.h.b16 %v4335
      %v4644 = vunpack.c.l.b16 %v4336
      %v4645 = vunpack.c.h.b16 %v4336
      %v4646 = vunpack.c.l.b16 %v4337
      %v4647 = vunpack.c.h.b16 %v4337
      %v4648 = vunpack.c.l.b16 %v4338
      %v4649 = vunpack.c.h.b16 %v4338
      %v4650 = vunpack.c.l.b16 %v4339
      %v4651 = vunpack.c.h.b16 %v4339
      %v4652 = vunpack.c.l.b16 %v4340
      %v4653 = vunpack.c.h.b16 %v4340
      %v4654 = vunpack.c.l.b16 %v4341
      %v4655 = vunpack.c.h.b16 %v4341
      %v4656 = vunpack.c.l.b16 %v4342
      %v4657 = vunpack.c.h.b16 %v4342
      %v4658 = vunpack.c.l.b16 %v4343
      %v4659 = vunpack.c.h.b16 %v4343
      %v4660 = vunpack.c.l.b16 %v4344
      %v4661 = vunpack.c.h.b16 %v4344
      %v4662 = vunpack.c.l.b16 %v4345
      %v4663 = vunpack.c.h.b16 %v4345
      %v4664 = vunpack.c.l.b16 %v4346
      %v4665 = vunpack.c.h.b16 %v4346
      %v4666 = vunpack.c.l.b16 %v4347
      %v4667 = vunpack.c.h.b16 %v4347
      %v4668 = vunpack.c.l.b16 %v4348
      %v4669 = vunpack.c.h.b16 %v4348
      %v4670 = vunpack.c.l.b16 %v4349
      %v4671 = vunpack.c.h.b16 %v4349
      %v4672 = vunpack.c.l.b16 %v4350
      %v4673 = vunpack.c.h.b16 %v4350
      %v4674 = vunpack.c.l.b16 %v4351
      %v4675 = vunpack.c.h.b16 %v4351
      %v4676 = vunpack.c.l.b16 %v4352
      %v4677 = vunpack.c.h.b16 %v4352
      %v4678 = vunpack.c.l.b16 %v4353
      %v4679 = vunpack.c.h.b16 %v4353
      %v4680 = vunpack.c.l.b16 %v4354
      %v4681 = vunpack.c.h.b16 %v4354
      %v4682 = vunpack.c.l.b16 %v4355
      %v4683 = vunpack.c.h.b16 %v4355
      %v4684 = vunpack.c.l.b16 %v4356
      %v4685 = vunpack.c.h.b16 %v4356
      %v4686 = vunpack.c.l.b16 %v4357
      %v4687 = vunpack.c.h.b16 %v4357
      %v4688 = vunpack.c.l.b16 %v4358
      %v4689 = vunpack.c.h.b16 %v4358
      %v4690 = vunpack.c.l.b16 %v4359
      %v4691 = vunpack.c.h.b16 %v4359
      %v4692 = vunpack.c.l.b16 %v4360
      %v4693 = vunpack.c.h.b16 %v4360
      %v4694 = vunpack.c.l.b16 %v4361
      %v4695 = vunpack.c.h.b16 %v4361
      %v4696 = vunpack.c.l.b16 %v4362
      %v4697 = vunpack.c.h.b16 %v4362
      %v4698 = vunpack.c.l.b16 %v4363
      %v4699 = vunpack.c.h.b16 %v4363
      %v4700 = vunpack.c.l.b16 %v4364
      %v4701 = vunpack.c.h.b16 %v4364
      %v4702 = vunpack.c.l.b16 %v4365
      %v4703 = vunpack.c.h.b16 %v4365
      %v4704 = vunpack.c.l.b16 %v4366
      %v4705 = vunpack.c.h.b16 %v4366
      %v4706 = vunpack.c.l.b16 %v4367
      %v4707 = vunpack.c.h.b16 %v4367
      %v4708 = vunpack.c.l.b16 %v4368
      %v4709 = vunpack.c.h.b16 %v4368
      %v4710 = vunpack.c.l.b16 %v4369
      %v4711 = vunpack.c.h.b16 %v4369
      %v4712 = vunpack.c.l.b16 %v4370
      %v4713 = vunpack.c.h.b16 %v4370
      %v4714 = vunpack.c.l.b16 %v4371
      %v4715 = vunpack.c.h.b16 %v4371
      %v4716 = vunpack.c.l.b16 %v4372
      %v4717 = vunpack.c.h.b16 %v4372
      %v4718 = vunpack.c.l.b16 %v4373
      %v4719 = vunpack.c.h.b16 %v4373
      %v4720 = vunpack.c.l.b16 %v4374
      %v4721 = vunpack.c.h.b16 %v4374
      %v4722 = vunpack.c.l.b16 %v4375
      %v4723 = vunpack.c.h.b16 %v4375
      %v4724 = vunpack.c.l.b16 %v4376
      %v4725 = vunpack.c.h.b16 %v4376
      %v4726 = vunpack.c.l.b16 %v4377
      %v4727 = vunpack.c.h.b16 %v4377
      %v4728 = vunpack.c.l.b16 %v4378
      %v4729 = vunpack.c.h.b16 %v4378
      %v4730 = vunpack.c.l.b16 %v4379
      %v4731 = vunpack.c.h.b16 %v4379
      %v4732 = vunpack.c.l.b16 %v4380
      %v4733 = vunpack.c.h.b16 %v4380
      %v4734 = vunpack.c.l.b16 %v4381
      %v4735 = vunpack.c.h.b16 %v4381
      %v4736 = vunpack.c.l.b16 %v4382
      %v4737 = vunpack.c.h.b16 %v4382
      %v4738 = vunpack.c.l.b16 %v4383
      %v4739 = vunpack.c.h.b16 %v4383
      %v4740 = vunpack.c.l.b16 %v4384
      %v4741 = vunpack.c.h.b16 %v4384
      %v4742 = vunpack.c.l.b16 %v4385
      %v4743 = vunpack.c.h.b16 %v4385
      %v4744 = vunpack.c.l.b16 %v4386
      %v4745 = vunpack.c.h.b16 %v4386
      %v4746 = vunpack.c.l.b16 %v4387
      %v4747 = vunpack.c.h.b16 %v4387
      %v4748 = vunpack.c.l.b16 %v4388
      %v4749 = vunpack.c.h.b16 %v4388
      %v4750 = vunpack.c.l.b16 %v4389
      %v4751 = vunpack.c.h.b16 %v4389
      %v4752 = vunpack.c.l.b16 %v4390
      %v4753 = vunpack.c.h.b16 %v4390
      %v4754 = vunpack.c.l.b16 %v4391
      %v4755 = vunpack.c.h.b16 %v4391
      %v4756 = vunpack.c.l.b16 %v4392
      %v4757 = vunpack.c.h.b16 %v4392
      %v4758 = vunpack.c.l.b16 %v4393
      %v4759 = vunpack.c.h.b16 %v4393
      %v4760 = vunpack.c.l.b16 %v4394
      %v4761 = vunpack.c.h.b16 %v4394
      %v4762 = vunpack.c.l.b16 %v4395
      %v4763 = vunpack.c.h.b16 %v4395
      %v4764 = vunpack.c.l.b16 %v4396
      %v4765 = vunpack.c.h.b16 %v4396
      %v4766 = vunpack.c.l.b16 %v4397
      %v4767 = vunpack.c.h.b16 %v4397
      %v4768 = vunpack.c.l.b16 %v4398
      %v4769 = vunpack.c.h.b16 %v4398
      %v4770 = vunpack.c.l.b16 %v4399
      %v4771 = vunpack.c.h.b16 %v4399
      %v4772 = vunpack.c.l.b16 %v4400
      %v4773 = vunpack.c.h.b16 %v4400
      %v4774 = vunpack.c.l.b16 %v4401
      %v4775 = vunpack.c.h.b16 %v4401
      %v4776 = vunpack.c.l.b16 %v4402
      %v4777 = vunpack.c.h.b16 %v4402
      %v4778 = vunpack.c.l.b16 %v4403
      %v4779 = vunpack.c.h.b16 %v4403
      %v4780 = vunpack.c.l.b16 %v4404
      %v4781 = vunpack.c.h.b16 %v4404
      %v4782 = vunpack.c.l.b16 %v4405
      %v4783 = vunpack.c.h.b16 %v4405
      %v4784 = vunpack.c.l.b16 %v4406
      %v4785 = vunpack.c.h.b16 %v4406
      %v4786 = vunpack.c.l.b16 %v4407
      %v4787 = vunpack.c.h.b16 %v4407
      %v4788 = vunpack.c.l.b16 %v4408
      %v4789 = vunpack.c.h.b16 %v4408
      %v4790 = vunpack.c.l.b16 %v4409
      %v4791 = vunpack.c.h.b16 %v4409
      %v4792 = vunpack.c.l.b16 %v4410
      %v4793 = vunpack.c.h.b16 %v4410
      %v4794 = vunpack.c.l.b16 %v4411
      %v4795 = vunpack.c.h.b16 %v4411
      %v4796 = vunpack.c.l.b16 %v4412
      %v4797 = vunpack.c.h.b16 %v4412
      %v4798 = vpack.c.b16 %v4546, %v4542
      %v4799 = vpack.c.b16 %v4547, %v4543
      %v4800 = vpack.c.b16 %v4548, %v4544
      %v4801 = vpack.c.b16 %v4549, %v4545
      %v4802 = vpack.c.b16 %v4554, %v4550
      %v4803 = vpack.c.b16 %v4555, %v4551
      %v4804 = vpack.c.b16 %v4556, %v4552
      %v4805 = vpack.c.b16 %v4557, %v4553
      %v4806 = vpack.c.b16 %v4562, %v4558
      %v4807 = vpack.c.b16 %v4563, %v4559
      %v4808 = vpack.c.b16 %v4564, %v4560
      %v4809 = vpack.c.b16 %v4565, %v4561
      %v4810 = vpack.c.b16 %v4570, %v4566
      %v4811 = vpack.c.b16 %v4571, %v4567
      %v4812 = vpack.c.b16 %v4572, %v4568
      %v4813 = vpack.c.b16 %v4573, %v4569
      %v4814 = vpack.c.b16 %v4578, %v4574
      %v4815 = vpack.c.b16 %v4579, %v4575
      %v4816 = vpack.c.b16 %v4580, %v4576
      %v4817 = vpack.c.b16 %v4581, %v4577
      %v4818 = vpack.c.b16 %v4586, %v4582
      %v4819 = vpack.c.b16 %v4587, %v4583
      %v4820 = vpack.c.b16 %v4588, %v4584
      %v4821 = vpack.c.b16 %v4589, %v4585
      %v4822 = vpack.c.b16 %v4594, %v4590
      %v4823 = vpack.c.b16 %v4595, %v4591
      %v4824 = vpack.c.b16 %v4596, %v4592
      %v4825 = vpack.c.b16 %v4597, %v4593
      %v4826 = vpack.c.b16 %v4602, %v4598
      %v4827 = vpack.c.b16 %v4603, %v4599
      %v4828 = vpack.c.b16 %v4604, %v4600
      %v4829 = vpack.c.b16 %v4605, %v4601
      %v4830 = vpack.c.b16 %v4610, %v4606
      %v4831 = vpack.c.b16 %v4611, %v4607
      %v4832 = vpack.c.b16 %v4612, %v4608
      %v4833 = vpack.c.b16 %v4613, %v4609
      %v4834 = vpack.c.b16 %v4618, %v4614
      %v4835 = vpack.c.b16 %v4619, %v4615
      %v4836 = vpack.c.b16 %v4620, %v4616
      %v4837 = vpack.c.b16 %v4621, %v4617
      %v4838 = vpack.c.b16 %v4626, %v4622
      %v4839 = vpack.c.b16 %v4627, %v4623
      %v4840 = vpack.c.b16 %v4628, %v4624
      %v4841 = vpack.c.b16 %v4629, %v4625
      %v4842 = vpack.c.b16 %v4634, %v4630
      %v4843 = vpack.c.b16 %v4635, %v4631
      %v4844 = vpack.c.b16 %v4636, %v4632
      %v4845 = vpack.c.b16 %v4637, %v4633
      %v4846 = vpack.c.b16 %v4642, %v4638
      %v4847 = vpack.c.b16 %v4643, %v4639
      %v4848 = vpack.c.b16 %v4644, %v4640
      %v4849 = vpack.c.b16 %v4645, %v4641
      %v4850 = vpack.c.b16 %v4650, %v4646
      %v4851 = vpack.c.b16 %v4651, %v4647
      %v4852 = vpack.c.b16 %v4652, %v4648
      %v4853 = vpack.c.b16 %v4653, %v4649
      %v4854 = vpack.c.b16 %v4658, %v4654
      %v4855 = vpack.c.b16 %v4659, %v4655
      %v4856 = vpack.c.b16 %v4660, %v4656
      %v4857 = vpack.c.b16 %v4661, %v4657
      %v4858 = vpack.c.b16 %v4666, %v4662
      %v4859 = vpack.c.b16 %v4667, %v4663
      %v4860 = vpack.c.b16 %v4668, %v4664
      %v4861 = vpack.c.b16 %v4669, %v4665
      %v4862 = vpack.c.b16 %v4674, %v4670
      %v4863 = vpack.c.b16 %v4675, %v4671
      %v4864 = vpack.c.b16 %v4676, %v4672
      %v4865 = vpack.c.b16 %v4677, %v4673
      %v4866 = vpack.c.b16 %v4682, %v4678
      %v4867 = vpack.c.b16 %v4683, %v4679
      %v4868 = vpack.c.b16 %v4684, %v4680
      %v4869 = vpack.c.b16 %v4685, %v4681
      %v4870 = vpack.c.b16 %v4690, %v4686
      %v4871 = vpack.c.b16 %v4691, %v4687
      %v4872 = vpack.c.b16 %v4692, %v4688
      %v4873 = vpack.c.b16 %v4693, %v4689
      %v4874 = vpack.c.b16 %v4698, %v4694
      %v4875 = vpack.c.b16 %v4699, %v4695
      %v4876 = vpack.c.b16 %v4700, %v4696
      %v4877 = vpack.c.b16 %v4701, %v4697
      %v4878 = vpack.c.b16 %v4706, %v4702
      %v4879 = vpack.c.b16 %v4707, %v4703
      %v4880 = vpack.c.b16 %v4708, %v4704
      %v4881 = vpack.c.b16 %v4709, %v4705
      %v4882 = vpack.c.b16 %v4714, %v4710
      %v4883 = vpack.c.b16 %v4715, %v4711
      %v4884 = vpack.c.b16 %v4716, %v4712
      %v4885 = vpack.c.b16 %v4717, %v4713
      %v4886 = vpack.c.b16 %v4722, %v4718
      %v4887 = vpack.c.b16 %v4723, %v4719
      %v4888 = vpack.c.b16 %v4724, %v4720
      %v4889 = vpack.c.b16 %v4725, %v4721
      %v4890 = vpack.c.b16 %v4730, %v4726
      %v4891 = vpack.c.b16 %v4731, %v4727
      %v4892 = vpack.c.b16 %v4732, %v4728
      %v4893 = vpack.c.b16 %v4733, %v4729
      %v4894 = vpack.c.b16 %v4738, %v4734
      %v4895 = vpack.c.b16 %v4739, %v4735
      %v4896 = vpack.c.b16 %v4740, %v4736
      %v4897 = vpack.c.b16 %v4741, %v4737
      %v4898 = vpack.c.b16 %v4746, %v4742
      %v4899 = vpack.c.b16 %v4747, %v4743
      %v4900 = vpack.c.b16 %v4748, %v4744
      %v4901 = vpack.c.b16 %v4749, %v4745
      %v4902 = vpack.c.b16 %v4754, %v4750
      %v4903 = vpack.c.b16 %v4755, %v4751
      %v4904 = vpack.c.b16 %v4756, %v4752
      %v4905 = vpack.c.b16 %v4757, %v4753
      %v4906 = vpack.c.b16 %v4762, %v4758
      %v4907 = vpack.c.b16 %v4763, %v4759
      %v4908 = vpack.c.b16 %v4764, %v4760
      %v4909 = vpack.c.b16 %v4765, %v4761
      %v4910 = vpack.c.b16 %v4770, %v4766
      %v4911 = vpack.c.b16 %v4771, %v4767
      %v4912 = vpack.c.b16 %v4772, %v4768
      %v4913 = vpack.c.b16 %v4773, %v4769
      %v4914 = vpack.c.b16 %v4778, %v4774
      %v4915 = vpack.c.b16 %v4779, %v4775
      %v4916 = vpack.c.b16 %v4780, %v4776
      %v4917 = vpack.c.b16 %v4781, %v4777
      %v4918 = vpack.c.b16 %v4786, %v4782
      %v4919 = vpack.c.b16 %v4787, %v4783
      %v4920 = vpack.c.b16 %v4788, %v4784
      %v4921 = vpack.c.b16 %v4789, %v4785
      %v4922 = vpack.c.b16 %v4794, %v4790
      %v4923 = vpack.c.b16 %v4795, %v4791
      %v4924 = vpack.c.b16 %v4796, %v4792
      %v4925 = vpack.c.b16 %v4797, %v4793
      %v5055 = vlaneseq
      %v5056 = vshrl.u32 %v5055, 7
      %v5057 = vsub.s32 0, %v5056
      %v5058 = vrot.slane %v4413, %v5057
      %v5059 = vlaneseq
      %v5060 = vshrl.u32 %v5059, 7
      %v5061 = vsub.s32 1, %v5060
      %v5062 = vrot.slane %v4413, %v5061
      %v5063 = vlaneseq
      %v5064 = vshrl.u32 %v5063, 7
      %v5065 = vsub.s32 2, %v5064
      %v5066 = vrot.slane %v4413, %v5065
      %v5067 = vlaneseq
      %v5068 = vshrl.u32 %v5067, 7
      %v5069 = vsub.s32 3, %v5068
      %v5070 = vrot.slane %v4413, %v5069
      %5075 = vmatprep.subr.bf16.mxu0 %v4827
      %5076 = vmatpush1.bf16.msra.mxu0 %v4826
      %5077 = vmatprep.subr.bf16.mxu0 %v4823
      %5078 = vmatpush1.bf16.msra.mxu0 %v4822
      %5079 = vmatprep.subr.bf16.mxu0 %v4819
      %5080 = vmatpush1.bf16.msra.mxu0 %v4818
      %5081 = vmatprep.subr.bf16.mxu0 %v4815
      %5082 = vmatpush1.bf16.msra.mxu0 %v4814
      %5083 = vmatprep.subr.bf16.mxu0 %v4811
      %5084 = vmatpush1.bf16.msra.mxu0 %v4810
      %5085 = vmatprep.subr.bf16.mxu0 %v4807
      %5086 = vmatpush1.bf16.msra.mxu0 %v4806
      %5087 = vmatprep.subr.bf16.mxu0 %v4803
      %5088 = vmatpush1.bf16.msra.mxu0 %v4802
      %5089 = vmatprep.subr.bf16.mxu0 %v4799
      %5090 = vmatpush1.bf16.msra.mxu0 %v4798
      %5091 = vmatprep.subr.bf16.mxu0 %v4859
      %5092 = vmatpush2.bf16.msra.mxu0 %v4858
      %5093 = vmatprep.subr.bf16.mxu0 %v4855
      %5094 = vmatpush2.bf16.msra.mxu0 %v4854
      %5095 = vmatprep.subr.bf16.mxu0 %v4851
      %5096 = vmatpush2.bf16.msra.mxu0 %v4850
      %5097 = vmatprep.subr.bf16.mxu0 %v4847
      %5098 = vmatpush2.bf16.msra.mxu0 %v4846
      %5099 = vmatprep.subr.bf16.mxu0 %v4843
      %5100 = vmatpush2.bf16.msra.mxu0 %v4842
      %5101 = vmatprep.subr.bf16.mxu0 %v4839
      %5102 = vmatpush2.bf16.msra.mxu0 %v4838
      %5103 = vmatprep.subr.bf16.mxu0 %v4835
      %5104 = vmatpush2.bf16.msra.mxu0 %v4834
      %5105 = vmatprep.subr.bf16.mxu0 %v4831
      %5106 = vmatpush2.bf16.msra.mxu0 %v4830
      %5107 = vmatprep.mubr.bf16.mxu0 %v4282
      %5108 = vmatmul.mubr.bf16.gmra.mxu0 %v4281
      %v5109 = vpop.f32.mrf.mxu0
      %v5110 = vadd.f32 %v5058, %v5109
      %v5111 = vpop.f32.mrf.mxu0
      %v5112 = vadd.f32 %v5062, %v5111
      %v5113 = vpop.f32.mrf.mxu0
      %v5114 = vpop.f32.mrf.mxu0
      %5115 = vdwg.mxu0
      %5116 = vmatprep.subr.bf16.mxu0 %v4891
      %5117 = vmatpush1.bf16.msra.mxu0 %v4890
      %5118 = vmatprep.subr.bf16.mxu0 %v4887
      %5119 = vmatpush1.bf16.msra.mxu0 %v4886
      %5120 = vmatprep.subr.bf16.mxu0 %v4883
      %5121 = vmatpush1.bf16.msra.mxu0 %v4882
      %5122 = vmatprep.subr.bf16.mxu0 %v4879
      %5123 = vmatpush1.bf16.msra.mxu0 %v4878
      %5124 = vmatprep.subr.bf16.mxu0 %v4875
      %5125 = vmatpush1.bf16.msra.mxu0 %v4874
      %5126 = vmatprep.subr.bf16.mxu0 %v4871
      %5127 = vmatpush1.bf16.msra.mxu0 %v4870
      %5128 = vmatprep.subr.bf16.mxu0 %v4867
      %5129 = vmatpush1.bf16.msra.mxu0 %v4866
      %5130 = vmatprep.subr.bf16.mxu0 %v4863
      %5131 = vmatpush1.bf16.msra.mxu0 %v4862
      %5132 = vmatprep.subr.bf16.mxu0 %v4923
      %5133 = vmatpush2.bf16.msra.mxu0 %v4922
      %5134 = vmatprep.subr.bf16.mxu0 %v4919
      %5135 = vmatpush2.bf16.msra.mxu0 %v4918
      %5136 = vmatprep.subr.bf16.mxu0 %v4915
      %5137 = vmatpush2.bf16.msra.mxu0 %v4914
      %5138 = vmatprep.subr.bf16.mxu0 %v4911
      %5139 = vmatpush2.bf16.msra.mxu0 %v4910
      %5140 = vmatprep.subr.bf16.mxu0 %v4907
      %5141 = vmatpush2.bf16.msra.mxu0 %v4906
      %5142 = vmatprep.subr.bf16.mxu0 %v4903
      %5143 = vmatpush2.bf16.msra.mxu0 %v4902
      %5144 = vmatprep.subr.bf16.mxu0 %v4899
      %5145 = vmatpush2.bf16.msra.mxu0 %v4898
      %5146 = vmatprep.subr.bf16.mxu0 %v4895
      %5147 = vmatpush2.bf16.msra.mxu0 %v4894
      %5148 = vmatprep.mubr.bf16.mxu0 %v4284
      %5149 = vmatmul.mubr.bf16.gmra.mxu0 %v4283
      %v5150 = vpop.f32.mrf.mxu0
      %v5151 = vadd.f32 %v5110, %v5150
      %v5152 = vpop.f32.mrf.mxu0
      %v5153 = vadd.f32 %v5112, %v5152
      %v5154 = vpop.f32.mrf.mxu0
      %v5155 = vpop.f32.mrf.mxu0
      %5156 = vdwg.mxu0
      %5157 = vmatprep.subr.bf16.mxu0 %v4829
      %5158 = vmatpush1.bf16.msra.mxu0 %v4828
      %5159 = vmatprep.subr.bf16.mxu0 %v4825
      %5160 = vmatpush1.bf16.msra.mxu0 %v4824
      %5161 = vmatprep.subr.bf16.mxu0 %v4821
      %5162 = vmatpush1.bf16.msra.mxu0 %v4820
      %5163 = vmatprep.subr.bf16.mxu0 %v4817
      %5164 = vmatpush1.bf16.msra.mxu0 %v4816
      %5165 = vmatprep.subr.bf16.mxu0 %v4813
      %5166 = vmatpush1.bf16.msra.mxu0 %v4812
      %5167 = vmatprep.subr.bf16.mxu0 %v4809
      %5168 = vmatpush1.bf16.msra.mxu0 %v4808
      %5169 = vmatprep.subr.bf16.mxu0 %v4805
      %5170 = vmatpush1.bf16.msra.mxu0 %v4804
      %5171 = vmatprep.subr.bf16.mxu0 %v4801
      %5172 = vmatpush1.bf16.msra.mxu0 %v4800
      %5173 = vmatprep.subr.bf16.mxu0 %v4861
      %5174 = vmatpush2.bf16.msra.mxu0 %v4860
      %5175 = vmatprep.subr.bf16.mxu0 %v4857
      %5176 = vmatpush2.bf16.msra.mxu0 %v4856
      %5177 = vmatprep.subr.bf16.mxu0 %v4853
      %5178 = vmatpush2.bf16.msra.mxu0 %v4852
      %5179 = vmatprep.subr.bf16.mxu0 %v4849
      %5180 = vmatpush2.bf16.msra.mxu0 %v4848
      %5181 = vmatprep.subr.bf16.mxu0 %v4845
      %5182 = vmatpush2.bf16.msra.mxu0 %v4844
      %5183 = vmatprep.subr.bf16.mxu0 %v4841
      %5184 = vmatpush2.bf16.msra.mxu0 %v4840
      %5185 = vmatprep.subr.bf16.mxu0 %v4837
      %5186 = vmatpush2.bf16.msra.mxu0 %v4836
      %5187 = vmatprep.subr.bf16.mxu0 %v4833
      %5188 = vmatpush2.bf16.msra.mxu0 %v4832
      %5189 = vmatprep.mubr.bf16.mxu0 %v4282
      %5190 = vmatmul.mubr.bf16.gmra.mxu0 %v4281
      %v5191 = vpop.f32.mrf.mxu0
      %v5192 = vadd.f32 %v5066, %v5191
      %v5193 = vpop.f32.mrf.mxu0
      %v5194 = vadd.f32 %v5070, %v5193
      %v5195 = vpop.f32.mrf.mxu0
      %v5196 = vpop.f32.mrf.mxu0
      %5197 = vdwg.mxu0
      %5198 = vmatprep.subr.bf16.mxu0 %v4893
      %5199 = vmatpush1.bf16.msra.mxu0 %v4892
      %5200 = vmatprep.subr.bf16.mxu0 %v4889
      %5201 = vmatpush1.bf16.msra.mxu0 %v4888
      %5202 = vmatprep.subr.bf16.mxu0 %v4885
      %5203 = vmatpush1.bf16.msra.mxu0 %v4884
      %5204 = vmatprep.subr.bf16.mxu0 %v4881
      %5205 = vmatpush1.bf16.msra.mxu0 %v4880
      %5206 = vmatprep.subr.bf16.mxu0 %v4877
      %5207 = vmatpush1.bf16.msra.mxu0 %v4876
      %5208 = vmatprep.subr.bf16.mxu0 %v4873
      %5209 = vmatpush1.bf16.msra.mxu0 %v4872
      %5210 = vmatprep.subr.bf16.mxu0 %v4869
      %5211 = vmatpush1.bf16.msra.mxu0 %v4868
      %5212 = vmatprep.subr.bf16.mxu0 %v4865
      %5213 = vmatpush1.bf16.msra.mxu0 %v4864
      %5214 = vmatprep.subr.bf16.mxu0 %v4925
      %5215 = vmatpush2.bf16.msra.mxu0 %v4924
      %5216 = vmatprep.subr.bf16.mxu0 %v4921
      %5217 = vmatpush2.bf16.msra.mxu0 %v4920
      %5218 = vmatprep.subr.bf16.mxu0 %v4917
      %5219 = vmatpush2.bf16.msra.mxu0 %v4916
      %5220 = vmatprep.subr.bf16.mxu0 %v4913
      %5221 = vmatpush2.bf16.msra.mxu0 %v4912
      %5222 = vmatprep.subr.bf16.mxu0 %v4909
      %5223 = vmatpush2.bf16.msra.mxu0 %v4908
      %5224 = vmatprep.subr.bf16.mxu0 %v4905
      %5225 = vmatpush2.bf16.msra.mxu0 %v4904
      %5226 = vmatprep.subr.bf16.mxu0 %v4901
      %5227 = vmatpush2.bf16.msra.mxu0 %v4900
      %5228 = vmatprep.subr.bf16.mxu0 %v4897
      %5229 = vmatpush2.bf16.msra.mxu0 %v4896
      %5230 = vmatprep.mubr.bf16.mxu0 %v4284
      %5231 = vmatmul.mubr.bf16.gmra.mxu0 %v4283
      %v5232 = vpop.f32.mrf.mxu0
      %v5233 = vadd.f32 %v5192, %v5232
      %v5234 = vpop.f32.mrf.mxu0
      %v5235 = vadd.f32 %v5194, %v5234
      %v5236 = vpop.f32.mrf.mxu0
      %v5237 = vpop.f32.mrf.mxu0
      %5238 = vdwg.mxu0
      %v5243 = vcombine.low %v5151, %v5153
      %v5244 = vcombine.low %v5233, %v5235
      %v5246 = vunpack.c.l.s4 1966171168
      %v5247 = vunpack.c.0.s8 %v5246
      %v5248 = vlaneseq
      %v5249 = vshrl.u32 %v5248, 7
      %v5250 = vsub.s32 %v5247, %v5249
      %v5251 = vrot.slane %v5243, %v5250
      %v5253 = vunpack.c.l.s4 1966171168
      %v5254 = vunpack.c.0.s8 %v5253
      %v5255 = vlaneseq
      %v5256 = vshrl.u32 %v5255, 7
      %v5257 = vsub.s32 %v5254, %v5256
      %v5258 = vrot.slane %v5244, %v5257
      %v5259 = vcombine.low %v5251, %v5258
      %v5261 = vunpack.c.l.s4 1966171168
      %v5262 = vunpack.c.0.s8 %v5261
      %v5263 = vlaneseq
      %v5264 = vshrl.u32 %v5263, 7
      %v5265 = vsub.s32 %v5262, %v5264
      %v5266 = vrot.slane %v5259, %v5265
      %vm5268 = vcmp.lt.s32.totalorder %v1543, 512
      %vm5269 = vmand %vm1544, %vm5268
      %5270 = vst.msk [vmem:[%s343] sm:$0xf] %vm5269, %v5266
      %p5271 = scmp.lt.s32.totalorder %s21, 1
      %s5272 = scalar_select %p5271, %s21, 1
      %s5273 = smul.addr %s5272, 200
      %s5274 = smul.addr %s5273, 8
      %s5275 = scalar_lea.vmem %s8, %s5274
      %p5276 = scmp.lt.s32.totalorder %s21, 1
      %s5277 = scalar_select %p5276, %s21, 1
      %s5278 = smul.addr %s5277, 4
      %s5279 = scalar_lea.vmem %s9, %s5278
      // Predicated region
      $region53: #{ass_jrg_forward.1} parent=51 // pred_check
        %p5280 = pneg %p212
      $region54: #{ass_jrg_forward.1} parent=51 // pred_check_branch
        %5282 = sbr.rel (%p5280) target = $region56
      $region55: #{ass_jrg_forward.1} parent=51 // pred_region
        _
      $region56: #{ass_jrg_forward.1} parent=51 // pred_fallthru
        _
      // Predicated region
      $region57: #{ass_jrg_forward.1} parent=51 // pred_check
        %p5283 = pneg %p238
      $region58: #{ass_jrg_forward.1} parent=51 // pred_check_branch
        %5285 = sbr.rel (%p5283) target = $region60
      $region59: #{ass_jrg_forward.1} parent=51 // pred_region
        _
      $region60: #{ass_jrg_forward.1} parent=51 // pred_fallthru
        _
    $region52: #{ass_jrg_forward.1} parent=5 // pred_fallthru
      _
    %p5286 = scmp.le.s32.totalorder 2, %s16
    // Predicated region
    $region61: #{ass_jrg_forward.1} parent=5 // pred_check
      %p5287 = pneg %p5286
    $region62: #{ass_jrg_forward.1} parent=5 // pred_check_branch
      %5289 = sbr.rel (%p5287) target = $region64
    $region63: #{ass_jrg_forward.1} parent=5 // pred_region
      %s5290 = ssub.s32 %s16, 2
      // Predicated region
      $region65: #{ass_jrg_forward.1} parent=63 // pred_check
        %p5291 = pneg %p218
      $region66: #{ass_jrg_forward.1} parent=63 // pred_check_branch
        %5293 = sbr.rel (%p5291) target = $region68
      $region67: #{ass_jrg_forward.1} parent=63 // pred_region
        %p5294 = scmp.lt.s32.totalorder %s22, 1
        %s5295 = scalar_select %p5294, %s22, 1
        %s5296 = smul.addr %s5295, 200
        %s5297 = smul.addr %s5296, 8
        %s5298 = scalar_lea.vmem %s8, %s5297
      $region68: #{ass_jrg_forward.1} parent=63 // pred_fallthru
        _
      // Predicated region
      $region69: #{ass_jrg_forward.1} parent=63 // pred_check
        %p5299 = pneg %p244
      $region70: #{ass_jrg_forward.1} parent=63 // pred_check_branch
        %5301 = sbr.rel (%p5299) target = $region72
      $region71: #{ass_jrg_forward.1} parent=63 // pred_region
        %p5302 = scmp.lt.s32.totalorder %s22, 1
        %s5303 = scalar_select %p5302, %s22, 1
        %s5304 = smul.addr %s5303, 4
        %s5305 = scalar_lea.vmem %s9, %s5304
      $region72: #{ass_jrg_forward.1} parent=63 // pred_fallthru
        _
    $region64: #{ass_jrg_forward.1} parent=5 // pred_fallthru
      _
  $region6: #{ass_jrg_forward.1} parent=0 // loop_footer
    %s20 = sadd.s32 1, %s16
  $region7: #{ass_jrg_forward.1} parent=0 // loop_footer_branch
    %15 = sbr.rel target = $region3
  $region8: #{ass_jrg_forward.1} parent=0 // loop_exit
    _

</llo_original>
